<compile_context>
chip_gen: v6e
topology: v6e:2x2x1
jax: 0.10.0
libtpu: 0.0.40
codegen_flags: <defaults>
</compile_context>

<pallas_src>
import math

import jax
import jax.numpy as jnp
from jax import lax
from jax.experimental import pallas as pl
from jax.experimental.pallas import tpu as pltpu

INV_E = 1.0 / math.e


# --------------------------------------------------------------------------
# Kernel 1: fused per-frame MLP chain (conv1d1 -> conv1d2 -> approximator)
# --------------------------------------------------------------------------
def _frame_mlp_kernel(x_ref, w1_ref, b1_ref, w2_ref, b2_ref,
                      wa1_ref, ba1_ref, wa2_ref, ba2_ref,
                      feat_ref, approx_ref):
    x0 = x_ref[0]                                                     # (T, F)
    h = jnp.dot(x0, w1_ref[...], preferred_element_type=jnp.float32) + b1_ref[...]
    h = jnp.maximum(h, 0.0)                                           # (T, 512)
    feat = jnp.dot(h, w2_ref[...], preferred_element_type=jnp.float32) + b2_ref[...]
    feat = jnp.maximum(feat, 0.0)                                     # (T, 128)
    feat_ref[0] = feat

    a = jnp.dot(feat, wa1_ref[...], preferred_element_type=jnp.float32) + ba1_ref[...]
    a = jnp.maximum(a, 0.0)                                           # (T, 64)
    a = jnp.dot(a, wa2_ref[...], preferred_element_type=jnp.float32) + ba2_ref[...]
    a = jnp.maximum(a, 0.0)                                           # (T, 32)
    approx_ref[0] = a


# --------------------------------------------------------------------------
# Kernel 2: causal Conv1d(32, 1, 5) over the left-padded approximator output
#           computed on the VPU (elementwise taps + one lane reduction)
# --------------------------------------------------------------------------
def _causal_conv5_kernel(a_ref, w5_ref, b5_ref, o_ref):
    T = o_ref.shape[1]
    ap = a_ref[0]                                                     # (T+4, 32)
    w5 = w5_ref[...]                                                  # (5, 32)
    acc = jnp.zeros((T, ap.shape[1]), jnp.float32)
    for k in range(5):                                                # static taps
        acc = acc + ap[k:k + T, :] * w5[k:k + 1, :]
    o_ref[0] = jnp.sum(acc, axis=-1, keepdims=True) + b5_ref[...]     # (T, 1)


# --------------------------------------------------------------------------
# Kernel 3: adjacency construction + 2-layer GCN (x3 branches) + classifier
# --------------------------------------------------------------------------
def _softmax_rows(z):
    m = jnp.max(z, axis=-1, keepdims=True)
    e = jnp.exp(z - m)
    return e * pl.reciprocal(jnp.sum(e, axis=-1, keepdims=True), approx=True)


def _adj_gcn_cls_kernel(x_ref, feat_ref, lg_ref, lgt_ref,
                        wcat1_ref, wblk2_ref, wc_ref, bc_ref, o_ref):
    x0 = x_ref[0]                                                     # (T, F)
    f0 = feat_ref[0]                                                  # (T, 128)
    lg = lg_ref[0]                                                    # (T, 1)
    lgt = lgt_ref[0]                                                  # (1, T)
    T = x0.shape[0]

    # --- cosine-similarity adjacency: threshold(0.7) + row softmax ---
    inv_norm = lax.rsqrt(jnp.sum(x0 * x0, axis=-1, keepdims=True) + 1e-20)
    xn = x0 * inv_norm
    sim = lax.dot_general(xn, xn, (((1,), (1,)), ((), ())),
                          preferred_element_type=jnp.float32)         # (T, T)
    sim = jnp.where(sim > 0.7, sim, 0.0)
    a1 = _softmax_rows(sim)

    # --- distance adjacency: exp(-|i-j| / e), generated in-kernel ---
    ti = lax.broadcasted_iota(jnp.int32, (T, T), 0)
    tj = lax.broadcasted_iota(jnp.int32, (T, T), 1)
    a2 = jnp.exp(-jnp.abs(ti - tj).astype(jnp.float32) * INV_E)

    # --- score adjacency from frame logits ---
    si = 1.0 / (1.0 + jnp.exp(-lg))                                   # (T, 1)
    sj = 1.0 / (1.0 + jnp.exp(-lgt))                                  # (1, T)
    g = 1.0 - jnp.abs(si - sj)                                        # (T, T)
    g = 1.0 / (1.0 + jnp.exp(-(g - 0.5) * 10.0))
    a3 = _softmax_rows(g)

    # --- GCN layer 1: packed [gw1|gw3|gw5|gr1|gr3|gr5] -> single 128x192 matmul ---
    sr = jnp.dot(f0, wcat1_ref[...], preferred_element_type=jnp.float32)   # (T, 192)
    h1 = jnp.maximum(jnp.dot(a1, sr[:, 0:32], preferred_element_type=jnp.float32)
                     + sr[:, 96:128], 0.0)
    h2 = jnp.maximum(jnp.dot(a2, sr[:, 32:64], preferred_element_type=jnp.float32)
                     + sr[:, 128:160], 0.0)
    h3 = jnp.maximum(jnp.dot(a3, sr[:, 64:96], preferred_element_type=jnp.float32)
                     + sr[:, 160:192], 0.0)

    # --- GCN layer 2: block-diag(gw2,gw4,gw6) packed matmul, identity residual ---
    hcat = jnp.concatenate([h1, h2, h3], axis=1)                      # (T, 96)
    sc = jnp.dot(hcat, wblk2_ref[...], preferred_element_type=jnp.float32)
    o1 = jnp.maximum(jnp.dot(a1, sc[:, 0:32], preferred_element_type=jnp.float32) + h1, 0.0)
    o2 = jnp.maximum(jnp.dot(a2, sc[:, 32:64], preferred_element_type=jnp.float32) + h2, 0.0)
    o3 = jnp.maximum(jnp.dot(a3, sc[:, 64:96], preferred_element_type=jnp.float32) + h3, 0.0)

    # --- classifier ---
    ocat = jnp.concatenate([o1, o2, o3], axis=1)                      # (T, 96)
    o_ref[0] = jnp.dot(ocat, wc_ref[...], preferred_element_type=jnp.float32) + bc_ref[...]


# ------------------------------ parameters ---------------------------------
def _xavier(key, fan_in, fan_out, shape):
    bound = math.sqrt(6.0 / (fan_in + fan_out))
    return jax.random.uniform(key, shape, jnp.float32, -bound, bound)


def init_params(key, n_features, n_class):
    ks = jax.random.split(key, 24)
    p = {}
    # conv1d1 (k=1): n_features -> 512 ; conv1d2 (k=1): 512 -> 128
    p['w1'] = _xavier(ks[0], n_features, 512, (n_features, 512))
    p['b1'] = jax.random.uniform(ks[1], (1, 512), jnp.float32, -0.01, 0.01)
    p['w2'] = _xavier(ks[2], 512, 128, (512, 128))
    p['b2'] = jax.random.uniform(ks[3], (1, 128), jnp.float32, -0.01, 0.01)
    # approximator: 128 -> 64 -> 32 (k=1)
    p['wa1'] = _xavier(ks[4], 128, 64, (128, 64))
    p['ba1'] = jax.random.uniform(ks[5], (1, 64), jnp.float32, -0.01, 0.01)
    p['wa2'] = _xavier(ks[6], 64, 32, (64, 32))
    p['ba2'] = jax.random.uniform(ks[7], (1, 32), jnp.float32, -0.01, 0.01)
    # conv1d_approximator: Conv1d(32, 1, 5) stored as (tap, c_in)
    p['w5'] = _xavier(ks[8], 32 * 5, 5, (5, 32))
    p['b5'] = jax.random.uniform(ks[9], (1, 1), jnp.float32, -0.01, 0.01)

    # GCN weights (no bias). Layer-1 residual is a 128->32 projection; layer-2
    # residual is identity (in==out) and is added directly in the kernel.
    gw1 = _xavier(ks[10], 128, 32, (128, 32)); gr1 = _xavier(ks[11], 128, 32, (128, 32))
    gw3 = _xavier(ks[12], 128, 32, (128, 32)); gr3 = _xavier(ks[13], 128, 32, (128, 32))
    gw5 = _xavier(ks[14], 128, 32, (128, 32)); gr5 = _xavier(ks[15], 128, 32, (128, 32))
    gw2 = _xavier(ks[16], 32, 32, (32, 32))
    gw4 = _xavier(ks[17], 32, 32, (32, 32))
    gw6 = _xavier(ks[18], 32, 32, (32, 32))
    # packed layer-1 weight: [gw1 | gw3 | gw5 | gr1 | gr3 | gr5] -> (128, 192)
    p['wcat1'] = jnp.concatenate([gw1, gw3, gw5, gr1, gr3, gr5], axis=1)
    # packed layer-2 weight: block-diag(gw2, gw4, gw6) -> (96, 96)
    wblk2 = jnp.zeros((96, 96), jnp.float32)
    wblk2 = wblk2.at[0:32, 0:32].set(gw2)
    wblk2 = wblk2.at[32:64, 32:64].set(gw4)
    wblk2 = wblk2.at[64:96, 64:96].set(gw6)
    p['wblk2'] = wblk2
    # classifier: Linear(96, n_class)
    p['wc'] = _xavier(ks[19], 96, n_class, (96, n_class))
    p['bc'] = jax.random.uniform(ks[20], (1, n_class), jnp.float32, -0.01, 0.01)
    return p


# ------------------------------- forward -----------------------------------
def model_forward(params, inputs):
    B, T, F = inputs.shape
    n_class = params['wc'].shape[1]

    # --- fused per-frame MLP (conv1d1 + conv1d2 + approximator) ---
    feat, approx = pl.pallas_call(
        _frame_mlp_kernel,
        out_shape=(jax.ShapeDtypeStruct((B, T, 128), jnp.float32),
                   jax.ShapeDtypeStruct((B, T, 32), jnp.float32)),
        grid=(B,),
        in_specs=[
            pl.BlockSpec((1, T, F), lambda b: (b, 0, 0)),
            pl.BlockSpec((F, 512), lambda b: (0, 0)),
            pl.BlockSpec((1, 512), lambda b: (0, 0)),
            pl.BlockSpec((512, 128), lambda b: (0, 0)),
            pl.BlockSpec((1, 128), lambda b: (0, 0)),
            pl.BlockSpec((128, 64), lambda b: (0, 0)),
            pl.BlockSpec((1, 64), lambda b: (0, 0)),
            pl.BlockSpec((64, 32), lambda b: (0, 0)),
            pl.BlockSpec((1, 32), lambda b: (0, 0)),
        ],
        out_specs=(pl.BlockSpec((1, T, 128), lambda b: (b, 0, 0)),
                   pl.BlockSpec((1, T, 32), lambda b: (b, 0, 0))),
        compiler_params=pltpu.CompilerParams(
            dimension_semantics=("parallel",),
            vmem_limit_bytes=32 * 1024 * 1024),
    )(inputs, params['w1'], params['b1'], params['w2'], params['b2'],
      params['wa1'], params['ba1'], params['wa2'], params['ba2'])

    # F.pad(logits, (4, 0)) on the time axis (tiny XLA glue)
    a_pad = jnp.pad(approx, ((0, 0), (4, 0), (0, 0)))

    # --- causal Conv1d(32, 1, 5) ---
    logits = pl.pallas_call(
        _causal_conv5_kernel,
        out_shape=jax.ShapeDtypeStruct((B, T, 1), jnp.float32),
        grid=(B,),
        in_specs=[
            pl.BlockSpec((1, T + 4, 32), lambda b: (b, 0, 0)),
            pl.BlockSpec((5, 32), lambda b: (0, 0)),
            pl.BlockSpec((1, 1), lambda b: (0, 0)),
        ],
        out_specs=pl.BlockSpec((1, T, 1), lambda b: (b, 0, 0)),
        compiler_params=pltpu.CompilerParams(
            dimension_semantics=("parallel",)),
    )(a_pad, params['w5'], params['b5'])

    # tiny XLA glue: lane-major copy of the logits for the score adjacency
    logits_t = jnp.transpose(logits, (0, 2, 1))                       # (B, 1, T)

    # --- fused adjacencies + 2-layer GCN + classifier ---
    out = pl.pallas_call(
        _adj_gcn_cls_kernel,
        out_shape=jax.ShapeDtypeStruct((B, T, n_class), jnp.float32),
        grid=(B,),
        in_specs=[
            pl.BlockSpec((1, T, F), lambda b: (b, 0, 0)),
            pl.BlockSpec((1, T, 128), lambda b: (b, 0, 0)),
            pl.BlockSpec((1, T, 1), lambda b: (b, 0, 0)),
            pl.BlockSpec((1, 1, T), lambda b: (b, 0, 0)),
            pl.BlockSpec((128, 192), lambda b: (0, 0)),
            pl.BlockSpec((96, 96), lambda b: (0, 0)),
            pl.BlockSpec((96, n_class), lambda b: (0, 0)),
            pl.BlockSpec((1, n_class), lambda b: (0, 0)),
        ],
        out_specs=pl.BlockSpec((1, T, n_class), lambda b: (b, 0, 0)),
        compiler_params=pltpu.CompilerParams(
            dimension_semantics=("parallel",),
            vmem_limit_bytes=32 * 1024 * 1024),
    )(inputs, feat, logits, logits_t,
      params['wcat1'], params['wblk2'], params['wc'], params['bc'])

    return out, logits


if __name__ == "__main__":
    B, T = 2, 16
    n_features, n_class = 64, 1

    key = jax.random.PRNGKey(0)
    pkey, xkey = jax.random.split(key)
    params = init_params(pkey, n_features, n_class)
    inputs = jax.random.normal(xkey, (B, T, n_features), dtype=jnp.float32)

    fwd = jax.jit(model_forward)
    out, logits = fwd(params, inputs)
    jax.block_until_ready(out)
    jax.block_until_ready(logits)

    assert out.shape == (B, T, n_class)
    assert logits.shape == (B, T, 1)
    print("KERNEL_OK")
</pallas_src>

<mosaic_0001>
module attributes {stable_mosaic.version = 11 : i64} {
  func.func @_frame_mlp_kernel(%arg0: i32, %arg1: memref<1x16x64xf32, #tpu.memory_space<vmem>>, %arg2: memref<64x512xf32, #tpu.memory_space<vmem>>, %arg3: memref<1x512xf32, #tpu.memory_space<vmem>>, %arg4: memref<512x128xf32, #tpu.memory_space<vmem>>, %arg5: memref<1x128xf32, #tpu.memory_space<vmem>>, %arg6: memref<128x64xf32, #tpu.memory_space<vmem>>, %arg7: memref<1x64xf32, #tpu.memory_space<vmem>>, %arg8: memref<64x32xf32, #tpu.memory_space<vmem>>, %arg9: memref<1x32xf32, #tpu.memory_space<vmem>>, %arg10: memref<1x16x128xf32, #tpu.memory_space<vmem>>, %arg11: memref<1x16x32xf32, #tpu.memory_space<vmem>>) attributes {dimension_semantics = [#tpu.dimension_semantics<parallel>], iteration_bounds = array<i64: 2>, scalar_prefetch = 0 : i64, scratch_operands = 0 : i64, tpu.core_type = #tpu.core_type<tc>, window_params = [{transform_indices = @transform_0, window_bounds = array<i64: 1, 16, 64>}, {pipeline_mode = #tpu.pipeline_mode<synchronous>, transform_indices = @transform_1, window_bounds = array<i64: 64, 512>}, {pipeline_mode = #tpu.pipeline_mode<synchronous>, transform_indices = @transform_2, window_bounds = array<i64: 1, 512>}, {pipeline_mode = #tpu.pipeline_mode<synchronous>, transform_indices = @transform_3, window_bounds = array<i64: 512, 128>}, {pipeline_mode = #tpu.pipeline_mode<synchronous>, transform_indices = @transform_4, window_bounds = array<i64: 1, 128>}, {pipeline_mode = #tpu.pipeline_mode<synchronous>, transform_indices = @transform_5, window_bounds = array<i64: 128, 64>}, {pipeline_mode = #tpu.pipeline_mode<synchronous>, transform_indices = @transform_6, window_bounds = array<i64: 1, 64>}, {pipeline_mode = #tpu.pipeline_mode<synchronous>, transform_indices = @transform_7, window_bounds = array<i64: 64, 32>}, {pipeline_mode = #tpu.pipeline_mode<synchronous>, transform_indices = @transform_8, window_bounds = array<i64: 1, 32>}, {transform_indices = @transform_9, window_bounds = array<i64: 1, 16, 128>}, {transform_indices = @transform_10, window_bounds = array<i64: 1, 16, 32>}]} {
    %c0 = arith.constant 0 : index
    %c0_0 = arith.constant 0 : index
    %c0_1 = arith.constant 0 : index
    %0 = vector.load %arg1[%c0, %c0_0, %c0_1] : memref<1x16x64xf32, #tpu.memory_space<vmem>>, vector<1x16x64xf32>
    %1 = vector.shape_cast %0 : vector<1x16x64xf32> to vector<16x64xf32>
    %c0_2 = arith.constant 0 : index
    %c0_3 = arith.constant 0 : index
    %2 = vector.load %arg2[%c0_2, %c0_3] : memref<64x512xf32, #tpu.memory_space<vmem>>, vector<64x512xf32>
    %cst = arith.constant dense<0.000000e+00> : vector<16x512xf32>
    %3 = tpu.matmul %1, %2, %cst {dimension_numbers = #tpu.dot_dimension_numbers<[1], [0], [0], [1], [0, 0, 1, 1], [], []>} : vector<16x64xf32>, vector<64x512xf32>, vector<16x512xf32> -> vector<16x512xf32>
    %c0_4 = arith.constant 0 : index
    %c0_5 = arith.constant 0 : index
    %4 = vector.load %arg3[%c0_4, %c0_5] : memref<1x512xf32, #tpu.memory_space<vmem>>, vector<1x512xf32>
    %5 = vector.broadcast %4 : vector<1x512xf32> to vector<16x512xf32>
    %6 = arith.addf %3, %5 : vector<16x512xf32>
    %cst_6 = arith.constant 0.000000e+00 : f32
    %7 = vector.broadcast %cst_6 : f32 to vector<16x512xf32>
    %8 = arith.maximumf %6, %7 : vector<16x512xf32>
    %c0_7 = arith.constant 0 : index
    %c0_8 = arith.constant 0 : index
    %9 = vector.load %arg4[%c0_7, %c0_8] : memref<512x128xf32, #tpu.memory_space<vmem>>, vector<512x128xf32>
    %cst_9 = arith.constant dense<0.000000e+00> : vector<16x128xf32>
    %10 = tpu.matmul %8, %9, %cst_9 {dimension_numbers = #tpu.dot_dimension_numbers<[1], [0], [0], [1], [0, 0, 1, 1], [], []>} : vector<16x512xf32>, vector<512x128xf32>, vector<16x128xf32> -> vector<16x128xf32>
    %c0_10 = arith.constant 0 : index
    %c0_11 = arith.constant 0 : index
    %11 = vector.load %arg5[%c0_10, %c0_11] : memref<1x128xf32, #tpu.memory_space<vmem>>, vector<1x128xf32>
    %12 = vector.broadcast %11 : vector<1x128xf32> to vector<16x128xf32>
    %13 = arith.addf %10, %12 : vector<16x128xf32>
    %cst_12 = arith.constant 0.000000e+00 : f32
    %14 = vector.broadcast %cst_12 : f32 to vector<16x128xf32>
    %15 = arith.maximumf %13, %14 : vector<16x128xf32>
    %c0_13 = arith.constant 0 : index
    %c0_14 = arith.constant 0 : index
    %c0_15 = arith.constant 0 : index
    %16 = vector.load %arg10[%c0_13, %c0_14, %c0_15] : memref<1x16x128xf32, #tpu.memory_space<vmem>>, vector<1x16x128xf32>
    %17 = vector.shape_cast %16 : vector<1x16x128xf32> to vector<16x128xf32>
    %18 = vector.shape_cast %15 : vector<16x128xf32> to vector<1x16x128xf32>
    tpu.vector_store %arg10[%c0_13, %c0_14, %c0_15], %18 {strides = array<i32>} : memref<1x16x128xf32, #tpu.memory_space<vmem>>, vector<1x16x128xf32>,
    %c0_16 = arith.constant 0 : index
    %c0_17 = arith.constant 0 : index
    %19 = vector.load %arg6[%c0_16, %c0_17] : memref<128x64xf32, #tpu.memory_space<vmem>>, vector<128x64xf32>
    %cst_18 = arith.constant dense<0.000000e+00> : vector<16x64xf32>
    %20 = tpu.matmul %15, %19, %cst_18 {dimension_numbers = #tpu.dot_dimension_numbers<[1], [0], [0], [1], [0, 0, 1, 1], [], []>} : vector<16x128xf32>, vector<128x64xf32>, vector<16x64xf32> -> vector<16x64xf32>
    %c0_19 = arith.constant 0 : index
    %c0_20 = arith.constant 0 : index
    %21 = vector.load %arg7[%c0_19, %c0_20] : memref<1x64xf32, #tpu.memory_space<vmem>>, vector<1x64xf32>
    %22 = vector.broadcast %21 : vector<1x64xf32> to vector<16x64xf32>
    %23 = arith.addf %20, %22 : vector<16x64xf32>
    %cst_21 = arith.constant 0.000000e+00 : f32
    %24 = vector.broadcast %cst_21 : f32 to vector<16x64xf32>
    %25 = arith.maximumf %23, %24 : vector<16x64xf32>
    %c0_22 = arith.constant 0 : index
    %c0_23 = arith.constant 0 : index
    %26 = vector.load %arg8[%c0_22, %c0_23] : memref<64x32xf32, #tpu.memory_space<vmem>>, vector<64x32xf32>
    %cst_24 = arith.constant dense<0.000000e+00> : vector<16x32xf32>
    %27 = tpu.matmul %25, %26, %cst_24 {dimension_numbers = #tpu.dot_dimension_numbers<[1], [0], [0], [1], [0, 0, 1, 1], [], []>} : vector<16x64xf32>, vector<64x32xf32>, vector<16x32xf32> -> vector<16x32xf32>
    %c0_25 = arith.constant 0 : index
    %c0_26 = arith.constant 0 : index
    %28 = vector.load %arg9[%c0_25, %c0_26] : memref<1x32xf32, #tpu.memory_space<vmem>>, vector<1x32xf32>
    %29 = vector.broadcast %28 : vector<1x32xf32> to vector<16x32xf32>
    %30 = arith.addf %27, %29 : vector<16x32xf32>
    %cst_27 = arith.constant 0.000000e+00 : f32
    %31 = vector.broadcast %cst_27 : f32 to vector<16x32xf32>
    %32 = arith.maximumf %30, %31 : vector<16x32xf32>
    %c0_28 = arith.constant 0 : index
    %c0_29 = arith.constant 0 : index
    %c0_30 = arith.constant 0 : index
    %33 = vector.load %arg11[%c0_28, %c0_29, %c0_30] : memref<1x16x32xf32, #tpu.memory_space<vmem>>, vector<1x16x32xf32>
    %34 = vector.shape_cast %33 : vector<1x16x32xf32> to vector<16x32xf32>
    %35 = vector.shape_cast %32 : vector<16x32xf32> to vector<1x16x32xf32>
    tpu.vector_store %arg11[%c0_28, %c0_29, %c0_30], %35 {strides = array<i32>} : memref<1x16x32xf32, #tpu.memory_space<vmem>>, vector<1x16x32xf32>,
    return
  }
  func.func @transform_0(%arg0: i32) -> (i32, i32, i32) {
    %c0_i32 = arith.constant 0 : i32
    %c0_i32_0 = arith.constant 0 : i32
    %c0_i32_1 = arith.constant 0 : i32
    return %arg0, %c0_i32, %c0_i32_0 : i32, i32, i32
  }
  func.func @transform_1(%arg0: i32) -> (i32, i32) {
    %c0_i32 = arith.constant 0 : i32
    %c0_i32_0 = arith.constant 0 : i32
    %c0_i32_1 = arith.constant 0 : i32
    return %c0_i32, %c0_i32_0 : i32, i32
  }
  func.func @transform_2(%arg0: i32) -> (i32, i32) {
    %c0_i32 = arith.constant 0 : i32
    %c0_i32_0 = arith.constant 0 : i32
    %c0_i32_1 = arith.constant 0 : i32
    return %c0_i32, %c0_i32_0 : i32, i32
  }
  func.func @transform_3(%arg0: i32) -> (i32, i32) {
    %c0_i32 = arith.constant 0 : i32
    %c0_i32_0 = arith.constant 0 : i32
    %c0_i32_1 = arith.constant 0 : i32
    return %c0_i32, %c0_i32_0 : i32, i32
  }
  func.func @transform_4(%arg0: i32) -> (i32, i32) {
    %c0_i32 = arith.constant 0 : i32
    %c0_i32_0 = arith.constant 0 : i32
    %c0_i32_1 = arith.constant 0 : i32
    return %c0_i32, %c0_i32_0 : i32, i32
  }
  func.func @transform_5(%arg0: i32) -> (i32, i32) {
    %c0_i32 = arith.constant 0 : i32
    %c0_i32_0 = arith.constant 0 : i32
    %c0_i32_1 = arith.constant 0 : i32
    return %c0_i32, %c0_i32_0 : i32, i32
  }
  func.func @transform_6(%arg0: i32) -> (i32, i32) {
    %c0_i32 = arith.constant 0 : i32
    %c0_i32_0 = arith.constant 0 : i32
    %c0_i32_1 = arith.constant 0 : i32
    return %c0_i32, %c0_i32_0 : i32, i32
  }
  func.func @transform_7(%arg0: i32) -> (i32, i32) {
    %c0_i32 = arith.constant 0 : i32
    %c0_i32_0 = arith.constant 0 : i32
    %c0_i32_1 = arith.constant 0 : i32
    return %c0_i32, %c0_i32_0 : i32, i32
  }
  func.func @transform_8(%arg0: i32) -> (i32, i32) {
    %c0_i32 = arith.constant 0 : i32
    %c0_i32_0 = arith.constant 0 : i32
    %c0_i32_1 = arith.constant 0 : i32
    return %c0_i32, %c0_i32_0 : i32, i32
  }
  func.func @transform_9(%arg0: i32) -> (i32, i32, i32) {
    %c0_i32 = arith.constant 0 : i32
    %c0_i32_0 = arith.constant 0 : i32
    %c0_i32_1 = arith.constant 0 : i32
    return %arg0, %c0_i32, %c0_i32_0 : i32, i32, i32
  }
  func.func @transform_10(%arg0: i32) -> (i32, i32, i32) {
    %c0_i32 = arith.constant 0 : i32
    %c0_i32_0 = arith.constant 0 : i32
    %c0_i32_1 = arith.constant 0 : i32
    return %arg0, %c0_i32, %c0_i32_0 : i32, i32, i32
  }
}

module attributes {stable_mosaic.version = 11 : i64} {
  func.func @_causal_conv5_kernel(%arg0: i32, %arg1: memref<1x20x32xf32, #tpu.memory_space<vmem>>, %arg2: memref<5x32xf32, #tpu.memory_space<vmem>>, %arg3: memref<1x1xf32, #tpu.memory_space<vmem>>, %arg4: memref<1x16x1xf32, #tpu.memory_space<vmem>>) attributes {dimension_semantics = [#tpu.dimension_semantics<parallel>], iteration_bounds = array<i64: 2>, scalar_prefetch = 0 : i64, scratch_operands = 0 : i64, tpu.core_type = #tpu.core_type<tc>, window_params = [{transform_indices = @transform_0, window_bounds = array<i64: 1, 20, 32>}, {pipeline_mode = #tpu.pipeline_mode<synchronous>, transform_indices = @transform_1, window_bounds = array<i64: 5, 32>}, {pipeline_mode = #tpu.pipeline_mode<synchronous>, transform_indices = @transform_2, window_bounds = array<i64: 1, 1>}, {transform_indices = @transform_3, window_bounds = array<i64: 1, 16, 1>}]} {
    %c0 = arith.constant 0 : index
    %c0_0 = arith.constant 0 : index
    %c0_1 = arith.constant 0 : index
    %0 = vector.load %arg1[%c0, %c0_0, %c0_1] : memref<1x20x32xf32, #tpu.memory_space<vmem>>, vector<1x20x32xf32>
    %1 = vector.shape_cast %0 : vector<1x20x32xf32> to vector<20x32xf32>
    %c0_2 = arith.constant 0 : index
    %c0_3 = arith.constant 0 : index
    %2 = vector.load %arg2[%c0_2, %c0_3] : memref<5x32xf32, #tpu.memory_space<vmem>>, vector<5x32xf32>
    %cst = arith.constant 0.000000e+00 : f32
    %3 = vector.broadcast %cst : f32 to vector<16x32xf32>
    %4 = vector.extract_strided_slice %1 {offsets = [0, 0], sizes = [16, 32], strides = [1, 1]} : vector<20x32xf32> to vector<16x32xf32>
    %5 = vector.extract_strided_slice %2 {offsets = [0, 0], sizes = [1, 32], strides = [1, 1]} : vector<5x32xf32> to vector<1x32xf32>
    %6 = vector.broadcast %5 : vector<1x32xf32> to vector<16x32xf32>
    %7 = arith.mulf %4, %6 : vector<16x32xf32>
    %8 = arith.addf %3, %7 : vector<16x32xf32>
    %9 = vector.extract_strided_slice %1 {offsets = [1, 0], sizes = [16, 32], strides = [1, 1]} : vector<20x32xf32> to vector<16x32xf32>
    %10 = vector.extract_strided_slice %2 {offsets = [1, 0], sizes = [1, 32], strides = [1, 1]} : vector<5x32xf32> to vector<1x32xf32>
    %11 = vector.broadcast %10 : vector<1x32xf32> to vector<16x32xf32>
    %12 = arith.mulf %9, %11 : vector<16x32xf32>
    %13 = arith.addf %8, %12 : vector<16x32xf32>
    %14 = vector.extract_strided_slice %1 {offsets = [2, 0], sizes = [16, 32], strides = [1, 1]} : vector<20x32xf32> to vector<16x32xf32>
    %15 = vector.extract_strided_slice %2 {offsets = [2, 0], sizes = [1, 32], strides = [1, 1]} : vector<5x32xf32> to vector<1x32xf32>
    %16 = vector.broadcast %15 : vector<1x32xf32> to vector<16x32xf32>
    %17 = arith.mulf %14, %16 : vector<16x32xf32>
    %18 = arith.addf %13, %17 : vector<16x32xf32>
    %19 = vector.extract_strided_slice %1 {offsets = [3, 0], sizes = [16, 32], strides = [1, 1]} : vector<20x32xf32> to vector<16x32xf32>
    %20 = vector.extract_strided_slice %2 {offsets = [3, 0], sizes = [1, 32], strides = [1, 1]} : vector<5x32xf32> to vector<1x32xf32>
    %21 = vector.broadcast %20 : vector<1x32xf32> to vector<16x32xf32>
    %22 = arith.mulf %19, %21 : vector<16x32xf32>
    %23 = arith.addf %18, %22 : vector<16x32xf32>
    %24 = vector.extract_strided_slice %1 {offsets = [4, 0], sizes = [16, 32], strides = [1, 1]} : vector<20x32xf32> to vector<16x32xf32>
    %25 = vector.extract_strided_slice %2 {offsets = [4, 0], sizes = [1, 32], strides = [1, 1]} : vector<5x32xf32> to vector<1x32xf32>
    %26 = vector.broadcast %25 : vector<1x32xf32> to vector<16x32xf32>
    %27 = arith.mulf %24, %26 : vector<16x32xf32>
    %28 = arith.addf %23, %27 : vector<16x32xf32>
    %cst_4 = arith.constant dense<0.000000e+00> : vector<16xf32>
    %29 = vector.multi_reduction <add>, %28, %cst_4 [1] : vector<16x32xf32> to vector<16xf32>
    %30 = vector.shape_cast %29 : vector<16xf32> to vector<16x1xf32>
    %c0_5 = arith.constant 0 : index
    %c0_6 = arith.constant 0 : index
    %31 = vector.load %arg3[%c0_5, %c0_6] : memref<1x1xf32, #tpu.memory_space<vmem>>, vector<1x1xf32>
    %32 = vector.broadcast %31 : vector<1x1xf32> to vector<16x1xf32>
    %33 = arith.addf %30, %32 : vector<16x1xf32>
    %c0_7 = arith.constant 0 : index
    %c0_8 = arith.constant 0 : index
    %c0_9 = arith.constant 0 : index
    %34 = vector.load %arg4[%c0_7, %c0_8, %c0_9] : memref<1x16x1xf32, #tpu.memory_space<vmem>>, vector<1x16x1xf32>
    %35 = vector.shape_cast %34 : vector<1x16x1xf32> to vector<16x1xf32>
    %36 = vector.shape_cast %33 : vector<16x1xf32> to vector<1x16x1xf32>
    tpu.vector_store %arg4[%c0_7, %c0_8, %c0_9], %36 {strides = array<i32>} : memref<1x16x1xf32, #tpu.memory_space<vmem>>, vector<1x16x1xf32>,
    return
  }
  func.func @transform_0(%arg0: i32) -> (i32, i32, i32) {
    %c0_i32 = arith.constant 0 : i32
    %c0_i32_0 = arith.constant 0 : i32
    %c0_i32_1 = arith.constant 0 : i32
    return %arg0, %c0_i32, %c0_i32_0 : i32, i32, i32
  }
  func.func @transform_1(%arg0: i32) -> (i32, i32) {
    %c0_i32 = arith.constant 0 : i32
    %c0_i32_0 = arith.constant 0 : i32
    %c0_i32_1 = arith.constant 0 : i32
    return %c0_i32, %c0_i32_0 : i32, i32
  }
  func.func @transform_2(%arg0: i32) -> (i32, i32) {
    %c0_i32 = arith.constant 0 : i32
    %c0_i32_0 = arith.constant 0 : i32
    %c0_i32_1 = arith.constant 0 : i32
    return %c0_i32, %c0_i32_0 : i32, i32
  }
  func.func @transform_3(%arg0: i32) -> (i32, i32, i32) {
    %c0_i32 = arith.constant 0 : i32
    %c0_i32_0 = arith.constant 0 : i32
    %c0_i32_1 = arith.constant 0 : i32
    return %arg0, %c0_i32, %c0_i32_0 : i32, i32, i32
  }
}

module attributes {stable_mosaic.version = 11 : i64} {
  func.func @_adj_gcn_cls_kernel(%arg0: i32, %arg1: memref<1x16x64xf32, #tpu.memory_space<vmem>>, %arg2: memref<1x16x128xf32, #tpu.memory_space<vmem>>, %arg3: memref<1x16x1xf32, #tpu.memory_space<vmem>>, %arg4: memref<1x1x16xf32, #tpu.memory_space<vmem>>, %arg5: memref<128x192xf32, #tpu.memory_space<vmem>>, %arg6: memref<96x96xf32, #tpu.memory_space<vmem>>, %arg7: memref<96x1xf32, #tpu.memory_space<vmem>>, %arg8: memref<1x1xf32, #tpu.memory_space<vmem>>, %arg9: memref<1x16x1xf32, #tpu.memory_space<vmem>>) attributes {dimension_semantics = [#tpu.dimension_semantics<parallel>], iteration_bounds = array<i64: 2>, scalar_prefetch = 0 : i64, scratch_operands = 0 : i64, tpu.core_type = #tpu.core_type<tc>, window_params = [{transform_indices = @transform_0, window_bounds = array<i64: 1, 16, 64>}, {transform_indices = @transform_1, window_bounds = array<i64: 1, 16, 128>}, {transform_indices = @transform_2, window_bounds = array<i64: 1, 16, 1>}, {transform_indices = @transform_3, window_bounds = array<i64: 1, 1, 16>}, {pipeline_mode = #tpu.pipeline_mode<synchronous>, transform_indices = @transform_4, window_bounds = array<i64: 128, 192>}, {pipeline_mode = #tpu.pipeline_mode<synchronous>, transform_indices = @transform_5, window_bounds = array<i64: 96, 96>}, {pipeline_mode = #tpu.pipeline_mode<synchronous>, transform_indices = @transform_6, window_bounds = array<i64: 96, 1>}, {pipeline_mode = #tpu.pipeline_mode<synchronous>, transform_indices = @transform_7, window_bounds = array<i64: 1, 1>}, {transform_indices = @transform_8, window_bounds = array<i64: 1, 16, 1>}]} {
    %c0 = arith.constant 0 : index
    %c0_0 = arith.constant 0 : index
    %c0_1 = arith.constant 0 : index
    %0 = vector.load %arg1[%c0, %c0_0, %c0_1] : memref<1x16x64xf32, #tpu.memory_space<vmem>>, vector<1x16x64xf32>
    %1 = vector.shape_cast %0 : vector<1x16x64xf32> to vector<16x64xf32>
    %c0_2 = arith.constant 0 : index
    %c0_3 = arith.constant 0 : index
    %c0_4 = arith.constant 0 : index
    %2 = vector.load %arg2[%c0_2, %c0_3, %c0_4] : memref<1x16x128xf32, #tpu.memory_space<vmem>>, vector<1x16x128xf32>
    %3 = vector.shape_cast %2 : vector<1x16x128xf32> to vector<16x128xf32>
    %c0_5 = arith.constant 0 : index
    %c0_6 = arith.constant 0 : index
    %c0_7 = arith.constant 0 : index
    %4 = vector.load %arg3[%c0_5, %c0_6, %c0_7] : memref<1x16x1xf32, #tpu.memory_space<vmem>>, vector<1x16x1xf32>
    %5 = vector.shape_cast %4 : vector<1x16x1xf32> to vector<16x1xf32>
    %c0_8 = arith.constant 0 : index
    %c0_9 = arith.constant 0 : index
    %c0_10 = arith.constant 0 : index
    %6 = vector.load %arg4[%c0_8, %c0_9, %c0_10] : memref<1x1x16xf32, #tpu.memory_space<vmem>>, vector<1x1x16xf32>
    %7 = vector.shape_cast %6 : vector<1x1x16xf32> to vector<1x16xf32>
    %8 = arith.mulf %1, %1 : vector<16x64xf32>
    %cst = arith.constant dense<0.000000e+00> : vector<16xf32>
    %9 = vector.multi_reduction <add>, %8, %cst [1] : vector<16x64xf32> to vector<16xf32>
    %10 = vector.shape_cast %9 : vector<16xf32> to vector<16x1xf32>
    %cst_11 = arith.constant 9.99999968E-21 : f32
    %11 = vector.broadcast %cst_11 : f32 to vector<16x1xf32>
    %12 = arith.addf %10, %11 : vector<16x1xf32>
    %13 = math.rsqrt %12 : vector<16x1xf32>
    %14 = vector.broadcast %13 : vector<16x1xf32> to vector<16x64xf32>
    %15 = arith.mulf %1, %14 : vector<16x64xf32>
    %cst_12 = arith.constant dense<0.000000e+00> : vector<16x16xf32>
    %16 = tpu.matmul %15, %15, %cst_12 {dimension_numbers = #tpu.dot_dimension_numbers<[1], [1], [0], [0], [0, 0, 1, 0], [], []>} : vector<16x64xf32>, vector<16x64xf32>, vector<16x16xf32> -> vector<16x16xf32>
    %cst_13 = arith.constant 0.699999988 : f32
    %17 = vector.broadcast %cst_13 : f32 to vector<16x16xf32>
    %18 = arith.cmpf ogt, %16, %17 : vector<16x16xf32>
    %cst_14 = arith.constant 0.000000e+00 : f32
    %19 = vector.broadcast %cst_14 : f32 to vector<16x16xf32>
    %20 = arith.select %18, %16, %19 : vector<16x16xi1>, vector<16x16xf32>
    %cst_15 = arith.constant dense<0xFF800000> : vector<16xf32>
    %21 = vector.multi_reduction <maximumf>, %20, %cst_15 [1] : vector<16x16xf32> to vector<16xf32>
    %22 = vector.shape_cast %21 : vector<16xf32> to vector<16x1xf32>
    %23 = vector.broadcast %22 : vector<16x1xf32> to vector<16x16xf32>
    %24 = arith.subf %20, %23 : vector<16x16xf32>
    %25 = math.exp %24 : vector<16x16xf32>
    %cst_16 = arith.constant dense<0.000000e+00> : vector<16xf32>
    %26 = vector.multi_reduction <add>, %25, %cst_16 [1] : vector<16x16xf32> to vector<16xf32>
    %27 = vector.shape_cast %26 : vector<16xf32> to vector<16x1xf32>
    %28 = tpu.reciprocal %27 {approx = true} : vector<16x1xf32> -> vector<16x1xf32>
    %29 = vector.broadcast %28 : vector<16x1xf32> to vector<16x16xf32>
    %30 = arith.mulf %25, %29 : vector<16x16xf32>
    %31 = tpu.iota {dimensions = array<i32: 0>} : vector<16x16xi32>
    %32 = tpu.iota {dimensions = array<i32: 1>} : vector<16x16xi32>
    %33 = arith.subi %31, %32 : vector<16x16xi32>
    %34 = math.absi %33 : vector<16x16xi32>
    %35 = arith.sitofp %34 : vector<16x16xi32> to vector<16x16xf32>
    %cst_17 = arith.constant 0.000000e+00 : f32
    %36 = vector.broadcast %cst_17 : f32 to vector<16x16xf32>
    %37 = arith.subf %36, %35 : vector<16x16xf32>
    %cst_18 = arith.constant 0.36787945 : f32
    %38 = vector.broadcast %cst_18 : f32 to vector<16x16xf32>
    %39 = arith.mulf %37, %38 : vector<16x16xf32>
    %40 = math.exp %39 : vector<16x16xf32>
    %cst_19 = arith.constant 0.000000e+00 : f32
    %41 = vector.broadcast %cst_19 : f32 to vector<16x1xf32>
    %42 = arith.subf %41, %5 : vector<16x1xf32>
    %43 = math.exp %42 : vector<16x1xf32>
    %cst_20 = arith.constant 1.000000e+00 : f32
    %44 = vector.broadcast %cst_20 : f32 to vector<16x1xf32>
    %45 = arith.addf %44, %43 : vector<16x1xf32>
    %cst_21 = arith.constant 1.000000e+00 : f32
    %46 = vector.broadcast %cst_21 : f32 to vector<16x1xf32>
    %47 = arith.divf %46, %45 : vector<16x1xf32>
    %cst_22 = arith.constant 0.000000e+00 : f32
    %48 = vector.broadcast %cst_22 : f32 to vector<1x16xf32>
    %49 = arith.subf %48, %7 : vector<1x16xf32>
    %50 = math.exp %49 : vector<1x16xf32>
    %cst_23 = arith.constant 1.000000e+00 : f32
    %51 = vector.broadcast %cst_23 : f32 to vector<1x16xf32>
    %52 = arith.addf %51, %50 : vector<1x16xf32>
    %cst_24 = arith.constant 1.000000e+00 : f32
    %53 = vector.broadcast %cst_24 : f32 to vector<1x16xf32>
    %54 = arith.divf %53, %52 : vector<1x16xf32>
    %55 = vector.broadcast %47 : vector<16x1xf32> to vector<16x16xf32>
    %56 = vector.broadcast %54 : vector<1x16xf32> to vector<16x16xf32>
    %57 = arith.subf %55, %56 : vector<16x16xf32>
    %58 = math.absf %57 : vector<16x16xf32>
    %cst_25 = arith.constant 1.000000e+00 : f32
    %59 = vector.broadcast %cst_25 : f32 to vector<16x16xf32>
    %60 = arith.subf %59, %58 : vector<16x16xf32>
    %cst_26 = arith.constant 5.000000e-01 : f32
    %61 = vector.broadcast %cst_26 : f32 to vector<16x16xf32>
    %62 = arith.subf %60, %61 : vector<16x16xf32>
    %cst_27 = arith.constant 0.000000e+00 : f32
    %63 = vector.broadcast %cst_27 : f32 to vector<16x16xf32>
    %64 = arith.subf %63, %62 : vector<16x16xf32>
    %cst_28 = arith.constant 1.000000e+01 : f32
    %65 = vector.broadcast %cst_28 : f32 to vector<16x16xf32>
    %66 = arith.mulf %64, %65 : vector<16x16xf32>
    %67 = math.exp %66 : vector<16x16xf32>
    %cst_29 = arith.constant 1.000000e+00 : f32
    %68 = vector.broadcast %cst_29 : f32 to vector<16x16xf32>
    %69 = arith.addf %68, %67 : vector<16x16xf32>
    %cst_30 = arith.constant 1.000000e+00 : f32
    %70 = vector.broadcast %cst_30 : f32 to vector<16x16xf32>
    %71 = arith.divf %70, %69 : vector<16x16xf32>
    %cst_31 = arith.constant dense<0xFF800000> : vector<16xf32>
    %72 = vector.multi_reduction <maximumf>, %71, %cst_31 [1] : vector<16x16xf32> to vector<16xf32>
    %73 = vector.shape_cast %72 : vector<16xf32> to vector<16x1xf32>
    %74 = vector.broadcast %73 : vector<16x1xf32> to vector<16x16xf32>
    %75 = arith.subf %71, %74 : vector<16x16xf32>
    %76 = math.exp %75 : vector<16x16xf32>
    %cst_32 = arith.constant dense<0.000000e+00> : vector<16xf32>
    %77 = vector.multi_reduction <add>, %76, %cst_32 [1] : vector<16x16xf32> to vector<16xf32>
    %78 = vector.shape_cast %77 : vector<16xf32> to vector<16x1xf32>
    %79 = tpu.reciprocal %78 {approx = true} : vector<16x1xf32> -> vector<16x1xf32>
    %80 = vector.broadcast %79 : vector<16x1xf32> to vector<16x16xf32>
    %81 = arith.mulf %76, %80 : vector<16x16xf32>
    %c0_33 = arith.constant 0 : index
    %c0_34 = arith.constant 0 : index
    %82 = vector.load %arg5[%c0_33, %c0_34] : memref<128x192xf32, #tpu.memory_space<vmem>>, vector<128x192xf32>
    %cst_35 = arith.constant dense<0.000000e+00> : vector<16x192xf32>
    %83 = tpu.matmul %3, %82, %cst_35 {dimension_numbers = #tpu.dot_dimension_numbers<[1], [0], [0], [1], [0, 0, 1, 1], [], []>} : vector<16x128xf32>, vector<128x192xf32>, vector<16x192xf32> -> vector<16x192xf32>
    %84 = vector.extract_strided_slice %83 {offsets = [0, 0], sizes = [16, 32], strides = [1, 1]} : vector<16x192xf32> to vector<16x32xf32>
    %cst_36 = arith.constant dense<0.000000e+00> : vector<16x32xf32>
    %85 = tpu.matmul %30, %84, %cst_36 {dimension_numbers = #tpu.dot_dimension_numbers<[1], [0], [0], [1], [0, 0, 1, 1], [], []>} : vector<16x16xf32>, vector<16x32xf32>, vector<16x32xf32> -> vector<16x32xf32>
    %86 = vector.extract_strided_slice %83 {offsets = [0, 96], sizes = [16, 32], strides = [1, 1]} : vector<16x192xf32> to vector<16x32xf32>
    %87 = arith.addf %85, %86 : vector<16x32xf32>
    %cst_37 = arith.constant 0.000000e+00 : f32
    %88 = vector.broadcast %cst_37 : f32 to vector<16x32xf32>
    %89 = arith.maximumf %87, %88 : vector<16x32xf32>
    %90 = vector.extract_strided_slice %83 {offsets = [0, 32], sizes = [16, 32], strides = [1, 1]} : vector<16x192xf32> to vector<16x32xf32>
    %cst_38 = arith.constant dense<0.000000e+00> : vector<16x32xf32>
    %91 = tpu.matmul %40, %90, %cst_38 {dimension_numbers = #tpu.dot_dimension_numbers<[1], [0], [0], [1], [0, 0, 1, 1], [], []>} : vector<16x16xf32>, vector<16x32xf32>, vector<16x32xf32> -> vector<16x32xf32>
    %92 = vector.extract_strided_slice %83 {offsets = [0, 128], sizes = [16, 32], strides = [1, 1]} : vector<16x192xf32> to vector<16x32xf32>
    %93 = arith.addf %91, %92 : vector<16x32xf32>
    %cst_39 = arith.constant 0.000000e+00 : f32
    %94 = vector.broadcast %cst_39 : f32 to vector<16x32xf32>
    %95 = arith.maximumf %93, %94 : vector<16x32xf32>
    %96 = vector.extract_strided_slice %83 {offsets = [0, 64], sizes = [16, 32], strides = [1, 1]} : vector<16x192xf32> to vector<16x32xf32>
    %cst_40 = arith.constant dense<0.000000e+00> : vector<16x32xf32>
    %97 = tpu.matmul %81, %96, %cst_40 {dimension_numbers = #tpu.dot_dimension_numbers<[1], [0], [0], [1], [0, 0, 1, 1], [], []>} : vector<16x16xf32>, vector<16x32xf32>, vector<16x32xf32> -> vector<16x32xf32>
    %98 = vector.extract_strided_slice %83 {offsets = [0, 160], sizes = [16, 32], strides = [1, 1]} : vector<16x192xf32> to vector<16x32xf32>
    %99 = arith.addf %97, %98 : vector<16x32xf32>
    %cst_41 = arith.constant 0.000000e+00 : f32
    %100 = vector.broadcast %cst_41 : f32 to vector<16x32xf32>
    %101 = arith.maximumf %99, %100 : vector<16x32xf32>
    %102 = tpu.concatenate %89, %95, %101 in 1 : vector<16x32xf32>, vector<16x32xf32>, vector<16x32xf32> -> vector<16x96xf32>
    %c0_42 = arith.constant 0 : index
    %c0_43 = arith.constant 0 : index
    %103 = vector.load %arg6[%c0_42, %c0_43] : memref<96x96xf32, #tpu.memory_space<vmem>>, vector<96x96xf32>
    %cst_44 = arith.constant dense<0.000000e+00> : vector<16x96xf32>
    %104 = tpu.matmul %102, %103, %cst_44 {dimension_numbers = #tpu.dot_dimension_numbers<[1], [0], [0], [1], [0, 0, 1, 1], [], []>} : vector<16x96xf32>, vector<96x96xf32>, vector<16x96xf32> -> vector<16x96xf32>
    %105 = vector.extract_strided_slice %104 {offsets = [0, 0], sizes = [16, 32], strides = [1, 1]} : vector<16x96xf32> to vector<16x32xf32>
    %cst_45 = arith.constant dense<0.000000e+00> : vector<16x32xf32>
    %106 = tpu.matmul %30, %105, %cst_45 {dimension_numbers = #tpu.dot_dimension_numbers<[1], [0], [0], [1], [0, 0, 1, 1], [], []>} : vector<16x16xf32>, vector<16x32xf32>, vector<16x32xf32> -> vector<16x32xf32>
    %107 = arith.addf %106, %89 : vector<16x32xf32>
    %cst_46 = arith.constant 0.000000e+00 : f32
    %108 = vector.broadcast %cst_46 : f32 to vector<16x32xf32>
    %109 = arith.maximumf %107, %108 : vector<16x32xf32>
    %110 = vector.extract_strided_slice %104 {offsets = [0, 32], sizes = [16, 32], strides = [1, 1]} : vector<16x96xf32> to vector<16x32xf32>
    %cst_47 = arith.constant dense<0.000000e+00> : vector<16x32xf32>
    %111 = tpu.matmul %40, %110, %cst_47 {dimension_numbers = #tpu.dot_dimension_numbers<[1], [0], [0], [1], [0, 0, 1, 1], [], []>} : vector<16x16xf32>, vector<16x32xf32>, vector<16x32xf32> -> vector<16x32xf32>
    %112 = arith.addf %111, %95 : vector<16x32xf32>
    %cst_48 = arith.constant 0.000000e+00 : f32
    %113 = vector.broadcast %cst_48 : f32 to vector<16x32xf32>
    %114 = arith.maximumf %112, %113 : vector<16x32xf32>
    %115 = vector.extract_strided_slice %104 {offsets = [0, 64], sizes = [16, 32], strides = [1, 1]} : vector<16x96xf32> to vector<16x32xf32>
    %cst_49 = arith.constant dense<0.000000e+00> : vector<16x32xf32>
    %116 = tpu.matmul %81, %115, %cst_49 {dimension_numbers = #tpu.dot_dimension_numbers<[1], [0], [0], [1], [0, 0, 1, 1], [], []>} : vector<16x16xf32>, vector<16x32xf32>, vector<16x32xf32> -> vector<16x32xf32>
    %117 = arith.addf %116, %101 : vector<16x32xf32>
    %cst_50 = arith.constant 0.000000e+00 : f32
    %118 = vector.broadcast %cst_50 : f32 to vector<16x32xf32>
    %119 = arith.maximumf %117, %118 : vector<16x32xf32>
    %120 = tpu.concatenate %109, %114, %119 in 1 : vector<16x32xf32>, vector<16x32xf32>, vector<16x32xf32> -> vector<16x96xf32>
    %c0_51 = arith.constant 0 : index
    %c0_52 = arith.constant 0 : index
    %121 = vector.load %arg7[%c0_51, %c0_52] : memref<96x1xf32, #tpu.memory_space<vmem>>, vector<96x1xf32>
    %cst_53 = arith.constant dense<0.000000e+00> : vector<16x1xf32>
    %122 = tpu.matmul %120, %121, %cst_53 {dimension_numbers = #tpu.dot_dimension_numbers<[1], [0], [0], [1], [0, 0, 1, 1], [], []>} : vector<16x96xf32>, vector<96x1xf32>, vector<16x1xf32> -> vector<16x1xf32>
    %c0_54 = arith.constant 0 : index
    %c0_55 = arith.constant 0 : index
    %123 = vector.load %arg8[%c0_54, %c0_55] : memref<1x1xf32, #tpu.memory_space<vmem>>, vector<1x1xf32>
    %124 = vector.broadcast %123 : vector<1x1xf32> to vector<16x1xf32>
    %125 = arith.addf %122, %124 : vector<16x1xf32>
    %c0_56 = arith.constant 0 : index
    %c0_57 = arith.constant 0 : index
    %c0_58 = arith.constant 0 : index
    %126 = vector.load %arg9[%c0_56, %c0_57, %c0_58] : memref<1x16x1xf32, #tpu.memory_space<vmem>>, vector<1x16x1xf32>
    %127 = vector.shape_cast %126 : vector<1x16x1xf32> to vector<16x1xf32>
    %128 = vector.shape_cast %125 : vector<16x1xf32> to vector<1x16x1xf32>
    tpu.vector_store %arg9[%c0_56, %c0_57, %c0_58], %128 {strides = array<i32>} : memref<1x16x1xf32, #tpu.memory_space<vmem>>, vector<1x16x1xf32>,
    return
  }
  func.func @transform_0(%arg0: i32) -> (i32, i32, i32) {
    %c0_i32 = arith.constant 0 : i32
    %c0_i32_0 = arith.constant 0 : i32
    %c0_i32_1 = arith.constant 0 : i32
    return %arg0, %c0_i32, %c0_i32_0 : i32, i32, i32
  }
  func.func @transform_1(%arg0: i32) -> (i32, i32, i32) {
    %c0_i32 = arith.constant 0 : i32
    %c0_i32_0 = arith.constant 0 : i32
    %c0_i32_1 = arith.constant 0 : i32
    return %arg0, %c0_i32, %c0_i32_0 : i32, i32, i32
  }
  func.func @transform_2(%arg0: i32) -> (i32, i32, i32) {
    %c0_i32 = arith.constant 0 : i32
    %c0_i32_0 = arith.constant 0 : i32
    %c0_i32_1 = arith.constant 0 : i32
    return %arg0, %c0_i32, %c0_i32_0 : i32, i32, i32
  }
  func.func @transform_3(%arg0: i32) -> (i32, i32, i32) {
    %c0_i32 = arith.constant 0 : i32
    %c0_i32_0 = arith.constant 0 : i32
    %c0_i32_1 = arith.constant 0 : i32
    return %arg0, %c0_i32, %c0_i32_0 : i32, i32, i32
  }
  func.func @transform_4(%arg0: i32) -> (i32, i32) {
    %c0_i32 = arith.constant 0 : i32
    %c0_i32_0 = arith.constant 0 : i32
    %c0_i32_1 = arith.constant 0 : i32
    return %c0_i32, %c0_i32_0 : i32, i32
  }
  func.func @transform_5(%arg0: i32) -> (i32, i32) {
    %c0_i32 = arith.constant 0 : i32
    %c0_i32_0 = arith.constant 0 : i32
    %c0_i32_1 = arith.constant 0 : i32
    return %c0_i32, %c0_i32_0 : i32, i32
  }
  func.func @transform_6(%arg0: i32) -> (i32, i32) {
    %c0_i32 = arith.constant 0 : i32
    %c0_i32_0 = arith.constant 0 : i32
    %c0_i32_1 = arith.constant 0 : i32
    return %c0_i32, %c0_i32_0 : i32, i32
  }
  func.func @transform_7(%arg0: i32) -> (i32, i32) {
    %c0_i32 = arith.constant 0 : i32
    %c0_i32_0 = arith.constant 0 : i32
    %c0_i32_1 = arith.constant 0 : i32
    return %c0_i32, %c0_i32_0 : i32, i32
  }
  func.func @transform_8(%arg0: i32) -> (i32, i32, i32) {
    %c0_i32 = arith.constant 0 : i32
    %c0_i32_0 = arith.constant 0 : i32
    %c0_i32_1 = arith.constant 0 : i32
    return %arg0, %c0_i32, %c0_i32_0 : i32, i32, i32
  }
}

</mosaic_0001>

<llo_original>
// kernel: model_forward.4
$region0: #{model_forward.4}
  #allocation0 [shape = 'u32[]', space=smem, size = 0x4, offset = 0x4, fixed_abs, tag = 'smem constant byte address 0x4 - core index']
  #allocation1 [shape = 'u32[144,128]{1,0:T(1,128)}', space=vmem, size = 0x12000, scoped, tag = 'internal scratch']
  #allocation2 [shape = 'f32[1,1]{1,0:T(1,128)S(1)}', space=vmem, size = 0x200, scoped, tag = 'scoped memory for model_forward.4']
  %s0 = inlined_call_operand.vmem [shape: f32[2,20,32], index: 0, kind: input, shape index: {}]
  %s1 = inlined_call_operand.vmem [shape: f32[5,32], index: 1, kind: input, shape index: {}]
  %s2 = inlined_call_operand.<no memory space> [shape: f32[1,1], index: 2, kind: input, shape index: {}]
  %s3 = inlined_call_operand.vmem [shape: f32[2,16,1], index: 3, kind: output, shape index: {}]
  %s4 = sld [smem:[#allocation0]]
  $region45: #{model_forward.4} parent=0
    _
  %s6 = ssub.s32 1, %s4
  %s7 = scalar_select 0, %s6, %s4
  %v8 = vstv %s2
  %9 = vst [vmem:[#allocation2] sm:$0x1] %v8
  loop: start=0, step=1, limit=4
  $region2: #{model_forward.4} parent=0 // loop_pre_header
    _
  $region3: #{model_forward.4} parent=0 // loop_header
    %s11 = sphi 0, %s15
    %p12 = scmp.ge.s32.totalorder %s11, 4
    %s21 = sphi 0, %s23
    %s24 = sphi 0, %s21
    %s25 = sphi 0, %s24
    %s41 = sphi 0, %s25
    %s45 = sphi 0, %s45
    %s47 = sphi 0, %s45
    %s48 = sphi 0, %s47
    %s62 = sphi 0, %s48
    %s66 = sphi 0, %s66
    %s68 = sphi 0, %s66
    %s69 = sphi 0, %s68
    %s83 = sphi 0, %s69
    %s89 = sphi 0, %s91
    %s92 = sphi 0, %s89
    %s93 = sphi 0, %s92
    %s109 = sphi 0, %s93
  $region4: #{model_forward.4} parent=0 // loop_header_branch
    %14 = sbr.rel (%p12) target = $region8
  $region5: #{model_forward.4} parent=0 // loop_body
    %s16 = ssub.s32 %s11, 1
    %s17 = ssub.s32 %s11, 2
    %s18 = sadd.s32 %s11, 1
    %s19 = ssub.s32 %s11, %s18
    %p20 = scmp.eq.s32.totalorder %s19, 0
    %s22 = sadd.s32 %s21, 1
    %s23 = scalar_select %p20, %s21, %s22
    %p26 = pneg %p20
    %p27 = scmp.eq.s32.totalorder %s11, 1
    %p28 = por %p26, %p27
    %p29 = scmp.ne.s32.totalorder %s21, %s24
    %p30 = scmp.eq.s32.totalorder %s11, 0
    %p31 = por %p29, %p30
    %p32 = scmp.ne.s32.totalorder %s21, %s24
    %p33 = scmp.eq.s32.totalorder %s16, 1
    %p34 = por %p32, %p33
    %p35 = scmp.ne.s32.totalorder %s24, %s25
    %p36 = scmp.eq.s32.totalorder %s16, 0
    %p37 = por %p35, %p36
    %p38 = scmp.ne.s32.totalorder %s24, %s25
    %p39 = scmp.eq.s32.totalorder %s17, 1
    %p40 = por %p38, %p39
    %p42 = scmp.ne.s32.totalorder %s25, %s41
    %p43 = scmp.eq.s32.totalorder %s17, 0
    %p44 = por %p42, %p43
    %s46 = sadd.s32 %s45, 1
    %p49 = scmp.eq.s32.totalorder %s11, 1
    %p50 = scmp.ne.s32.totalorder %s45, %s47
    %p51 = scmp.eq.s32.totalorder %s11, 0
    %p52 = por %p50, %p51
    %p53 = scmp.ne.s32.totalorder %s45, %s47
    %p54 = scmp.eq.s32.totalorder %s16, 1
    %p55 = por %p53, %p54
    %p56 = scmp.ne.s32.totalorder %s47, %s48
    %p57 = scmp.eq.s32.totalorder %s16, 0
    %p58 = por %p56, %p57
    %p59 = scmp.ne.s32.totalorder %s47, %s48
    %p60 = scmp.eq.s32.totalorder %s17, 1
    %p61 = por %p59, %p60
    %p63 = scmp.ne.s32.totalorder %s48, %s62
    %p64 = scmp.eq.s32.totalorder %s17, 0
    %p65 = por %p63, %p64
    %s67 = sadd.s32 %s66, 1
    %p70 = scmp.eq.s32.totalorder %s11, 1
    %p71 = scmp.ne.s32.totalorder %s66, %s68
    %p72 = scmp.eq.s32.totalorder %s11, 0
    %p73 = por %p71, %p72
    %p74 = scmp.ne.s32.totalorder %s66, %s68
    %p75 = scmp.eq.s32.totalorder %s16, 1
    %p76 = por %p74, %p75
    %p77 = scmp.ne.s32.totalorder %s68, %s69
    %p78 = scmp.eq.s32.totalorder %s16, 0
    %p79 = por %p77, %p78
    %p80 = scmp.ne.s32.totalorder %s68, %s69
    %p81 = scmp.eq.s32.totalorder %s17, 1
    %p82 = por %p80, %p81
    %p84 = scmp.ne.s32.totalorder %s69, %s83
    %p85 = scmp.eq.s32.totalorder %s17, 0
    %p86 = por %p84, %p85
    %s87 = ssub.s32 %s11, %s18
    %p88 = scmp.eq.s32.totalorder %s87, 0
    %s90 = sadd.s32 %s89, 1
    %s91 = scalar_select %p88, %s89, %s90
    %p94 = pneg %p88
    %p95 = scmp.eq.s32.totalorder %s11, 1
    %p96 = por %p94, %p95
    %p97 = scmp.ne.s32.totalorder %s89, %s92
    %p98 = scmp.eq.s32.totalorder %s11, 0
    %p99 = por %p97, %p98
    %p100 = scmp.ne.s32.totalorder %s89, %s92
    %p101 = scmp.eq.s32.totalorder %s16, 1
    %p102 = por %p100, %p101
    %p103 = scmp.ne.s32.totalorder %s92, %s93
    %p104 = scmp.eq.s32.totalorder %s16, 0
    %p105 = por %p103, %p104
    %p106 = scmp.ne.s32.totalorder %s92, %s93
    %p107 = scmp.eq.s32.totalorder %s17, 1
    %p108 = por %p106, %p107
    %p110 = scmp.ne.s32.totalorder %s93, %s109
    %p111 = scmp.eq.s32.totalorder %s17, 0
    %p112 = por %p110, %p111
    %p113 = scmp.le.s32.totalorder 1, %s11
    %p114 = scmp.lt.s32.totalorder %s11, 3
    %p115 = pnand %p113, %p114
    %p116 = pneg %p115
    // Predicated region
    $region9: #{model_forward.4} parent=5 // pred_check
      _
    $region10: #{model_forward.4} parent=5 // pred_check_branch
      %118 = sbr.rel (%p115) target = $region12
    $region11: #{model_forward.4} parent=5 // pred_region
      %s119 = ssub.s32 %s11, 1
      // Predicated region
      $region13: #{model_forward.4} parent=11 // pred_check
        %p120 = pneg %p58
      $region14: #{model_forward.4} parent=11 // pred_check_branch
        %122 = sbr.rel (%p120) target = $region16
      $region15: #{model_forward.4} parent=11 // pred_region
        _
      $region16: #{model_forward.4} parent=11 // pred_fallthru
        _
      // Predicated region
      $region17: #{model_forward.4} parent=11 // pred_check
        %p123 = pneg %p79
      $region18: #{model_forward.4} parent=11 // pred_check_branch
        %125 = sbr.rel (%p123) target = $region20
      $region19: #{model_forward.4} parent=11 // pred_region
        _
      $region20: #{model_forward.4} parent=11 // pred_fallthru
        _
    $region12: #{model_forward.4} parent=5 // pred_fallthru
      _
    %p126 = scmp.lt.s32.totalorder %s11, 2
    // Predicated region
    $region21: #{model_forward.4} parent=5 // pred_check
      %p127 = pneg %p126
    $region22: #{model_forward.4} parent=5 // pred_check_branch
      %129 = sbr.rel (%p127) target = $region24
    $region23: #{model_forward.4} parent=5 // pred_region
      // Predicated region
      $region25: #{model_forward.4} parent=23 // pred_check
        %p130 = pneg %p31
      $region26: #{model_forward.4} parent=23 // pred_check_branch
        %132 = sbr.rel (%p130) target = $region28
      $region27: #{model_forward.4} parent=23 // pred_region
        %p133 = scmp.lt.s32.totalorder %s11, 1
        %s134 = scalar_select %p133, %s11, 1
        %s135 = smul.addr %s134, 3
        %s136 = smul.addr %s135, 8
        %s137 = scalar_lea.vmem %s0, %s136
      $region28: #{model_forward.4} parent=23 // pred_fallthru
        _
    $region24: #{model_forward.4} parent=5 // pred_fallthru
      _
    %p138 = scmp.le.s32.totalorder 1, %s11
    %p139 = scmp.lt.s32.totalorder %s11, 3
    %p140 = pnand %p138, %p139
    %p141 = pneg %p140
    // Predicated region
    $region29: #{model_forward.4} parent=5 // pred_check
      _
    $region30: #{model_forward.4} parent=5 // pred_check_branch
      %143 = sbr.rel (%p140) target = $region32
    $region31: #{model_forward.4} parent=5 // pred_region
      %s144 = ssub.s32 %s11, 1
      %p145 = scmp.lt.s32.totalorder %s16, 1
      %s146 = scalar_select %p145, %s16, 1
      %s147 = smul.addr %s146, 3
      %s148 = smul.addr %s147, 8
      %s149 = scalar_lea.vmem %s0, %s148
      %p150 = pneg %p37
      %p151 = pneg %p34
      %p152 = pneg %p58
      %p153 = pneg %p55
      %p154 = pneg %p79
      %p155 = pneg %p76
      %p156 = pneg %p105
      %p157 = pneg %p102
      %p158 = scmp.lt.s32.totalorder %s16, 1
      %s159 = scalar_select %p158, %s16, 1
      %s160 = smul.addr %s159, 2
      %s161 = smul.addr %s160, 8
      %s162 = scalar_lea.vmem %s3, %s161
      %p163 = scmp.lt.s32.totalorder %s16, 1
      %s164 = scalar_select %p163, %s16, 1
      %s165 = smul.addr %s164, 3
      %s166 = smul.addr %s165, 8
      %s167 = scalar_lea.vmem %s0, %s166
      %p168 = scmp.lt.s32.totalorder %s16, 1
      %s169 = scalar_select %p168, %s16, 1
      %s170 = smul.addr %s169, 2
      %s171 = smul.addr %s170, 8
      %s172 = scalar_lea.vmem %s3, %s171
      %v173 = vld [vmem:[%s167] sm:$0xff]
      %v174 = vld [vmem:[%s167 + $0x8] sm:$0xff]
      %v175 = vld [vmem:[%s167 + $0x10] sm:$0xf]
      %v176 = vld [vmem:[%s1] sm:$0x1f]
      %v177 = vlaneseq
      %v178 = vshrl.u32 %v177, 7
      %v179 = vsub.s32 0, %v178
      %v180 = vrot.slane %v176, %v179
      %v181 = vmul.f32 %v173, %v180
      %v182 = vmul.f32 %v174, %v180
      %v183 = vadd.f32 %v181, 0.0
      %v184 = vadd.f32 %v182, 0.0
      %v185 = vlaneseq
      %v186 = vshrl.u32 %v185, 7
      %v187 = vsub.s32 1, %v186
      %v188 = vrot.slane %v176, %v187
      %v189 = vmul.f32 %v173, %v188
      %v190 = vmul.f32 %v174, %v188
      %v191 = vmul.f32 %v175, %v188
      %vm195 = vcmask 1046528
      %v196 = vrot.slane %v189, 1
      %v197 = vrot.slane %v190, 1
      %v198 = vsel %vm195, %v196, %v197
      %v199 = vrot.slane %v191, 1
      %v200 = vsel %vm195, %v197, %v199
      %v203 = vadd.f32 %v183, %v198
      %v204 = vadd.f32 %v184, %v200
      %v205 = vlaneseq
      %v206 = vshrl.u32 %v205, 7
      %v207 = vsub.s32 2, %v206
      %v208 = vrot.slane %v176, %v207
      %v209 = vmul.f32 %v173, %v208
      %v210 = vmul.f32 %v174, %v208
      %v211 = vmul.f32 %v175, %v208
      %vm215 = vcmask 1045504
      %v216 = vrot.slane %v209, 2
      %v217 = vrot.slane %v210, 2
      %v218 = vsel %vm215, %v216, %v217
      %v219 = vrot.slane %v211, 2
      %v220 = vsel %vm215, %v217, %v219
      %v223 = vadd.f32 %v203, %v218
      %v224 = vadd.f32 %v204, %v220
      %v225 = vlaneseq
      %v226 = vshrl.u32 %v225, 7
      %v227 = vsub.s32 3, %v226
      %v228 = vrot.slane %v176, %v227
      %v229 = vmul.f32 %v173, %v228
      %v230 = vmul.f32 %v174, %v228
      %v231 = vmul.f32 %v175, %v228
      %vm235 = vcmask 1044480
      %v236 = vrot.slane %v229, 3
      %v237 = vrot.slane %v230, 3
      %v238 = vsel %vm235, %v236, %v237
      %v239 = vrot.slane %v231, 3
      %v240 = vsel %vm235, %v237, %v239
      %v243 = vadd.f32 %v223, %v238
      %v244 = vadd.f32 %v224, %v240
      %v245 = vlaneseq
      %v246 = vshrl.u32 %v245, 7
      %v247 = vsub.s32 4, %v246
      %v248 = vrot.slane %v176, %v247
      %v249 = vmul.f32 %v173, %v248
      %v250 = vmul.f32 %v174, %v248
      %v251 = vmul.f32 %v175, %v248
      %vm255 = vcmask 1043456
      %v256 = vrot.slane %v249, 4
      %v257 = vrot.slane %v250, 4
      %v258 = vsel %vm255, %v256, %v257
      %v259 = vrot.slane %v251, 4
      %v260 = vsel %vm255, %v257, %v259
      %v263 = vadd.f32 %v243, %v258
      %v264 = vadd.f32 %v244, %v260
      %vm265 = vcmask 261120
      %v266 = vsel %vm265, %v263, 0.0
      %267 = vadd.xlane.f32.xlu0 %v266
      %v268 = vpop.xlane.xlu0 %267
      %v269 = vsel %vm265, %v264, 0.0
      %270 = vadd.xlane.f32.xlu0 %v269
      %v271 = vpop.xlane.xlu0 %270
      %v272 = vld [vmem:[#allocation2] sm:$0x1]
      %v274 = vlaneseq
      %v275 = vshrl.u32 %v274, 7
      %v276 = vsub.s32 0, %v275
      %v277 = vrot.slane %v272, %v276
      %v279 = vadd.f32 %v268, %v277
      %v280 = vadd.f32 %v271, %v277
      %vm281 = vcmask 7168
      %282 = vst.msk [vmem:[%s172] sm:$0xff] %vm281, %v279
      %283 = vst.msk [vmem:[%s172 + $0x8] sm:$0xff] %vm281, %v280
      %p284 = scmp.lt.s32.totalorder %s16, 1
      %s285 = scalar_select %p284, %s16, 1
      %s286 = smul.addr %s285, 2
      %s287 = smul.addr %s286, 8
      %s288 = scalar_lea.vmem %s3, %s287
      // Predicated region
      $region33: #{model_forward.4} parent=31 // pred_check
        %p289 = pneg %p102
      $region34: #{model_forward.4} parent=31 // pred_check_branch
        %291 = sbr.rel (%p289) target = $region36
      $region35: #{model_forward.4} parent=31 // pred_region
        _
      $region36: #{model_forward.4} parent=31 // pred_fallthru
        _
    $region32: #{model_forward.4} parent=5 // pred_fallthru
      _
    %p292 = scmp.le.s32.totalorder 2, %s11
    // Predicated region
    $region37: #{model_forward.4} parent=5 // pred_check
      %p293 = pneg %p292
    $region38: #{model_forward.4} parent=5 // pred_check_branch
      %295 = sbr.rel (%p293) target = $region40
    $region39: #{model_forward.4} parent=5 // pred_region
      %s296 = ssub.s32 %s11, 2
      // Predicated region
      $region41: #{model_forward.4} parent=39 // pred_check
        %p297 = pneg %p108
      $region42: #{model_forward.4} parent=39 // pred_check_branch
        %299 = sbr.rel (%p297) target = $region44
      $region43: #{model_forward.4} parent=39 // pred_region
        %p300 = scmp.lt.s32.totalorder %s17, 1
        %s301 = scalar_select %p300, %s17, 1
        %s302 = smul.addr %s301, 2
        %s303 = smul.addr %s302, 8
        %s304 = scalar_lea.vmem %s3, %s303
      $region44: #{model_forward.4} parent=39 // pred_fallthru
        _
    $region40: #{model_forward.4} parent=5 // pred_fallthru
      _
  $region6: #{model_forward.4} parent=0 // loop_footer
    %s15 = sadd.s32 1, %s11
  $region7: #{model_forward.4} parent=0 // loop_footer_branch
    %10 = sbr.rel target = $region3
  $region8: #{model_forward.4} parent=0 // loop_exit
    _

// kernel: model_forward.3
$region0: #{model_forward.3}
  #allocation0 [shape = 'u32[]', space=smem, size = 0x4, offset = 0x4, fixed_abs, tag = 'smem constant byte address 0x4 - core index']
  #allocation1 [shape = 'u32[144,128]{1,0:T(1,128)}', space=vmem, size = 0x12000, scoped, tag = 'internal scratch']
  %s0 = inlined_call_operand.vmem [shape: f32[2,16,64], index: 0, kind: input, shape index: {}]
  %s1 = inlined_call_operand.vmem [shape: f32[64,512], index: 1, kind: input, shape index: {}]
  %s2 = inlined_call_operand.vmem [shape: f32[1,512], index: 2, kind: input, shape index: {}]
  %s3 = inlined_call_operand.hbm [shape: f32[512,128], index: 3, kind: input, shape index: {}]
  %s4 = inlined_call_operand.vmem [shape: f32[1,128], index: 4, kind: input, shape index: {}]
  %s5 = inlined_call_operand.vmem [shape: f32[128,64], index: 5, kind: input, shape index: {}]
  %s6 = inlined_call_operand.vmem [shape: f32[1,64], index: 6, kind: input, shape index: {}]
  %s7 = inlined_call_operand.vmem [shape: f32[64,32], index: 7, kind: input, shape index: {}]
  %s8 = inlined_call_operand.vmem [shape: f32[1,32], index: 8, kind: input, shape index: {}]
  %s9 = inlined_call_operand.vmem [shape: f32[2,16,128], index: 9, kind: output, shape index: {0}]
  %s10 = inlined_call_operand.vmem [shape: f32[2,16,32], index: 10, kind: output, shape index: {1}]
  %11 = xla_tuple %s9, %s10
  %s12 = sld [smem:[#allocation0]]
  $region81: #{model_forward.3} parent=0
    _
  %s14 = ssub.s32 1, %s12
  %s15 = scalar_select 0, %s14, %s12
  $region1: #{model_forward.3} parent=0
    #allocation2 [shape = 'u8[262144]{0}', space=vmem, size = 0x40000, scoped, tag = 'input window, operand 3, single buffered']
    #allocation3 [shape = 's32[2]{0}', space=sflag, size = 0x8, scoped, tag = 'scoped memory for model_forward.3']
    %16 = vsyncpa [#allocation3], 0
    loop: start=0, step=1, limit=4
    $region2: #{model_forward.3} parent=1 // loop_pre_header
      _
    $region3: #{model_forward.3} parent=1 // loop_header
      %s18 = sphi 0, %s22
      %p19 = scmp.ge.s32.totalorder %s18, 4
      %s28 = sphi 0, %s30
      %s31 = sphi 0, %s28
      %s32 = sphi 0, %s31
      %s48 = sphi 0, %s32
      %s52 = sphi 0, %s52
      %s54 = sphi 0, %s52
      %s55 = sphi 0, %s54
      %s69 = sphi 0, %s55
      %s73 = sphi 0, %s73
      %s75 = sphi 0, %s73
      %s76 = sphi 0, %s75
      %s90 = sphi 0, %s76
      %s94 = sphi 0, %s94
      %s96 = sphi 0, %s94
      %s97 = sphi 0, %s96
      %s111 = sphi 0, %s97
      %s115 = sphi 0, %s115
      %s117 = sphi 0, %s115
      %s118 = sphi 0, %s117
      %s132 = sphi 0, %s118
      %s136 = sphi 0, %s136
      %s138 = sphi 0, %s136
      %s139 = sphi 0, %s138
      %s153 = sphi 0, %s139
      %s157 = sphi 0, %s157
      %s159 = sphi 0, %s157
      %s160 = sphi 0, %s159
      %s174 = sphi 0, %s160
      %s178 = sphi 0, %s178
      %s180 = sphi 0, %s178
      %s181 = sphi 0, %s180
      %s195 = sphi 0, %s181
      %s199 = sphi 0, %s199
      %s201 = sphi 0, %s199
      %s202 = sphi 0, %s201
      %s216 = sphi 0, %s202
      %s222 = sphi 0, %s224
      %s225 = sphi 0, %s222
      %s226 = sphi 0, %s225
      %s242 = sphi 0, %s226
      %s248 = sphi 0, %s250
      %s251 = sphi 0, %s248
      %s252 = sphi 0, %s251
      %s268 = sphi 0, %s252
    $region4: #{model_forward.3} parent=1 // loop_header_branch
      %21 = sbr.rel (%p19) target = $region8
    $region5: #{model_forward.3} parent=1 // loop_body
      %s23 = ssub.s32 %s18, 1
      %s24 = ssub.s32 %s18, 2
      %s25 = sadd.s32 %s18, 1
      %s26 = ssub.s32 %s18, %s25
      %p27 = scmp.eq.s32.totalorder %s26, 0
      %s29 = sadd.s32 %s28, 1
      %s30 = scalar_select %p27, %s28, %s29
      %p33 = pneg %p27
      %p34 = scmp.eq.s32.totalorder %s18, 1
      %p35 = por %p33, %p34
      %p36 = scmp.ne.s32.totalorder %s28, %s31
      %p37 = scmp.eq.s32.totalorder %s18, 0
      %p38 = por %p36, %p37
      %p39 = scmp.ne.s32.totalorder %s28, %s31
      %p40 = scmp.eq.s32.totalorder %s23, 1
      %p41 = por %p39, %p40
      %p42 = scmp.ne.s32.totalorder %s31, %s32
      %p43 = scmp.eq.s32.totalorder %s23, 0
      %p44 = por %p42, %p43
      %p45 = scmp.ne.s32.totalorder %s31, %s32
      %p46 = scmp.eq.s32.totalorder %s24, 1
      %p47 = por %p45, %p46
      %p49 = scmp.ne.s32.totalorder %s32, %s48
      %p50 = scmp.eq.s32.totalorder %s24, 0
      %p51 = por %p49, %p50
      %s53 = sadd.s32 %s52, 1
      %p56 = scmp.eq.s32.totalorder %s18, 1
      %p57 = scmp.ne.s32.totalorder %s52, %s54
      %p58 = scmp.eq.s32.totalorder %s18, 0
      %p59 = por %p57, %p58
      %p60 = scmp.ne.s32.totalorder %s52, %s54
      %p61 = scmp.eq.s32.totalorder %s23, 1
      %p62 = por %p60, %p61
      %p63 = scmp.ne.s32.totalorder %s54, %s55
      %p64 = scmp.eq.s32.totalorder %s23, 0
      %p65 = por %p63, %p64
      %p66 = scmp.ne.s32.totalorder %s54, %s55
      %p67 = scmp.eq.s32.totalorder %s24, 1
      %p68 = por %p66, %p67
      %p70 = scmp.ne.s32.totalorder %s55, %s69
      %p71 = scmp.eq.s32.totalorder %s24, 0
      %p72 = por %p70, %p71
      %s74 = sadd.s32 %s73, 1
      %p77 = scmp.eq.s32.totalorder %s18, 1
      %p78 = scmp.ne.s32.totalorder %s73, %s75
      %p79 = scmp.eq.s32.totalorder %s18, 0
      %p80 = por %p78, %p79
      %p81 = scmp.ne.s32.totalorder %s73, %s75
      %p82 = scmp.eq.s32.totalorder %s23, 1
      %p83 = por %p81, %p82
      %p84 = scmp.ne.s32.totalorder %s75, %s76
      %p85 = scmp.eq.s32.totalorder %s23, 0
      %p86 = por %p84, %p85
      %p87 = scmp.ne.s32.totalorder %s75, %s76
      %p88 = scmp.eq.s32.totalorder %s24, 1
      %p89 = por %p87, %p88
      %p91 = scmp.ne.s32.totalorder %s76, %s90
      %p92 = scmp.eq.s32.totalorder %s24, 0
      %p93 = por %p91, %p92
      %s95 = sadd.s32 %s94, 1
      %p98 = scmp.eq.s32.totalorder %s18, 1
      %p99 = scmp.ne.s32.totalorder %s94, %s96
      %p100 = scmp.eq.s32.totalorder %s18, 0
      %p101 = por %p99, %p100
      %p102 = scmp.ne.s32.totalorder %s94, %s96
      %p103 = scmp.eq.s32.totalorder %s23, 1
      %p104 = por %p102, %p103
      %p105 = scmp.ne.s32.totalorder %s96, %s97
      %p106 = scmp.eq.s32.totalorder %s23, 0
      %p107 = por %p105, %p106
      %p108 = scmp.ne.s32.totalorder %s96, %s97
      %p109 = scmp.eq.s32.totalorder %s24, 1
      %p110 = por %p108, %p109
      %p112 = scmp.ne.s32.totalorder %s97, %s111
      %p113 = scmp.eq.s32.totalorder %s24, 0
      %p114 = por %p112, %p113
      %s116 = sadd.s32 %s115, 1
      %p119 = scmp.eq.s32.totalorder %s18, 1
      %p120 = scmp.ne.s32.totalorder %s115, %s117
      %p121 = scmp.eq.s32.totalorder %s18, 0
      %p122 = por %p120, %p121
      %p123 = scmp.ne.s32.totalorder %s115, %s117
      %p124 = scmp.eq.s32.totalorder %s23, 1
      %p125 = por %p123, %p124
      %p126 = scmp.ne.s32.totalorder %s117, %s118
      %p127 = scmp.eq.s32.totalorder %s23, 0
      %p128 = por %p126, %p127
      %p129 = scmp.ne.s32.totalorder %s117, %s118
      %p130 = scmp.eq.s32.totalorder %s24, 1
      %p131 = por %p129, %p130
      %p133 = scmp.ne.s32.totalorder %s118, %s132
      %p134 = scmp.eq.s32.totalorder %s24, 0
      %p135 = por %p133, %p134
      %s137 = sadd.s32 %s136, 1
      %p140 = scmp.eq.s32.totalorder %s18, 1
      %p141 = scmp.ne.s32.totalorder %s136, %s138
      %p142 = scmp.eq.s32.totalorder %s18, 0
      %p143 = por %p141, %p142
      %p144 = scmp.ne.s32.totalorder %s136, %s138
      %p145 = scmp.eq.s32.totalorder %s23, 1
      %p146 = por %p144, %p145
      %p147 = scmp.ne.s32.totalorder %s138, %s139
      %p148 = scmp.eq.s32.totalorder %s23, 0
      %p149 = por %p147, %p148
      %p150 = scmp.ne.s32.totalorder %s138, %s139
      %p151 = scmp.eq.s32.totalorder %s24, 1
      %p152 = por %p150, %p151
      %p154 = scmp.ne.s32.totalorder %s139, %s153
      %p155 = scmp.eq.s32.totalorder %s24, 0
      %p156 = por %p154, %p155
      %s158 = sadd.s32 %s157, 1
      %p161 = scmp.eq.s32.totalorder %s18, 1
      %p162 = scmp.ne.s32.totalorder %s157, %s159
      %p163 = scmp.eq.s32.totalorder %s18, 0
      %p164 = por %p162, %p163
      %p165 = scmp.ne.s32.totalorder %s157, %s159
      %p166 = scmp.eq.s32.totalorder %s23, 1
      %p167 = por %p165, %p166
      %p168 = scmp.ne.s32.totalorder %s159, %s160
      %p169 = scmp.eq.s32.totalorder %s23, 0
      %p170 = por %p168, %p169
      %p171 = scmp.ne.s32.totalorder %s159, %s160
      %p172 = scmp.eq.s32.totalorder %s24, 1
      %p173 = por %p171, %p172
      %p175 = scmp.ne.s32.totalorder %s160, %s174
      %p176 = scmp.eq.s32.totalorder %s24, 0
      %p177 = por %p175, %p176
      %s179 = sadd.s32 %s178, 1
      %p182 = scmp.eq.s32.totalorder %s18, 1
      %p183 = scmp.ne.s32.totalorder %s178, %s180
      %p184 = scmp.eq.s32.totalorder %s18, 0
      %p185 = por %p183, %p184
      %p186 = scmp.ne.s32.totalorder %s178, %s180
      %p187 = scmp.eq.s32.totalorder %s23, 1
      %p188 = por %p186, %p187
      %p189 = scmp.ne.s32.totalorder %s180, %s181
      %p190 = scmp.eq.s32.totalorder %s23, 0
      %p191 = por %p189, %p190
      %p192 = scmp.ne.s32.totalorder %s180, %s181
      %p193 = scmp.eq.s32.totalorder %s24, 1
      %p194 = por %p192, %p193
      %p196 = scmp.ne.s32.totalorder %s181, %s195
      %p197 = scmp.eq.s32.totalorder %s24, 0
      %p198 = por %p196, %p197
      %s200 = sadd.s32 %s199, 1
      %p203 = scmp.eq.s32.totalorder %s18, 1
      %p204 = scmp.ne.s32.totalorder %s199, %s201
      %p205 = scmp.eq.s32.totalorder %s18, 0
      %p206 = por %p204, %p205
      %p207 = scmp.ne.s32.totalorder %s199, %s201
      %p208 = scmp.eq.s32.totalorder %s23, 1
      %p209 = por %p207, %p208
      %p210 = scmp.ne.s32.totalorder %s201, %s202
      %p211 = scmp.eq.s32.totalorder %s23, 0
      %p212 = por %p210, %p211
      %p213 = scmp.ne.s32.totalorder %s201, %s202
      %p214 = scmp.eq.s32.totalorder %s24, 1
      %p215 = por %p213, %p214
      %p217 = scmp.ne.s32.totalorder %s202, %s216
      %p218 = scmp.eq.s32.totalorder %s24, 0
      %p219 = por %p217, %p218
      %s220 = ssub.s32 %s18, %s25
      %p221 = scmp.eq.s32.totalorder %s220, 0
      %s223 = sadd.s32 %s222, 1
      %s224 = scalar_select %p221, %s222, %s223
      %p227 = pneg %p221
      %p228 = scmp.eq.s32.totalorder %s18, 1
      %p229 = por %p227, %p228
      %p230 = scmp.ne.s32.totalorder %s222, %s225
      %p231 = scmp.eq.s32.totalorder %s18, 0
      %p232 = por %p230, %p231
      %p233 = scmp.ne.s32.totalorder %s222, %s225
      %p234 = scmp.eq.s32.totalorder %s23, 1
      %p235 = por %p233, %p234
      %p236 = scmp.ne.s32.totalorder %s225, %s226
      %p237 = scmp.eq.s32.totalorder %s23, 0
      %p238 = por %p236, %p237
      %p239 = scmp.ne.s32.totalorder %s225, %s226
      %p240 = scmp.eq.s32.totalorder %s24, 1
      %p241 = por %p239, %p240
      %p243 = scmp.ne.s32.totalorder %s226, %s242
      %p244 = scmp.eq.s32.totalorder %s24, 0
      %p245 = por %p243, %p244
      %s246 = ssub.s32 %s18, %s25
      %p247 = scmp.eq.s32.totalorder %s246, 0
      %s249 = sadd.s32 %s248, 1
      %s250 = scalar_select %p247, %s248, %s249
      %p253 = pneg %p247
      %p254 = scmp.eq.s32.totalorder %s18, 1
      %p255 = por %p253, %p254
      %p256 = scmp.ne.s32.totalorder %s248, %s251
      %p257 = scmp.eq.s32.totalorder %s18, 0
      %p258 = por %p256, %p257
      %p259 = scmp.ne.s32.totalorder %s248, %s251
      %p260 = scmp.eq.s32.totalorder %s23, 1
      %p261 = por %p259, %p260
      %p262 = scmp.ne.s32.totalorder %s251, %s252
      %p263 = scmp.eq.s32.totalorder %s23, 0
      %p264 = por %p262, %p263
      %p265 = scmp.ne.s32.totalorder %s251, %s252
      %p266 = scmp.eq.s32.totalorder %s24, 1
      %p267 = por %p265, %p266
      %p269 = scmp.ne.s32.totalorder %s252, %s268
      %p270 = scmp.eq.s32.totalorder %s24, 0
      %p271 = por %p269, %p270
      %p272 = scmp.le.s32.totalorder 1, %s18
      %p273 = scmp.lt.s32.totalorder %s18, 3
      %p274 = pnand %p272, %p273
      %p275 = pneg %p274
      // Predicated region
      $region9: #{model_forward.3} parent=5 // pred_check
        _
      $region10: #{model_forward.3} parent=5 // pred_check_branch
        %277 = sbr.rel (%p274) target = $region12
      $region11: #{model_forward.3} parent=5 // pred_region
        %s278 = ssub.s32 %s18, 1
        // Predicated region
        $region13: #{model_forward.3} parent=11 // pred_check
          %p279 = pneg %p65
        $region14: #{model_forward.3} parent=11 // pred_check_branch
          %281 = sbr.rel (%p279) target = $region16
        $region15: #{model_forward.3} parent=11 // pred_region
          _
        $region16: #{model_forward.3} parent=11 // pred_fallthru
          _
        // Predicated region
        $region17: #{model_forward.3} parent=11 // pred_check
          %p282 = pneg %p86
        $region18: #{model_forward.3} parent=11 // pred_check_branch
          %284 = sbr.rel (%p282) target = $region20
        $region19: #{model_forward.3} parent=11 // pred_region
          _
        $region20: #{model_forward.3} parent=11 // pred_fallthru
          _
        // Predicated region
        $region21: #{model_forward.3} parent=11 // pred_check
          %p285 = pneg %p107
        $region22: #{model_forward.3} parent=11 // pred_check_branch
          %287 = sbr.rel (%p285) target = $region24
        $region23: #{model_forward.3} parent=11 // pred_region
          %s289 = ssub.s32 8192, 8192
          %290 = vsyncadd [#allocation3], %s289
          %s291 = sshll.u32 [#allocation2], 4
          %s292 = int_to_ptr.vmem [resolvable:$true] %s291
          %297 = dma.hbm_to_vmem [thread:$0]  %s3, 8192, %s292, [#allocation3], 128, 128, 8
        $region24: #{model_forward.3} parent=11 // pred_fallthru
          _
        // Predicated region
        $region25: #{model_forward.3} parent=11 // pred_check
          %p298 = pneg %p128
        $region26: #{model_forward.3} parent=11 // pred_check_branch
          %300 = sbr.rel (%p298) target = $region28
        $region27: #{model_forward.3} parent=11 // pred_region
          _
        $region28: #{model_forward.3} parent=11 // pred_fallthru
          _
        // Predicated region
        $region29: #{model_forward.3} parent=11 // pred_check
          %p301 = pneg %p149
        $region30: #{model_forward.3} parent=11 // pred_check_branch
          %303 = sbr.rel (%p301) target = $region32
        $region31: #{model_forward.3} parent=11 // pred_region
          _
        $region32: #{model_forward.3} parent=11 // pred_fallthru
          _
        // Predicated region
        $region33: #{model_forward.3} parent=11 // pred_check
          %p304 = pneg %p170
        $region34: #{model_forward.3} parent=11 // pred_check_branch
          %306 = sbr.rel (%p304) target = $region36
        $region35: #{model_forward.3} parent=11 // pred_region
          _
        $region36: #{model_forward.3} parent=11 // pred_fallthru
          _
        // Predicated region
        $region37: #{model_forward.3} parent=11 // pred_check
          %p307 = pneg %p191
        $region38: #{model_forward.3} parent=11 // pred_check_branch
          %309 = sbr.rel (%p307) target = $region40
        $region39: #{model_forward.3} parent=11 // pred_region
          _
        $region40: #{model_forward.3} parent=11 // pred_fallthru
          _
        // Predicated region
        $region41: #{model_forward.3} parent=11 // pred_check
          %p310 = pneg %p212
        $region42: #{model_forward.3} parent=11 // pred_check_branch
          %312 = sbr.rel (%p310) target = $region44
        $region43: #{model_forward.3} parent=11 // pred_region
          _
        $region44: #{model_forward.3} parent=11 // pred_fallthru
          _
      $region12: #{model_forward.3} parent=5 // pred_fallthru
        _
      %p313 = scmp.lt.s32.totalorder %s18, 2
      // Predicated region
      $region45: #{model_forward.3} parent=5 // pred_check
        %p314 = pneg %p313
      $region46: #{model_forward.3} parent=5 // pred_check_branch
        %316 = sbr.rel (%p314) target = $region48
      $region47: #{model_forward.3} parent=5 // pred_region
        // Predicated region
        $region49: #{model_forward.3} parent=47 // pred_check
          %p317 = pneg %p38
        $region50: #{model_forward.3} parent=47 // pred_check_branch
          %319 = sbr.rel (%p317) target = $region52
        $region51: #{model_forward.3} parent=47 // pred_region
          %p320 = scmp.lt.s32.totalorder %s18, 1
          %s321 = scalar_select %p320, %s18, 1
          %s322 = smul.addr %s321, 2
          %s323 = smul.addr %s322, 8
          %s324 = scalar_lea.vmem %s0, %s323
        $region52: #{model_forward.3} parent=47 // pred_fallthru
          _
      $region48: #{model_forward.3} parent=5 // pred_fallthru
        _
      %p325 = scmp.le.s32.totalorder 1, %s18
      %p326 = scmp.lt.s32.totalorder %s18, 3
      %p327 = pnand %p325, %p326
      %p328 = pneg %p327
      // Predicated region
      $region53: #{model_forward.3} parent=5 // pred_check
        _
      $region54: #{model_forward.3} parent=5 // pred_check_branch
        %330 = sbr.rel (%p327) target = $region56
      $region55: #{model_forward.3} parent=5 // pred_region
        %s331 = ssub.s32 %s18, 1
        // Predicated region
        $region57: #{model_forward.3} parent=55 // pred_check
          %p332 = pneg %p107
        $region58: #{model_forward.3} parent=55 // pred_check_branch
          %334 = sbr.rel (%p332) target = $region60
        $region59: #{model_forward.3} parent=55 // pred_region
          %335 = dma.done [#allocation3], 8192
        $region60: #{model_forward.3} parent=55 // pred_fallthru
          _
        %p336 = scmp.lt.s32.totalorder %s23, 1
        %s337 = scalar_select %p336, %s23, 1
        %s338 = smul.addr %s337, 2
        %s339 = smul.addr %s338, 8
        %s340 = scalar_lea.vmem %s0, %s339
        %p341 = pneg %p44
        %p342 = pneg %p41
        %p343 = pneg %p65
        %p344 = pneg %p62
        %p345 = pneg %p86
        %p346 = pneg %p83
        %p347 = pneg %p107
        %p348 = pneg %p104
        %p349 = pneg %p128
        %p350 = pneg %p125
        %p351 = pneg %p149
        %p352 = pneg %p146
        %p353 = pneg %p170
        %p354 = pneg %p167
        %p355 = pneg %p191
        %p356 = pneg %p188
        %p357 = pneg %p212
        %p358 = pneg %p209
        %p359 = pneg %p238
        %p360 = pneg %p235
        %p361 = scmp.lt.s32.totalorder %s23, 1
        %s362 = scalar_select %p361, %s23, 1
        %s363 = smul.addr %s362, 2
        %s364 = smul.addr %s363, 8
        %s365 = scalar_lea.vmem %s9, %s364
        %p366 = pneg %p264
        %p367 = pneg %p261
        %p368 = scmp.lt.s32.totalorder %s23, 1
        %s369 = scalar_select %p368, %s23, 1
        %s370 = smul.addr %s369, 2
        %s371 = smul.addr %s370, 8
        %s372 = scalar_lea.vmem %s10, %s371
        %p373 = scmp.lt.s32.totalorder %s23, 1
        %s374 = scalar_select %p373, %s23, 1
        %s375 = smul.addr %s374, 2
        %s376 = smul.addr %s375, 8
        %s377 = scalar_lea.vmem %s0, %s376
        %p378 = scmp.lt.s32.totalorder %s23, 1
        %s379 = scalar_select %p378, %s23, 1
        %s380 = smul.addr %s379, 2
        %s381 = smul.addr %s380, 8
        %s382 = scalar_lea.vmem %s9, %s381
        %p383 = scmp.lt.s32.totalorder %s23, 1
        %s384 = scalar_select %p383, %s23, 1
        %s385 = smul.addr %s384, 2
        %s386 = smul.addr %s385, 8
        %s387 = scalar_lea.vmem %s10, %s386
        %v388 = vld [vmem:[%s377] sm:$0xff]
        %v389 = vld [vmem:[%s377 + $0x8] sm:$0xff]
        %v390 = vld [vmem:[%s1] sm:$0xff]
        %v391 = vld [vmem:[%s1 + $0x8] sm:$0xff]
        %v392 = vld [vmem:[%s1 + $0x10] sm:$0xff]
        %v393 = vld [vmem:[%s1 + $0x18] sm:$0xff]
        %v394 = vld [vmem:[%s1 + $0x20] sm:$0xff]
        %v395 = vld [vmem:[%s1 + $0x28] sm:$0xff]
        %v396 = vld [vmem:[%s1 + $0x30] sm:$0xff]
        %v397 = vld [vmem:[%s1 + $0x38] sm:$0xff]
        %v398 = vld [vmem:[%s1 + $0x40] sm:$0xff]
        %v399 = vld [vmem:[%s1 + $0x48] sm:$0xff]
        %v400 = vld [vmem:[%s1 + $0x50] sm:$0xff]
        %v401 = vld [vmem:[%s1 + $0x58] sm:$0xff]
        %v402 = vld [vmem:[%s1 + $0x60] sm:$0xff]
        %v403 = vld [vmem:[%s1 + $0x68] sm:$0xff]
        %v404 = vld [vmem:[%s1 + $0x70] sm:$0xff]
        %v405 = vld [vmem:[%s1 + $0x78] sm:$0xff]
        %v406 = vld [vmem:[%s1 + $0x80] sm:$0xff]
        %v407 = vld [vmem:[%s1 + $0x88] sm:$0xff]
        %v408 = vld [vmem:[%s1 + $0x90] sm:$0xff]
        %v409 = vld [vmem:[%s1 + $0x98] sm:$0xff]
        %v410 = vld [vmem:[%s1 + $0xa0] sm:$0xff]
        %v411 = vld [vmem:[%s1 + $0xa8] sm:$0xff]
        %v412 = vld [vmem:[%s1 + $0xb0] sm:$0xff]
        %v413 = vld [vmem:[%s1 + $0xb8] sm:$0xff]
        %v414 = vld [vmem:[%s1 + $0xc0] sm:$0xff]
        %v415 = vld [vmem:[%s1 + $0xc8] sm:$0xff]
        %v416 = vld [vmem:[%s1 + $0xd0] sm:$0xff]
        %v417 = vld [vmem:[%s1 + $0xd8] sm:$0xff]
        %v418 = vld [vmem:[%s1 + $0xe0] sm:$0xff]
        %v419 = vld [vmem:[%s1 + $0xe8] sm:$0xff]
        %v420 = vld [vmem:[%s1 + $0xf0] sm:$0xff]
        %v421 = vld [vmem:[%s1 + $0xf8] sm:$0xff]
        %v422 = vld [vmem:[%s2] sm:$0xf]
        %v424 = vlaneseq
        %v425 = vshrl.u32 %v424, 7
        %v426 = vsub.s32 0, %v425
        %v427 = vrot.slane %v422, %v426
        %v428 = vlaneseq
        %v429 = vshrl.u32 %v428, 7
        %v430 = vsub.s32 1, %v429
        %v431 = vrot.slane %v422, %v430
        %v432 = vlaneseq
        %v433 = vshrl.u32 %v432, 7
        %v434 = vsub.s32 2, %v433
        %v435 = vrot.slane %v422, %v434
        %v436 = vlaneseq
        %v437 = vshrl.u32 %v436, 7
        %v438 = vsub.s32 3, %v437
        %v439 = vrot.slane %v422, %v438
        %vm444 = vcmask 523264
        %v446 = vsel %vm444, %v388, 0
        %v449 = vsel %vm444, %v389, 0
        %451 = vmatprep.subr.mxu0 0.0
        %452 = vmatpush1.msra.mxu0 0.0
        %453 = vmatprep.subr.mxu0 0.0
        %454 = vmatpush1.msra.mxu0 0.0
        %455 = vmatprep.subr.mxu0 0.0
        %456 = vmatpush1.msra.mxu0 0.0
        %457 = vmatprep.subr.mxu0 0.0
        %458 = vmatpush1.msra.mxu0 0.0
        %459 = vmatprep.subr.mxu0 0.0
        %460 = vmatpush1.msra.mxu0 0.0
        %461 = vmatprep.subr.mxu0 0.0
        %462 = vmatpush1.msra.mxu0 0.0
        %463 = vmatprep.subr.mxu0 0.0
        %464 = vmatpush1.msra.mxu0 0.0
        %465 = vmatprep.subr.mxu0 0.0
        %466 = vmatpush1.msra.mxu0 0.0
        %467 = vmatprep.subr.mxu0 %v419
        %468 = vmatpush1.msra.mxu0 %v418
        %469 = vmatprep.subr.mxu0 %v415
        %470 = vmatpush1.msra.mxu0 %v414
        %471 = vmatprep.subr.mxu0 %v411
        %472 = vmatpush1.msra.mxu0 %v410
        %473 = vmatprep.subr.mxu0 %v407
        %474 = vmatpush1.msra.mxu0 %v406
        %475 = vmatprep.subr.mxu0 %v403
        %476 = vmatpush1.msra.mxu0 %v402
        %477 = vmatprep.subr.mxu0 %v399
        %478 = vmatpush1.msra.mxu0 %v398
        %479 = vmatprep.subr.mxu0 %v395
        %480 = vmatpush1.msra.mxu0 %v394
        %481 = vmatprep.subr.mxu0 %v391
        %482 = vmatpush1.msra.mxu0 %v390
        %483 = vmatprep.subr.mxu0 0.0
        %484 = vmatpush2.msra.mxu0 0.0
        %485 = vmatprep.subr.mxu0 0.0
        %486 = vmatpush2.msra.mxu0 0.0
        %487 = vmatprep.subr.mxu0 0.0
        %488 = vmatpush2.msra.mxu0 0.0
        %489 = vmatprep.subr.mxu0 0.0
        %490 = vmatpush2.msra.mxu0 0.0
        %491 = vmatprep.subr.mxu0 0.0
        %492 = vmatpush2.msra.mxu0 0.0
        %493 = vmatprep.subr.mxu0 0.0
        %494 = vmatpush2.msra.mxu0 0.0
        %495 = vmatprep.subr.mxu0 0.0
        %496 = vmatpush2.msra.mxu0 0.0
        %497 = vmatprep.subr.mxu0 0.0
        %498 = vmatpush2.msra.mxu0 0.0
        %499 = vmatprep.subr.mxu0 0.0
        %500 = vmatpush2.msra.mxu0 0.0
        %501 = vmatprep.subr.mxu0 0.0
        %502 = vmatpush2.msra.mxu0 0.0
        %503 = vmatprep.subr.mxu0 0.0
        %504 = vmatpush2.msra.mxu0 0.0
        %505 = vmatprep.subr.mxu0 0.0
        %506 = vmatpush2.msra.mxu0 0.0
        %507 = vmatprep.subr.mxu0 0.0
        %508 = vmatpush2.msra.mxu0 0.0
        %509 = vmatprep.subr.mxu0 0.0
        %510 = vmatpush2.msra.mxu0 0.0
        %511 = vmatprep.subr.mxu0 0.0
        %512 = vmatpush2.msra.mxu0 0.0
        %513 = vmatprep.subr.mxu0 0.0
        %514 = vmatpush2.msra.mxu0 0.0
        %515 = vmatprep.mubr.f32.mxu0 0.0
        %516 = vmatmul.mubr.f32.gmra.mxu0 %v446
        %v517 = vpop.f32.mrf.mxu0
        %v518 = vadd.f32 %v427, %v517
        %v519 = vpop.f32.mrf.mxu0
        %v520 = vadd.f32 %v431, %v519
        %521 = vmatprep.mubr.f32.mxu0 0.0
        %522 = vmatmul.mubr.f32.gmra.mxu0 %v449
        %v523 = vpop.f32.mrf.mxu0
        %v524 = vadd.f32 %v427, %v523
        %v525 = vpop.f32.mrf.mxu0
        %v526 = vadd.f32 %v431, %v525
        %527 = vdwg.mxu0
        %528 = vmatprep.subr.mxu0 0.0
        %529 = vmatpush1.msra.mxu0 0.0
        %530 = vmatprep.subr.mxu0 0.0
        %531 = vmatpush1.msra.mxu0 0.0
        %532 = vmatprep.subr.mxu0 0.0
        %533 = vmatpush1.msra.mxu0 0.0
        %534 = vmatprep.subr.mxu0 0.0
        %535 = vmatpush1.msra.mxu0 0.0
        %536 = vmatprep.subr.mxu0 0.0
        %537 = vmatpush1.msra.mxu0 0.0
        %538 = vmatprep.subr.mxu0 0.0
        %539 = vmatpush1.msra.mxu0 0.0
        %540 = vmatprep.subr.mxu0 0.0
        %541 = vmatpush1.msra.mxu0 0.0
        %542 = vmatprep.subr.mxu0 0.0
        %543 = vmatpush1.msra.mxu0 0.0
        %544 = vmatprep.subr.mxu0 %v421
        %545 = vmatpush1.msra.mxu0 %v420
        %546 = vmatprep.subr.mxu0 %v417
        %547 = vmatpush1.msra.mxu0 %v416
        %548 = vmatprep.subr.mxu0 %v413
        %549 = vmatpush1.msra.mxu0 %v412
        %550 = vmatprep.subr.mxu0 %v409
        %551 = vmatpush1.msra.mxu0 %v408
        %552 = vmatprep.subr.mxu0 %v405
        %553 = vmatpush1.msra.mxu0 %v404
        %554 = vmatprep.subr.mxu0 %v401
        %555 = vmatpush1.msra.mxu0 %v400
        %556 = vmatprep.subr.mxu0 %v397
        %557 = vmatpush1.msra.mxu0 %v396
        %558 = vmatprep.subr.mxu0 %v393
        %559 = vmatpush1.msra.mxu0 %v392
        %560 = vmatprep.subr.mxu0 0.0
        %561 = vmatpush2.msra.mxu0 0.0
        %562 = vmatprep.subr.mxu0 0.0
        %563 = vmatpush2.msra.mxu0 0.0
        %564 = vmatprep.subr.mxu0 0.0
        %565 = vmatpush2.msra.mxu0 0.0
        %566 = vmatprep.subr.mxu0 0.0
        %567 = vmatpush2.msra.mxu0 0.0
        %568 = vmatprep.subr.mxu0 0.0
        %569 = vmatpush2.msra.mxu0 0.0
        %570 = vmatprep.subr.mxu0 0.0
        %571 = vmatpush2.msra.mxu0 0.0
        %572 = vmatprep.subr.mxu0 0.0
        %573 = vmatpush2.msra.mxu0 0.0
        %574 = vmatprep.subr.mxu0 0.0
        %575 = vmatpush2.msra.mxu0 0.0
        %576 = vmatprep.subr.mxu0 0.0
        %577 = vmatpush2.msra.mxu0 0.0
        %578 = vmatprep.subr.mxu0 0.0
        %579 = vmatpush2.msra.mxu0 0.0
        %580 = vmatprep.subr.mxu0 0.0
        %581 = vmatpush2.msra.mxu0 0.0
        %582 = vmatprep.subr.mxu0 0.0
        %583 = vmatpush2.msra.mxu0 0.0
        %584 = vmatprep.subr.mxu0 0.0
        %585 = vmatpush2.msra.mxu0 0.0
        %586 = vmatprep.subr.mxu0 0.0
        %587 = vmatpush2.msra.mxu0 0.0
        %588 = vmatprep.subr.mxu0 0.0
        %589 = vmatpush2.msra.mxu0 0.0
        %590 = vmatprep.subr.mxu0 0.0
        %591 = vmatpush2.msra.mxu0 0.0
        %592 = vmatprep.mubr.f32.mxu0 0.0
        %593 = vmatmul.mubr.f32.gmra.mxu0 %v446
        %v594 = vpop.f32.mrf.mxu0
        %v595 = vadd.f32 %v435, %v594
        %v596 = vpop.f32.mrf.mxu0
        %v597 = vadd.f32 %v439, %v596
        %598 = vmatprep.mubr.f32.mxu0 0.0
        %599 = vmatmul.mubr.f32.gmra.mxu0 %v449
        %v600 = vpop.f32.mrf.mxu0
        %v601 = vadd.f32 %v435, %v600
        %v602 = vpop.f32.mrf.mxu0
        %v603 = vadd.f32 %v439, %v602
        %604 = vdwg.mxu0
        %v605 = vmax.f32 %v518, 0.0
        %v606 = vmax.f32 %v520, 0.0
        %v607 = vmax.f32 %v595, 0.0
        %v608 = vmax.f32 %v597, 0.0
        %v609 = vmax.f32 %v524, 0.0
        %v610 = vmax.f32 %v526, 0.0
        %v611 = vmax.f32 %v601, 0.0
        %v612 = vmax.f32 %v603, 0.0
        %v613 = vld [vmem:[#allocation2] sm:$0xff]
        %v614 = vld [vmem:[#allocation2 + $0x8] sm:$0xff]
        %v615 = vld [vmem:[#allocation2 + $0x10] sm:$0xff]
        %v616 = vld [vmem:[#allocation2 + $0x18] sm:$0xff]
        %v617 = vld [vmem:[#allocation2 + $0x20] sm:$0xff]
        %v618 = vld [vmem:[#allocation2 + $0x28] sm:$0xff]
        %v619 = vld [vmem:[#allocation2 + $0x30] sm:$0xff]
        %v620 = vld [vmem:[#allocation2 + $0x38] sm:$0xff]
        %v621 = vld [vmem:[#allocation2 + $0x40] sm:$0xff]
        %v622 = vld [vmem:[#allocation2 + $0x48] sm:$0xff]
        %v623 = vld [vmem:[#allocation2 + $0x50] sm:$0xff]
        %v624 = vld [vmem:[#allocation2 + $0x58] sm:$0xff]
        %v625 = vld [vmem:[#allocation2 + $0x60] sm:$0xff]
        %v626 = vld [vmem:[#allocation2 + $0x68] sm:$0xff]
        %v627 = vld [vmem:[#allocation2 + $0x70] sm:$0xff]
        %v628 = vld [vmem:[#allocation2 + $0x78] sm:$0xff]
        %v629 = vld [vmem:[#allocation2 + $0x80] sm:$0xff]
        %v630 = vld [vmem:[#allocation2 + $0x88] sm:$0xff]
        %v631 = vld [vmem:[#allocation2 + $0x90] sm:$0xff]
        %v632 = vld [vmem:[#allocation2 + $0x98] sm:$0xff]
        %v633 = vld [vmem:[#allocation2 + $0xa0] sm:$0xff]
        %v634 = vld [vmem:[#allocation2 + $0xa8] sm:$0xff]
        %v635 = vld [vmem:[#allocation2 + $0xb0] sm:$0xff]
        %v636 = vld [vmem:[#allocation2 + $0xb8] sm:$0xff]
        %v637 = vld [vmem:[#allocation2 + $0xc0] sm:$0xff]
        %v638 = vld [vmem:[#allocation2 + $0xc8] sm:$0xff]
        %v639 = vld [vmem:[#allocation2 + $0xd0] sm:$0xff]
        %v640 = vld [vmem:[#allocation2 + $0xd8] sm:$0xff]
        %v641 = vld [vmem:[#allocation2 + $0xe0] sm:$0xff]
        %v642 = vld [vmem:[#allocation2 + $0xe8] sm:$0xff]
        %v643 = vld [vmem:[#allocation2 + $0xf0] sm:$0xff]
        %v644 = vld [vmem:[#allocation2 + $0xf8] sm:$0xff]
        %v645 = vld [vmem:[#allocation2 + $0x100] sm:$0xff]
        %v646 = vld [vmem:[#allocation2 + $0x108] sm:$0xff]
        %v647 = vld [vmem:[#allocation2 + $0x110] sm:$0xff]
        %v648 = vld [vmem:[#allocation2 + $0x118] sm:$0xff]
        %v649 = vld [vmem:[#allocation2 + $0x120] sm:$0xff]
        %v650 = vld [vmem:[#allocation2 + $0x128] sm:$0xff]
        %v651 = vld [vmem:[#allocation2 + $0x130] sm:$0xff]
        %v652 = vld [vmem:[#allocation2 + $0x138] sm:$0xff]
        %v653 = vld [vmem:[#allocation2 + $0x140] sm:$0xff]
        %v654 = vld [vmem:[#allocation2 + $0x148] sm:$0xff]
        %v655 = vld [vmem:[#allocation2 + $0x150] sm:$0xff]
        %v656 = vld [vmem:[#allocation2 + $0x158] sm:$0xff]
        %v657 = vld [vmem:[#allocation2 + $0x160] sm:$0xff]
        %v658 = vld [vmem:[#allocation2 + $0x168] sm:$0xff]
        %v659 = vld [vmem:[#allocation2 + $0x170] sm:$0xff]
        %v660 = vld [vmem:[#allocation2 + $0x178] sm:$0xff]
        %v661 = vld [vmem:[#allocation2 + $0x180] sm:$0xff]
        %v662 = vld [vmem:[#allocation2 + $0x188] sm:$0xff]
        %v663 = vld [vmem:[#allocation2 + $0x190] sm:$0xff]
        %v664 = vld [vmem:[#allocation2 + $0x198] sm:$0xff]
        %v665 = vld [vmem:[#allocation2 + $0x1a0] sm:$0xff]
        %v666 = vld [vmem:[#allocation2 + $0x1a8] sm:$0xff]
        %v667 = vld [vmem:[#allocation2 + $0x1b0] sm:$0xff]
        %v668 = vld [vmem:[#allocation2 + $0x1b8] sm:$0xff]
        %v669 = vld [vmem:[#allocation2 + $0x1c0] sm:$0xff]
        %v670 = vld [vmem:[#allocation2 + $0x1c8] sm:$0xff]
        %v671 = vld [vmem:[#allocation2 + $0x1d0] sm:$0xff]
        %v672 = vld [vmem:[#allocation2 + $0x1d8] sm:$0xff]
        %v673 = vld [vmem:[#allocation2 + $0x1e0] sm:$0xff]
        %v674 = vld [vmem:[#allocation2 + $0x1e8] sm:$0xff]
        %v675 = vld [vmem:[#allocation2 + $0x1f0] sm:$0xff]
        %v676 = vld [vmem:[#allocation2 + $0x1f8] sm:$0xff]
        %v677 = vld [vmem:[%s4] sm:$0x1]
        %v679 = vlaneseq
        %v680 = vshrl.u32 %v679, 7
        %v681 = vsub.s32 0, %v680
        %v682 = vrot.slane %v677, %v681
        %684 = vmatprep.subr.mxu0 0.0
        %685 = vmatpush1.msra.mxu0 %v628
        %686 = vmatprep.subr.mxu0 0.0
        %687 = vmatpush1.msra.mxu0 %v627
        %688 = vmatprep.subr.mxu0 0.0
        %689 = vmatpush1.msra.mxu0 %v626
        %690 = vmatprep.subr.mxu0 0.0
        %691 = vmatpush1.msra.mxu0 %v625
        %692 = vmatprep.subr.mxu0 0.0
        %693 = vmatpush1.msra.mxu0 %v624
        %694 = vmatprep.subr.mxu0 0.0
        %695 = vmatpush1.msra.mxu0 %v623
        %696 = vmatprep.subr.mxu0 0.0
        %697 = vmatpush1.msra.mxu0 %v622
        %698 = vmatprep.subr.mxu0 0.0
        %699 = vmatpush1.msra.mxu0 %v621
        %700 = vmatprep.subr.mxu0 0.0
        %701 = vmatpush1.msra.mxu0 %v620
        %702 = vmatprep.subr.mxu0 0.0
        %703 = vmatpush1.msra.mxu0 %v619
        %704 = vmatprep.subr.mxu0 0.0
        %705 = vmatpush1.msra.mxu0 %v618
        %706 = vmatprep.subr.mxu0 0.0
        %707 = vmatpush1.msra.mxu0 %v617
        %708 = vmatprep.subr.mxu0 0.0
        %709 = vmatpush1.msra.mxu0 %v616
        %710 = vmatprep.subr.mxu0 0.0
        %711 = vmatpush1.msra.mxu0 %v615
        %712 = vmatprep.subr.mxu0 0.0
        %713 = vmatpush1.msra.mxu0 %v614
        %714 = vmatprep.subr.mxu0 0.0
        %715 = vmatpush1.msra.mxu0 %v613
        %716 = vmatprep.subr.mxu0 0.0
        %717 = vmatpush2.msra.mxu0 %v644
        %718 = vmatprep.subr.mxu0 0.0
        %719 = vmatpush2.msra.mxu0 %v643
        %720 = vmatprep.subr.mxu0 0.0
        %721 = vmatpush2.msra.mxu0 %v642
        %722 = vmatprep.subr.mxu0 0.0
        %723 = vmatpush2.msra.mxu0 %v641
        %724 = vmatprep.subr.mxu0 0.0
        %725 = vmatpush2.msra.mxu0 %v640
        %726 = vmatprep.subr.mxu0 0.0
        %727 = vmatpush2.msra.mxu0 %v639
        %728 = vmatprep.subr.mxu0 0.0
        %729 = vmatpush2.msra.mxu0 %v638
        %730 = vmatprep.subr.mxu0 0.0
        %731 = vmatpush2.msra.mxu0 %v637
        %732 = vmatprep.subr.mxu0 0.0
        %733 = vmatpush2.msra.mxu0 %v636
        %734 = vmatprep.subr.mxu0 0.0
        %735 = vmatpush2.msra.mxu0 %v635
        %736 = vmatprep.subr.mxu0 0.0
        %737 = vmatpush2.msra.mxu0 %v634
        %738 = vmatprep.subr.mxu0 0.0
        %739 = vmatpush2.msra.mxu0 %v633
        %740 = vmatprep.subr.mxu0 0.0
        %741 = vmatpush2.msra.mxu0 %v632
        %742 = vmatprep.subr.mxu0 0.0
        %743 = vmatpush2.msra.mxu0 %v631
        %744 = vmatprep.subr.mxu0 0.0
        %745 = vmatpush2.msra.mxu0 %v630
        %746 = vmatprep.subr.mxu0 0.0
        %747 = vmatpush2.msra.mxu0 %v629
        %748 = vmatprep.mubr.f32.mxu0 %v606
        %749 = vmatmul.mubr.f32.gmra.mxu0 %v605
        %v750 = vpop.f32.mrf.mxu0
        %v751 = vadd.f32 %v682, %v750
        %v752 = vpop.f32.mrf.mxu0
        %753 = vmatprep.mubr.f32.mxu0 %v610
        %754 = vmatmul.mubr.f32.gmra.mxu0 %v609
        %v755 = vpop.f32.mrf.mxu0
        %v756 = vadd.f32 %v682, %v755
        %v757 = vpop.f32.mrf.mxu0
        %758 = vdwg.mxu0
        %759 = vmatprep.subr.mxu0 0.0
        %760 = vmatpush1.msra.mxu0 %v660
        %761 = vmatprep.subr.mxu0 0.0
        %762 = vmatpush1.msra.mxu0 %v659
        %763 = vmatprep.subr.mxu0 0.0
        %764 = vmatpush1.msra.mxu0 %v658
        %765 = vmatprep.subr.mxu0 0.0
        %766 = vmatpush1.msra.mxu0 %v657
        %767 = vmatprep.subr.mxu0 0.0
        %768 = vmatpush1.msra.mxu0 %v656
        %769 = vmatprep.subr.mxu0 0.0
        %770 = vmatpush1.msra.mxu0 %v655
        %771 = vmatprep.subr.mxu0 0.0
        %772 = vmatpush1.msra.mxu0 %v654
        %773 = vmatprep.subr.mxu0 0.0
        %774 = vmatpush1.msra.mxu0 %v653
        %775 = vmatprep.subr.mxu0 0.0
        %776 = vmatpush1.msra.mxu0 %v652
        %777 = vmatprep.subr.mxu0 0.0
        %778 = vmatpush1.msra.mxu0 %v651
        %779 = vmatprep.subr.mxu0 0.0
        %780 = vmatpush1.msra.mxu0 %v650
        %781 = vmatprep.subr.mxu0 0.0
        %782 = vmatpush1.msra.mxu0 %v649
        %783 = vmatprep.subr.mxu0 0.0
        %784 = vmatpush1.msra.mxu0 %v648
        %785 = vmatprep.subr.mxu0 0.0
        %786 = vmatpush1.msra.mxu0 %v647
        %787 = vmatprep.subr.mxu0 0.0
        %788 = vmatpush1.msra.mxu0 %v646
        %789 = vmatprep.subr.mxu0 0.0
        %790 = vmatpush1.msra.mxu0 %v645
        %791 = vmatprep.subr.mxu0 0.0
        %792 = vmatpush2.msra.mxu0 %v676
        %793 = vmatprep.subr.mxu0 0.0
        %794 = vmatpush2.msra.mxu0 %v675
        %795 = vmatprep.subr.mxu0 0.0
        %796 = vmatpush2.msra.mxu0 %v674
        %797 = vmatprep.subr.mxu0 0.0
        %798 = vmatpush2.msra.mxu0 %v673
        %799 = vmatprep.subr.mxu0 0.0
        %800 = vmatpush2.msra.mxu0 %v672
        %801 = vmatprep.subr.mxu0 0.0
        %802 = vmatpush2.msra.mxu0 %v671
        %803 = vmatprep.subr.mxu0 0.0
        %804 = vmatpush2.msra.mxu0 %v670
        %805 = vmatprep.subr.mxu0 0.0
        %806 = vmatpush2.msra.mxu0 %v669
        %807 = vmatprep.subr.mxu0 0.0
        %808 = vmatpush2.msra.mxu0 %v668
        %809 = vmatprep.subr.mxu0 0.0
        %810 = vmatpush2.msra.mxu0 %v667
        %811 = vmatprep.subr.mxu0 0.0
        %812 = vmatpush2.msra.mxu0 %v666
        %813 = vmatprep.subr.mxu0 0.0
        %814 = vmatpush2.msra.mxu0 %v665
        %815 = vmatprep.subr.mxu0 0.0
        %816 = vmatpush2.msra.mxu0 %v664
        %817 = vmatprep.subr.mxu0 0.0
        %818 = vmatpush2.msra.mxu0 %v663
        %819 = vmatprep.subr.mxu0 0.0
        %820 = vmatpush2.msra.mxu0 %v662
        %821 = vmatprep.subr.mxu0 0.0
        %822 = vmatpush2.msra.mxu0 %v661
        %823 = vmatprep.mubr.f32.mxu0 %v608
        %824 = vmatmul.mubr.f32.gmra.mxu0 %v607
        %v825 = vpop.f32.mrf.mxu0
        %v826 = vadd.f32 %v751, %v825
        %v827 = vpop.f32.mrf.mxu0
        %828 = vmatprep.mubr.f32.mxu0 %v612
        %829 = vmatmul.mubr.f32.gmra.mxu0 %v611
        %v830 = vpop.f32.mrf.mxu0
        %v831 = vadd.f32 %v756, %v830
        %v832 = vpop.f32.mrf.mxu0
        %833 = vdwg.mxu0
        %v834 = vmax.f32 %v826, 0.0
        %v835 = vmax.f32 %v831, 0.0
        %836 = vst [vmem:[%s382] sm:$0xff] %v834
        %837 = vst [vmem:[%s382 + $0x8] sm:$0xff] %v835
        %v838 = vld [vmem:[%s5] sm:$0xff]
        %v839 = vld [vmem:[%s5 + $0x8] sm:$0xff]
        %v840 = vld [vmem:[%s5 + $0x10] sm:$0xff]
        %v841 = vld [vmem:[%s5 + $0x18] sm:$0xff]
        %v842 = vld [vmem:[%s5 + $0x20] sm:$0xff]
        %v843 = vld [vmem:[%s5 + $0x28] sm:$0xff]
        %v844 = vld [vmem:[%s5 + $0x30] sm:$0xff]
        %v845 = vld [vmem:[%s5 + $0x38] sm:$0xff]
        %v846 = vld [vmem:[%s5 + $0x40] sm:$0xff]
        %v847 = vld [vmem:[%s5 + $0x48] sm:$0xff]
        %v848 = vld [vmem:[%s5 + $0x50] sm:$0xff]
        %v849 = vld [vmem:[%s5 + $0x58] sm:$0xff]
        %v850 = vld [vmem:[%s5 + $0x60] sm:$0xff]
        %v851 = vld [vmem:[%s5 + $0x68] sm:$0xff]
        %v852 = vld [vmem:[%s5 + $0x70] sm:$0xff]
        %v853 = vld [vmem:[%s5 + $0x78] sm:$0xff]
        %v854 = vld [vmem:[%s6] sm:$0x1]
        %v856 = vlaneseq
        %v857 = vshrl.u32 %v856, 7
        %v858 = vsub.s32 0, %v857
        %v859 = vrot.slane %v854, %v858
        %861 = vmatprep.subr.mxu0 0.0
        %862 = vmatpush1.msra.mxu0 %v853
        %863 = vmatprep.subr.mxu0 0.0
        %864 = vmatpush1.msra.mxu0 %v852
        %865 = vmatprep.subr.mxu0 0.0
        %866 = vmatpush1.msra.mxu0 %v851
        %867 = vmatprep.subr.mxu0 0.0
        %868 = vmatpush1.msra.mxu0 %v850
        %869 = vmatprep.subr.mxu0 0.0
        %870 = vmatpush1.msra.mxu0 %v849
        %871 = vmatprep.subr.mxu0 0.0
        %872 = vmatpush1.msra.mxu0 %v848
        %873 = vmatprep.subr.mxu0 0.0
        %874 = vmatpush1.msra.mxu0 %v847
        %875 = vmatprep.subr.mxu0 0.0
        %876 = vmatpush1.msra.mxu0 %v846
        %877 = vmatprep.subr.mxu0 0.0
        %878 = vmatpush1.msra.mxu0 %v845
        %879 = vmatprep.subr.mxu0 0.0
        %880 = vmatpush1.msra.mxu0 %v844
        %881 = vmatprep.subr.mxu0 0.0
        %882 = vmatpush1.msra.mxu0 %v843
        %883 = vmatprep.subr.mxu0 0.0
        %884 = vmatpush1.msra.mxu0 %v842
        %885 = vmatprep.subr.mxu0 0.0
        %886 = vmatpush1.msra.mxu0 %v841
        %887 = vmatprep.subr.mxu0 0.0
        %888 = vmatpush1.msra.mxu0 %v840
        %889 = vmatprep.subr.mxu0 0.0
        %890 = vmatpush1.msra.mxu0 %v839
        %891 = vmatprep.subr.mxu0 0.0
        %892 = vmatpush1.msra.mxu0 %v838
        %893 = vmatprep.subr.mxu0 0.0
        %894 = vmatpush2.msra.mxu0 0.0
        %895 = vmatprep.subr.mxu0 0.0
        %896 = vmatpush2.msra.mxu0 0.0
        %897 = vmatprep.subr.mxu0 0.0
        %898 = vmatpush2.msra.mxu0 0.0
        %899 = vmatprep.subr.mxu0 0.0
        %900 = vmatpush2.msra.mxu0 0.0
        %901 = vmatprep.subr.mxu0 0.0
        %902 = vmatpush2.msra.mxu0 0.0
        %903 = vmatprep.subr.mxu0 0.0
        %904 = vmatpush2.msra.mxu0 0.0
        %905 = vmatprep.subr.mxu0 0.0
        %906 = vmatpush2.msra.mxu0 0.0
        %907 = vmatprep.subr.mxu0 0.0
        %908 = vmatpush2.msra.mxu0 0.0
        %909 = vmatprep.subr.mxu0 0.0
        %910 = vmatpush2.msra.mxu0 0.0
        %911 = vmatprep.subr.mxu0 0.0
        %912 = vmatpush2.msra.mxu0 0.0
        %913 = vmatprep.subr.mxu0 0.0
        %914 = vmatpush2.msra.mxu0 0.0
        %915 = vmatprep.subr.mxu0 0.0
        %916 = vmatpush2.msra.mxu0 0.0
        %917 = vmatprep.subr.mxu0 0.0
        %918 = vmatpush2.msra.mxu0 0.0
        %919 = vmatprep.subr.mxu0 0.0
        %920 = vmatpush2.msra.mxu0 0.0
        %921 = vmatprep.subr.mxu0 0.0
        %922 = vmatpush2.msra.mxu0 0.0
        %923 = vmatprep.subr.mxu0 0.0
        %924 = vmatpush2.msra.mxu0 0.0
        %925 = vmatprep.mubr.f32.mxu0 0.0
        %926 = vmatmul.mubr.f32.gmra.mxu0 %v834
        %v927 = vpop.f32.mrf.mxu0
        %v928 = vadd.f32 %v859, %v927
        %v929 = vpop.f32.mrf.mxu0
        %930 = vmatprep.mubr.f32.mxu0 0.0
        %931 = vmatmul.mubr.f32.gmra.mxu0 %v835
        %v932 = vpop.f32.mrf.mxu0
        %v933 = vadd.f32 %v859, %v932
        %v934 = vpop.f32.mrf.mxu0
        %935 = vdwg.mxu0
        %v936 = vmax.f32 %v928, 0.0
        %v937 = vmax.f32 %v933, 0.0
        %v938 = vld [vmem:[%s7] sm:$0xff]
        %v939 = vld [vmem:[%s7 + $0x8] sm:$0xff]
        %v940 = vld [vmem:[%s7 + $0x10] sm:$0xff]
        %v941 = vld [vmem:[%s7 + $0x18] sm:$0xff]
        %v942 = vld [vmem:[%s7 + $0x20] sm:$0xff]
        %v943 = vld [vmem:[%s7 + $0x28] sm:$0xff]
        %v944 = vld [vmem:[%s7 + $0x30] sm:$0xff]
        %v945 = vld [vmem:[%s7 + $0x38] sm:$0xff]
        %v946 = vld [vmem:[%s8] sm:$0x1]
        %v948 = vlaneseq
        %v949 = vshrl.u32 %v948, 7
        %v950 = vsub.s32 0, %v949
        %v951 = vrot.slane %v946, %v950
        %v954 = vsel %vm444, %v936, 0
        %v957 = vsel %vm444, %v937, 0
        %959 = vmatprep.subr.mxu0 0.0
        %960 = vmatpush1.msra.mxu0 0.0
        %961 = vmatprep.subr.mxu0 0.0
        %962 = vmatpush1.msra.mxu0 0.0
        %963 = vmatprep.subr.mxu0 0.0
        %964 = vmatpush1.msra.mxu0 0.0
        %965 = vmatprep.subr.mxu0 0.0
        %966 = vmatpush1.msra.mxu0 0.0
        %967 = vmatprep.subr.mxu0 0.0
        %968 = vmatpush1.msra.mxu0 0.0
        %969 = vmatprep.subr.mxu0 0.0
        %970 = vmatpush1.msra.mxu0 0.0
        %971 = vmatprep.subr.mxu0 0.0
        %972 = vmatpush1.msra.mxu0 0.0
        %973 = vmatprep.subr.mxu0 0.0
        %974 = vmatpush1.msra.mxu0 0.0
        %975 = vmatprep.subr.mxu0 0.0
        %976 = vmatpush1.msra.mxu0 %v945
        %977 = vmatprep.subr.mxu0 0.0
        %978 = vmatpush1.msra.mxu0 %v944
        %979 = vmatprep.subr.mxu0 0.0
        %980 = vmatpush1.msra.mxu0 %v943
        %981 = vmatprep.subr.mxu0 0.0
        %982 = vmatpush1.msra.mxu0 %v942
        %983 = vmatprep.subr.mxu0 0.0
        %984 = vmatpush1.msra.mxu0 %v941
        %985 = vmatprep.subr.mxu0 0.0
        %986 = vmatpush1.msra.mxu0 %v940
        %987 = vmatprep.subr.mxu0 0.0
        %988 = vmatpush1.msra.mxu0 %v939
        %989 = vmatprep.subr.mxu0 0.0
        %990 = vmatpush1.msra.mxu0 %v938
        %991 = vmatprep.subr.mxu0 0.0
        %992 = vmatpush2.msra.mxu0 0.0
        %993 = vmatprep.subr.mxu0 0.0
        %994 = vmatpush2.msra.mxu0 0.0
        %995 = vmatprep.subr.mxu0 0.0
        %996 = vmatpush2.msra.mxu0 0.0
        %997 = vmatprep.subr.mxu0 0.0
        %998 = vmatpush2.msra.mxu0 0.0
        %999 = vmatprep.subr.mxu0 0.0
        %1000 = vmatpush2.msra.mxu0 0.0
        %1001 = vmatprep.subr.mxu0 0.0
        %1002 = vmatpush2.msra.mxu0 0.0
        %1003 = vmatprep.subr.mxu0 0.0
        %1004 = vmatpush2.msra.mxu0 0.0
        %1005 = vmatprep.subr.mxu0 0.0
        %1006 = vmatpush2.msra.mxu0 0.0
        %1007 = vmatprep.subr.mxu0 0.0
        %1008 = vmatpush2.msra.mxu0 0.0
        %1009 = vmatprep.subr.mxu0 0.0
        %1010 = vmatpush2.msra.mxu0 0.0
        %1011 = vmatprep.subr.mxu0 0.0
        %1012 = vmatpush2.msra.mxu0 0.0
        %1013 = vmatprep.subr.mxu0 0.0
        %1014 = vmatpush2.msra.mxu0 0.0
        %1015 = vmatprep.subr.mxu0 0.0
        %1016 = vmatpush2.msra.mxu0 0.0
        %1017 = vmatprep.subr.mxu0 0.0
        %1018 = vmatpush2.msra.mxu0 0.0
        %1019 = vmatprep.subr.mxu0 0.0
        %1020 = vmatpush2.msra.mxu0 0.0
        %1021 = vmatprep.subr.mxu0 0.0
        %1022 = vmatpush2.msra.mxu0 0.0
        %1023 = vmatprep.mubr.f32.mxu0 0.0
        %1024 = vmatmul.mubr.f32.gmra.mxu0 %v954
        %v1025 = vpop.f32.mrf.mxu0
        %v1026 = vadd.f32 %v951, %v1025
        %v1027 = vpop.f32.mrf.mxu0
        %1028 = vmatprep.mubr.f32.mxu0 0.0
        %1029 = vmatmul.mubr.f32.gmra.mxu0 %v957
        %v1030 = vpop.f32.mrf.mxu0
        %v1031 = vadd.f32 %v951, %v1030
        %v1032 = vpop.f32.mrf.mxu0
        %1033 = vdwg.mxu0
        %v1034 = vmax.f32 %v1026, 0.0
        %v1035 = vmax.f32 %v1031, 0.0
        %vm1036 = vcmask 261120
        %1037 = vst.msk [vmem:[%s387] sm:$0xff] %vm1036, %v1034
        %1038 = vst.msk [vmem:[%s387 + $0x8] sm:$0xff] %vm1036, %v1035
        %p1039 = scmp.lt.s32.totalorder %s23, 1
        %s1040 = scalar_select %p1039, %s23, 1
        %s1041 = smul.addr %s1040, 2
        %s1042 = smul.addr %s1041, 8
        %s1043 = scalar_lea.vmem %s9, %s1042
        %p1044 = scmp.lt.s32.totalorder %s23, 1
        %s1045 = scalar_select %p1044, %s23, 1
        %s1046 = smul.addr %s1045, 2
        %s1047 = smul.addr %s1046, 8
        %s1048 = scalar_lea.vmem %s10, %s1047
        // Predicated region
        $region61: #{model_forward.3} parent=55 // pred_check
          %p1049 = pneg %p235
        $region62: #{model_forward.3} parent=55 // pred_check_branch
          %1051 = sbr.rel (%p1049) target = $region64
        $region63: #{model_forward.3} parent=55 // pred_region
          _
        $region64: #{model_forward.3} parent=55 // pred_fallthru
          _
        // Predicated region
        $region65: #{model_forward.3} parent=55 // pred_check
          %p1052 = pneg %p261
        $region66: #{model_forward.3} parent=55 // pred_check_branch
          %1054 = sbr.rel (%p1052) target = $region68
        $region67: #{model_forward.3} parent=55 // pred_region
          _
        $region68: #{model_forward.3} parent=55 // pred_fallthru
          _
      $region56: #{model_forward.3} parent=5 // pred_fallthru
        _
      %p1055 = scmp.le.s32.totalorder 2, %s18
      // Predicated region
      $region69: #{model_forward.3} parent=5 // pred_check
        %p1056 = pneg %p1055
      $region70: #{model_forward.3} parent=5 // pred_check_branch
        %1058 = sbr.rel (%p1056) target = $region72
      $region71: #{model_forward.3} parent=5 // pred_region
        %s1059 = ssub.s32 %s18, 2
        // Predicated region
        $region73: #{model_forward.3} parent=71 // pred_check
          %p1060 = pneg %p241
        $region74: #{model_forward.3} parent=71 // pred_check_branch
          %1062 = sbr.rel (%p1060) target = $region76
        $region75: #{model_forward.3} parent=71 // pred_region
          %p1063 = scmp.lt.s32.totalorder %s24, 1
          %s1064 = scalar_select %p1063, %s24, 1
          %s1065 = smul.addr %s1064, 2
          %s1066 = smul.addr %s1065, 8
          %s1067 = scalar_lea.vmem %s9, %s1066
        $region76: #{model_forward.3} parent=71 // pred_fallthru
          _
        // Predicated region
        $region77: #{model_forward.3} parent=71 // pred_check
          %p1068 = pneg %p267
        $region78: #{model_forward.3} parent=71 // pred_check_branch
          %1070 = sbr.rel (%p1068) target = $region80
        $region79: #{model_forward.3} parent=71 // pred_region
          %p1071 = scmp.lt.s32.totalorder %s24, 1
          %s1072 = scalar_select %p1071, %s24, 1
          %s1073 = smul.addr %s1072, 2
          %s1074 = smul.addr %s1073, 8
          %s1075 = scalar_lea.vmem %s10, %s1074
        $region80: #{model_forward.3} parent=71 // pred_fallthru
          _
      $region72: #{model_forward.3} parent=5 // pred_fallthru
        _
    $region6: #{model_forward.3} parent=1 // loop_footer
      %s22 = sadd.s32 1, %s18
    $region7: #{model_forward.3} parent=1 // loop_footer_branch
      %17 = sbr.rel target = $region3
    $region8: #{model_forward.3} parent=1 // loop_exit
      _
    %1076 = vsyncpa [#allocation3], 1
    %s1077 = scalar_lea.sflag [#allocation3], 1
    %1078 = vsyncpa %s1077, 1

// kernel: model_forward.5
$region0: #{model_forward.5}
  #allocation0 [shape = 'u32[]', space=smem, size = 0x4, offset = 0x4, fixed_abs, tag = 'smem constant byte address 0x4 - core index']
  #allocation1 [shape = 'u32[144,128]{1,0:T(1,128)}', space=vmem, size = 0x12000, scoped, tag = 'internal scratch']
  #allocation2 [shape = 'f32[1,1]{1,0:T(1,128)S(1)}', space=vmem, size = 0x200, scoped, tag = 'scoped memory for model_forward.5']
  %s0 = inlined_call_operand.vmem [shape: f32[2,16,64], index: 0, kind: input, shape index: {}]
  %s1 = inlined_call_operand.vmem [shape: f32[2,16,128], index: 1, kind: input, shape index: {}]
  %s2 = inlined_call_operand.vmem [shape: f32[2,16,1], index: 2, kind: input, shape index: {}]
  %s3 = inlined_call_operand.vmem [shape: f32[2,1,16], index: 3, kind: input, shape index: {}]
  %s4 = inlined_call_operand.vmem [shape: f32[128,192], index: 4, kind: input, shape index: {}]
  %s5 = inlined_call_operand.vmem [shape: f32[96,96], index: 5, kind: input, shape index: {}]
  %s6 = inlined_call_operand.vmem [shape: f32[96,1], index: 6, kind: input, shape index: {}]
  %s7 = inlined_call_operand.<no memory space> [shape: f32[1,1], index: 7, kind: input, shape index: {}]
  %s8 = inlined_call_operand.vmem [shape: f32[2,16,1], index: 8, kind: output, shape index: {}]
  %s9 = sld [smem:[#allocation0]]
  $region65: #{model_forward.5} parent=0
    _
  %s11 = ssub.s32 1, %s9
  %s12 = scalar_select 0, %s11, %s9
  %v13 = vstv %s7
  %14 = vst [vmem:[#allocation2] sm:$0x1] %v13
  loop: start=0, step=1, limit=4
  $region2: #{model_forward.5} parent=0 // loop_pre_header
    _
  $region3: #{model_forward.5} parent=0 // loop_header
    %s16 = sphi 0, %s20
    %p17 = scmp.ge.s32.totalorder %s16, 4
    %s26 = sphi 0, %s28
    %s29 = sphi 0, %s26
    %s30 = sphi 0, %s29
    %s46 = sphi 0, %s30
    %s52 = sphi 0, %s54
    %s55 = sphi 0, %s52
    %s56 = sphi 0, %s55
    %s72 = sphi 0, %s56
    %s78 = sphi 0, %s80
    %s81 = sphi 0, %s78
    %s82 = sphi 0, %s81
    %s98 = sphi 0, %s82
    %s104 = sphi 0, %s106
    %s107 = sphi 0, %s104
    %s108 = sphi 0, %s107
    %s124 = sphi 0, %s108
    %s128 = sphi 0, %s128
    %s130 = sphi 0, %s128
    %s131 = sphi 0, %s130
    %s145 = sphi 0, %s131
    %s149 = sphi 0, %s149
    %s151 = sphi 0, %s149
    %s152 = sphi 0, %s151
    %s166 = sphi 0, %s152
    %s170 = sphi 0, %s170
    %s172 = sphi 0, %s170
    %s173 = sphi 0, %s172
    %s187 = sphi 0, %s173
    %s191 = sphi 0, %s191
    %s193 = sphi 0, %s191
    %s194 = sphi 0, %s193
    %s208 = sphi 0, %s194
    %s214 = sphi 0, %s216
    %s217 = sphi 0, %s214
    %s218 = sphi 0, %s217
    %s234 = sphi 0, %s218
  $region4: #{model_forward.5} parent=0 // loop_header_branch
    %19 = sbr.rel (%p17) target = $region8
  $region5: #{model_forward.5} parent=0 // loop_body
    %s21 = ssub.s32 %s16, 1
    %s22 = ssub.s32 %s16, 2
    %s23 = sadd.s32 %s16, 1
    %s24 = ssub.s32 %s16, %s23
    %p25 = scmp.eq.s32.totalorder %s24, 0
    %s27 = sadd.s32 %s26, 1
    %s28 = scalar_select %p25, %s26, %s27
    %p31 = pneg %p25
    %p32 = scmp.eq.s32.totalorder %s16, 1
    %p33 = por %p31, %p32
    %p34 = scmp.ne.s32.totalorder %s26, %s29
    %p35 = scmp.eq.s32.totalorder %s16, 0
    %p36 = por %p34, %p35
    %p37 = scmp.ne.s32.totalorder %s26, %s29
    %p38 = scmp.eq.s32.totalorder %s21, 1
    %p39 = por %p37, %p38
    %p40 = scmp.ne.s32.totalorder %s29, %s30
    %p41 = scmp.eq.s32.totalorder %s21, 0
    %p42 = por %p40, %p41
    %p43 = scmp.ne.s32.totalorder %s29, %s30
    %p44 = scmp.eq.s32.totalorder %s22, 1
    %p45 = por %p43, %p44
    %p47 = scmp.ne.s32.totalorder %s30, %s46
    %p48 = scmp.eq.s32.totalorder %s22, 0
    %p49 = por %p47, %p48
    %s50 = ssub.s32 %s16, %s23
    %p51 = scmp.eq.s32.totalorder %s50, 0
    %s53 = sadd.s32 %s52, 1
    %s54 = scalar_select %p51, %s52, %s53
    %p57 = pneg %p51
    %p58 = scmp.eq.s32.totalorder %s16, 1
    %p59 = por %p57, %p58
    %p60 = scmp.ne.s32.totalorder %s52, %s55
    %p61 = scmp.eq.s32.totalorder %s16, 0
    %p62 = por %p60, %p61
    %p63 = scmp.ne.s32.totalorder %s52, %s55
    %p64 = scmp.eq.s32.totalorder %s21, 1
    %p65 = por %p63, %p64
    %p66 = scmp.ne.s32.totalorder %s55, %s56
    %p67 = scmp.eq.s32.totalorder %s21, 0
    %p68 = por %p66, %p67
    %p69 = scmp.ne.s32.totalorder %s55, %s56
    %p70 = scmp.eq.s32.totalorder %s22, 1
    %p71 = por %p69, %p70
    %p73 = scmp.ne.s32.totalorder %s56, %s72
    %p74 = scmp.eq.s32.totalorder %s22, 0
    %p75 = por %p73, %p74
    %s76 = ssub.s32 %s16, %s23
    %p77 = scmp.eq.s32.totalorder %s76, 0
    %s79 = sadd.s32 %s78, 1
    %s80 = scalar_select %p77, %s78, %s79
    %p83 = pneg %p77
    %p84 = scmp.eq.s32.totalorder %s16, 1
    %p85 = por %p83, %p84
    %p86 = scmp.ne.s32.totalorder %s78, %s81
    %p87 = scmp.eq.s32.totalorder %s16, 0
    %p88 = por %p86, %p87
    %p89 = scmp.ne.s32.totalorder %s78, %s81
    %p90 = scmp.eq.s32.totalorder %s21, 1
    %p91 = por %p89, %p90
    %p92 = scmp.ne.s32.totalorder %s81, %s82
    %p93 = scmp.eq.s32.totalorder %s21, 0
    %p94 = por %p92, %p93
    %p95 = scmp.ne.s32.totalorder %s81, %s82
    %p96 = scmp.eq.s32.totalorder %s22, 1
    %p97 = por %p95, %p96
    %p99 = scmp.ne.s32.totalorder %s82, %s98
    %p100 = scmp.eq.s32.totalorder %s22, 0
    %p101 = por %p99, %p100
    %s102 = ssub.s32 %s16, %s23
    %p103 = scmp.eq.s32.totalorder %s102, 0
    %s105 = sadd.s32 %s104, 1
    %s106 = scalar_select %p103, %s104, %s105
    %p109 = pneg %p103
    %p110 = scmp.eq.s32.totalorder %s16, 1
    %p111 = por %p109, %p110
    %p112 = scmp.ne.s32.totalorder %s104, %s107
    %p113 = scmp.eq.s32.totalorder %s16, 0
    %p114 = por %p112, %p113
    %p115 = scmp.ne.s32.totalorder %s104, %s107
    %p116 = scmp.eq.s32.totalorder %s21, 1
    %p117 = por %p115, %p116
    %p118 = scmp.ne.s32.totalorder %s107, %s108
    %p119 = scmp.eq.s32.totalorder %s21, 0
    %p120 = por %p118, %p119
    %p121 = scmp.ne.s32.totalorder %s107, %s108
    %p122 = scmp.eq.s32.totalorder %s22, 1
    %p123 = por %p121, %p122
    %p125 = scmp.ne.s32.totalorder %s108, %s124
    %p126 = scmp.eq.s32.totalorder %s22, 0
    %p127 = por %p125, %p126
    %s129 = sadd.s32 %s128, 1
    %p132 = scmp.eq.s32.totalorder %s16, 1
    %p133 = scmp.ne.s32.totalorder %s128, %s130
    %p134 = scmp.eq.s32.totalorder %s16, 0
    %p135 = por %p133, %p134
    %p136 = scmp.ne.s32.totalorder %s128, %s130
    %p137 = scmp.eq.s32.totalorder %s21, 1
    %p138 = por %p136, %p137
    %p139 = scmp.ne.s32.totalorder %s130, %s131
    %p140 = scmp.eq.s32.totalorder %s21, 0
    %p141 = por %p139, %p140
    %p142 = scmp.ne.s32.totalorder %s130, %s131
    %p143 = scmp.eq.s32.totalorder %s22, 1
    %p144 = por %p142, %p143
    %p146 = scmp.ne.s32.totalorder %s131, %s145
    %p147 = scmp.eq.s32.totalorder %s22, 0
    %p148 = por %p146, %p147
    %s150 = sadd.s32 %s149, 1
    %p153 = scmp.eq.s32.totalorder %s16, 1
    %p154 = scmp.ne.s32.totalorder %s149, %s151
    %p155 = scmp.eq.s32.totalorder %s16, 0
    %p156 = por %p154, %p155
    %p157 = scmp.ne.s32.totalorder %s149, %s151
    %p158 = scmp.eq.s32.totalorder %s21, 1
    %p159 = por %p157, %p158
    %p160 = scmp.ne.s32.totalorder %s151, %s152
    %p161 = scmp.eq.s32.totalorder %s21, 0
    %p162 = por %p160, %p161
    %p163 = scmp.ne.s32.totalorder %s151, %s152
    %p164 = scmp.eq.s32.totalorder %s22, 1
    %p165 = por %p163, %p164
    %p167 = scmp.ne.s32.totalorder %s152, %s166
    %p168 = scmp.eq.s32.totalorder %s22, 0
    %p169 = por %p167, %p168
    %s171 = sadd.s32 %s170, 1
    %p174 = scmp.eq.s32.totalorder %s16, 1
    %p175 = scmp.ne.s32.totalorder %s170, %s172
    %p176 = scmp.eq.s32.totalorder %s16, 0
    %p177 = por %p175, %p176
    %p178 = scmp.ne.s32.totalorder %s170, %s172
    %p179 = scmp.eq.s32.totalorder %s21, 1
    %p180 = por %p178, %p179
    %p181 = scmp.ne.s32.totalorder %s172, %s173
    %p182 = scmp.eq.s32.totalorder %s21, 0
    %p183 = por %p181, %p182
    %p184 = scmp.ne.s32.totalorder %s172, %s173
    %p185 = scmp.eq.s32.totalorder %s22, 1
    %p186 = por %p184, %p185
    %p188 = scmp.ne.s32.totalorder %s173, %s187
    %p189 = scmp.eq.s32.totalorder %s22, 0
    %p190 = por %p188, %p189
    %s192 = sadd.s32 %s191, 1
    %p195 = scmp.eq.s32.totalorder %s16, 1
    %p196 = scmp.ne.s32.totalorder %s191, %s193
    %p197 = scmp.eq.s32.totalorder %s16, 0
    %p198 = por %p196, %p197
    %p199 = scmp.ne.s32.totalorder %s191, %s193
    %p200 = scmp.eq.s32.totalorder %s21, 1
    %p201 = por %p199, %p200
    %p202 = scmp.ne.s32.totalorder %s193, %s194
    %p203 = scmp.eq.s32.totalorder %s21, 0
    %p204 = por %p202, %p203
    %p205 = scmp.ne.s32.totalorder %s193, %s194
    %p206 = scmp.eq.s32.totalorder %s22, 1
    %p207 = por %p205, %p206
    %p209 = scmp.ne.s32.totalorder %s194, %s208
    %p210 = scmp.eq.s32.totalorder %s22, 0
    %p211 = por %p209, %p210
    %s212 = ssub.s32 %s16, %s23
    %p213 = scmp.eq.s32.totalorder %s212, 0
    %s215 = sadd.s32 %s214, 1
    %s216 = scalar_select %p213, %s214, %s215
    %p219 = pneg %p213
    %p220 = scmp.eq.s32.totalorder %s16, 1
    %p221 = por %p219, %p220
    %p222 = scmp.ne.s32.totalorder %s214, %s217
    %p223 = scmp.eq.s32.totalorder %s16, 0
    %p224 = por %p222, %p223
    %p225 = scmp.ne.s32.totalorder %s214, %s217
    %p226 = scmp.eq.s32.totalorder %s21, 1
    %p227 = por %p225, %p226
    %p228 = scmp.ne.s32.totalorder %s217, %s218
    %p229 = scmp.eq.s32.totalorder %s21, 0
    %p230 = por %p228, %p229
    %p231 = scmp.ne.s32.totalorder %s217, %s218
    %p232 = scmp.eq.s32.totalorder %s22, 1
    %p233 = por %p231, %p232
    %p235 = scmp.ne.s32.totalorder %s218, %s234
    %p236 = scmp.eq.s32.totalorder %s22, 0
    %p237 = por %p235, %p236
    %p238 = scmp.le.s32.totalorder 1, %s16
    %p239 = scmp.lt.s32.totalorder %s16, 3
    %p240 = pnand %p238, %p239
    %p241 = pneg %p240
    // Predicated region
    $region9: #{model_forward.5} parent=5 // pred_check
      _
    $region10: #{model_forward.5} parent=5 // pred_check_branch
      %243 = sbr.rel (%p240) target = $region12
    $region11: #{model_forward.5} parent=5 // pred_region
      %s244 = ssub.s32 %s16, 1
      // Predicated region
      $region13: #{model_forward.5} parent=11 // pred_check
        %p245 = pneg %p141
      $region14: #{model_forward.5} parent=11 // pred_check_branch
        %247 = sbr.rel (%p245) target = $region16
      $region15: #{model_forward.5} parent=11 // pred_region
        _
      $region16: #{model_forward.5} parent=11 // pred_fallthru
        _
      // Predicated region
      $region17: #{model_forward.5} parent=11 // pred_check
        %p248 = pneg %p162
      $region18: #{model_forward.5} parent=11 // pred_check_branch
        %250 = sbr.rel (%p248) target = $region20
      $region19: #{model_forward.5} parent=11 // pred_region
        _
      $region20: #{model_forward.5} parent=11 // pred_fallthru
        _
      // Predicated region
      $region21: #{model_forward.5} parent=11 // pred_check
        %p251 = pneg %p183
      $region22: #{model_forward.5} parent=11 // pred_check_branch
        %253 = sbr.rel (%p251) target = $region24
      $region23: #{model_forward.5} parent=11 // pred_region
        _
      $region24: #{model_forward.5} parent=11 // pred_fallthru
        _
      // Predicated region
      $region25: #{model_forward.5} parent=11 // pred_check
        %p254 = pneg %p204
      $region26: #{model_forward.5} parent=11 // pred_check_branch
        %256 = sbr.rel (%p254) target = $region28
      $region27: #{model_forward.5} parent=11 // pred_region
        _
      $region28: #{model_forward.5} parent=11 // pred_fallthru
        _
    $region12: #{model_forward.5} parent=5 // pred_fallthru
      _
    %p257 = scmp.lt.s32.totalorder %s16, 2
    // Predicated region
    $region29: #{model_forward.5} parent=5 // pred_check
      %p258 = pneg %p257
    $region30: #{model_forward.5} parent=5 // pred_check_branch
      %260 = sbr.rel (%p258) target = $region32
    $region31: #{model_forward.5} parent=5 // pred_region
      // Predicated region
      $region33: #{model_forward.5} parent=31 // pred_check
        %p261 = pneg %p36
      $region34: #{model_forward.5} parent=31 // pred_check_branch
        %263 = sbr.rel (%p261) target = $region36
      $region35: #{model_forward.5} parent=31 // pred_region
        %p264 = scmp.lt.s32.totalorder %s16, 1
        %s265 = scalar_select %p264, %s16, 1
        %s266 = smul.addr %s265, 2
        %s267 = smul.addr %s266, 8
        %s268 = scalar_lea.vmem %s0, %s267
      $region36: #{model_forward.5} parent=31 // pred_fallthru
        _
      // Predicated region
      $region37: #{model_forward.5} parent=31 // pred_check
        %p269 = pneg %p62
      $region38: #{model_forward.5} parent=31 // pred_check_branch
        %271 = sbr.rel (%p269) target = $region40
      $region39: #{model_forward.5} parent=31 // pred_region
        %p272 = scmp.lt.s32.totalorder %s16, 1
        %s273 = scalar_select %p272, %s16, 1
        %s274 = smul.addr %s273, 2
        %s275 = smul.addr %s274, 8
        %s276 = scalar_lea.vmem %s1, %s275
      $region40: #{model_forward.5} parent=31 // pred_fallthru
        _
      // Predicated region
      $region41: #{model_forward.5} parent=31 // pred_check
        %p277 = pneg %p88
      $region42: #{model_forward.5} parent=31 // pred_check_branch
        %279 = sbr.rel (%p277) target = $region44
      $region43: #{model_forward.5} parent=31 // pred_region
        %p280 = scmp.lt.s32.totalorder %s16, 1
        %s281 = scalar_select %p280, %s16, 1
        %s282 = smul.addr %s281, 2
        %s283 = smul.addr %s282, 8
        %s284 = scalar_lea.vmem %s2, %s283
      $region44: #{model_forward.5} parent=31 // pred_fallthru
        _
      // Predicated region
      $region45: #{model_forward.5} parent=31 // pred_check
        %p285 = pneg %p114
      $region46: #{model_forward.5} parent=31 // pred_check_branch
        %287 = sbr.rel (%p285) target = $region48
      $region47: #{model_forward.5} parent=31 // pred_region
        %p288 = scmp.lt.s32.totalorder %s16, 1
        %s289 = scalar_select %p288, %s16, 1
        %s290 = scalar_lea.vmem %s3, %s289
      $region48: #{model_forward.5} parent=31 // pred_fallthru
        _
    $region32: #{model_forward.5} parent=5 // pred_fallthru
      _
    %p291 = scmp.le.s32.totalorder 1, %s16
    %p292 = scmp.lt.s32.totalorder %s16, 3
    %p293 = pnand %p291, %p292
    %p294 = pneg %p293
    // Predicated region
    $region49: #{model_forward.5} parent=5 // pred_check
      _
    $region50: #{model_forward.5} parent=5 // pred_check_branch
      %296 = sbr.rel (%p293) target = $region52
    $region51: #{model_forward.5} parent=5 // pred_region
      %s297 = ssub.s32 %s16, 1
      %p298 = scmp.lt.s32.totalorder %s21, 1
      %s299 = scalar_select %p298, %s21, 1
      %s300 = smul.addr %s299, 2
      %s301 = smul.addr %s300, 8
      %s302 = scalar_lea.vmem %s0, %s301
      %p303 = pneg %p42
      %p304 = pneg %p39
      %p305 = scmp.lt.s32.totalorder %s21, 1
      %s306 = scalar_select %p305, %s21, 1
      %s307 = smul.addr %s306, 2
      %s308 = smul.addr %s307, 8
      %s309 = scalar_lea.vmem %s1, %s308
      %p310 = pneg %p68
      %p311 = pneg %p65
      %p312 = scmp.lt.s32.totalorder %s21, 1
      %s313 = scalar_select %p312, %s21, 1
      %s314 = smul.addr %s313, 2
      %s315 = smul.addr %s314, 8
      %s316 = scalar_lea.vmem %s2, %s315
      %p317 = pneg %p94
      %p318 = pneg %p91
      %p319 = scmp.lt.s32.totalorder %s21, 1
      %s320 = scalar_select %p319, %s21, 1
      %s321 = scalar_lea.vmem %s3, %s320
      %p322 = pneg %p120
      %p323 = pneg %p117
      %p324 = pneg %p141
      %p325 = pneg %p138
      %p326 = pneg %p162
      %p327 = pneg %p159
      %p328 = pneg %p183
      %p329 = pneg %p180
      %p330 = pneg %p204
      %p331 = pneg %p201
      %p332 = pneg %p230
      %p333 = pneg %p227
      %p334 = scmp.lt.s32.totalorder %s21, 1
      %s335 = scalar_select %p334, %s21, 1
      %s336 = smul.addr %s335, 2
      %s337 = smul.addr %s336, 8
      %s338 = scalar_lea.vmem %s8, %s337
      %p339 = scmp.lt.s32.totalorder %s21, 1
      %s340 = scalar_select %p339, %s21, 1
      %s341 = smul.addr %s340, 2
      %s342 = smul.addr %s341, 8
      %s343 = scalar_lea.vmem %s0, %s342
      %p344 = scmp.lt.s32.totalorder %s21, 1
      %s345 = scalar_select %p344, %s21, 1
      %s346 = smul.addr %s345, 2
      %s347 = smul.addr %s346, 8
      %s348 = scalar_lea.vmem %s1, %s347
      %p349 = scmp.lt.s32.totalorder %s21, 1
      %s350 = scalar_select %p349, %s21, 1
      %s351 = smul.addr %s350, 2
      %s352 = smul.addr %s351, 8
      %s353 = scalar_lea.vmem %s2, %s352
      %p354 = scmp.lt.s32.totalorder %s21, 1
      %s355 = scalar_select %p354, %s21, 1
      %s356 = scalar_lea.vmem %s3, %s355
      %p357 = scmp.lt.s32.totalorder %s21, 1
      %s358 = scalar_select %p357, %s21, 1
      %s359 = smul.addr %s358, 2
      %s360 = smul.addr %s359, 8
      %s361 = scalar_lea.vmem %s8, %s360
      %v362 = vld [vmem:[%s343] sm:$0xff]
      %v363 = vld [vmem:[%s343 + $0x8] sm:$0xff]
      %v364 = vld [vmem:[%s348] sm:$0xff]
      %v365 = vld [vmem:[%s348 + $0x8] sm:$0xff]
      %v366 = vld [vmem:[%s353] sm:$0xff]
      %v367 = vld [vmem:[%s353 + $0x8] sm:$0xff]
      %v368 = vld [vmem:[%s356] sm:$0x1]
      %v369 = vmul.f32 %v362, %v362
      %v370 = vmul.f32 %v363, %v363
      %vm371 = vcmask 523264
      %v372 = vsel %vm371, %v369, 0.0
      %373 = vadd.xlane.f32.xlu0 %v372
      %v374 = vpop.xlane.xlu0 %373
      %v375 = vsel %vm371, %v370, 0.0
      %376 = vadd.xlane.f32.xlu0 %v375
      %v377 = vpop.xlane.xlu0 %376
      %v378 = vadd.f32 %v374, 1e-20
      %v379 = vadd.f32 %v377, 1e-20
      %v380 = vrsqrt.pop %v378
      %v381 = vrsqrt.pop %v379
      %v382 = vmul.f32 %v362, %v380
      %v383 = vmul.f32 %v363, %v381
      %v385 = vsel %vm371, %v382, 0
      %v388 = vsel %vm371, %v383, 0
      %390 = vmatprep.subr.mxu0 0.0
      %391 = vmatpush1.xpose.msra.mxu0 0.0
      %392 = vmatprep.subr.mxu0 0.0
      %393 = vmatpush1.xpose.msra.mxu0 0.0
      %394 = vmatprep.subr.mxu0 0.0
      %395 = vmatpush1.xpose.msra.mxu0 0.0
      %396 = vmatprep.subr.mxu0 0.0
      %397 = vmatpush1.xpose.msra.mxu0 0.0
      %398 = vmatprep.subr.mxu0 0.0
      %399 = vmatpush1.xpose.msra.mxu0 0.0
      %400 = vmatprep.subr.mxu0 0.0
      %401 = vmatpush1.xpose.msra.mxu0 0.0
      %402 = vmatprep.subr.mxu0 0.0
      %403 = vmatpush1.xpose.msra.mxu0 0.0
      %404 = vmatprep.subr.mxu0 0.0
      %405 = vmatpush1.xpose.msra.mxu0 0.0
      %406 = vmatprep.subr.mxu0 0.0
      %407 = vmatpush1.xpose.msra.mxu0 0.0
      %408 = vmatprep.subr.mxu0 0.0
      %409 = vmatpush1.xpose.msra.mxu0 0.0
      %410 = vmatprep.subr.mxu0 0.0
      %411 = vmatpush1.xpose.msra.mxu0 0.0
      %412 = vmatprep.subr.mxu0 0.0
      %413 = vmatpush1.xpose.msra.mxu0 0.0
      %414 = vmatprep.subr.mxu0 0.0
      %415 = vmatpush1.xpose.msra.mxu0 0.0
      %416 = vmatprep.subr.mxu0 0.0
      %417 = vmatpush1.xpose.msra.mxu0 0.0
      %418 = vmatprep.subr.mxu0 0.0
      %419 = vmatpush1.xpose.msra.mxu0 %v388
      %420 = vmatprep.subr.mxu0 0.0
      %421 = vmatpush1.xpose.msra.mxu0 %v385
      %422 = vmatprep.subr.mxu0 0.0
      %423 = vmatpush2.xpose.msra.mxu0 0.0
      %424 = vmatprep.subr.mxu0 0.0
      %425 = vmatpush2.xpose.msra.mxu0 0.0
      %426 = vmatprep.subr.mxu0 0.0
      %427 = vmatpush2.xpose.msra.mxu0 0.0
      %428 = vmatprep.subr.mxu0 0.0
      %429 = vmatpush2.xpose.msra.mxu0 0.0
      %430 = vmatprep.subr.mxu0 0.0
      %431 = vmatpush2.xpose.msra.mxu0 0.0
      %432 = vmatprep.subr.mxu0 0.0
      %433 = vmatpush2.xpose.msra.mxu0 0.0
      %434 = vmatprep.subr.mxu0 0.0
      %435 = vmatpush2.xpose.msra.mxu0 0.0
      %436 = vmatprep.subr.mxu0 0.0
      %437 = vmatpush2.xpose.msra.mxu0 0.0
      %438 = vmatprep.subr.mxu0 0.0
      %439 = vmatpush2.xpose.msra.mxu0 0.0
      %440 = vmatprep.subr.mxu0 0.0
      %441 = vmatpush2.xpose.msra.mxu0 0.0
      %442 = vmatprep.subr.mxu0 0.0
      %443 = vmatpush2.xpose.msra.mxu0 0.0
      %444 = vmatprep.subr.mxu0 0.0
      %445 = vmatpush2.xpose.msra.mxu0 0.0
      %446 = vmatprep.subr.mxu0 0.0
      %447 = vmatpush2.xpose.msra.mxu0 0.0
      %448 = vmatprep.subr.mxu0 0.0
      %449 = vmatpush2.xpose.msra.mxu0 0.0
      %450 = vmatprep.subr.mxu0 0.0
      %451 = vmatpush2.xpose.msra.mxu0 0.0
      %452 = vmatprep.subr.mxu0 0.0
      %453 = vmatpush2.xpose.msra.mxu0 0.0
      %454 = vmatprep.mubr.f32.mxu0 0.0
      %455 = vmatmul.mubr.f32.gmra.mxu0 %v385
      %v456 = vpop.f32.mrf.mxu0
      %v457 = vadd.f32 0.0, %v456
      %v458 = vpop.f32.mrf.mxu0
      %459 = vmatprep.mubr.f32.mxu0 0.0
      %460 = vmatmul.mubr.f32.gmra.mxu0 %v388
      %v461 = vpop.f32.mrf.mxu0
      %v462 = vadd.f32 0.0, %v461
      %v463 = vpop.f32.mrf.mxu0
      %464 = vdwg.mxu0
      %vm465 = vcmp.gt.f32.partialorder %v457, 0.7
      %vm466 = vcmp.gt.f32.partialorder %v462, 0.7
      %v467 = vsel %vm465, %v457, 0.0
      %v468 = vsel %vm466, %v462, 0.0
      %vm469 = vcmask 130048
      %v470 = vsel %vm469, %v467, -inf
      %471 = vmax.xlane.f32.xlu0 %v470
      %v472 = vpop.xlane.xlu0 %471
      %v473 = vsel %vm469, %v468, -inf
      %474 = vmax.xlane.f32.xlu0 %v473
      %v475 = vpop.xlane.xlu0 %474
      %v476 = vsub.f32 %v467, %v472
      %v477 = vsub.f32 %v468, %v475
      %v478 = vmul.f32 %v476, 1.442695
      %v479 = vpow.pop %v478
      %v480 = vmul.f32 %v477, 1.442695
      %v481 = vpow.pop %v480
      %v482 = vsel %vm469, %v479, 0.0
      %483 = vadd.xlane.f32.xlu0 %v482
      %v484 = vpop.xlane.xlu0 %483
      %v485 = vsel %vm469, %v481, 0.0
      %486 = vadd.xlane.f32.xlu0 %v485
      %v487 = vpop.xlane.xlu0 %486
      %v488 = vrcp.pop %v484
      %v489 = vrcp.pop %v487
      %v490 = vmul.f32 %v479, %v488
      %v491 = vmul.f32 %v481, %v489
      %v492 = vlaneseq
      %v493 = vshrl.u32 %v492, 7
      %v494 = vadd.s32 %v493, 8
      %v495 = vlaneseq
      %v496 = vand.u32 %v495, 127
      %v497 = vsub.s32 %v493, %v496
      %v498 = vsub.s32 %v494, %v496
      %vm499 = vcmp.lt.s32.totalorder %v497, 0
      %v500 = vsub.s32 0, %v497
      %v501 = vsel %vm499, %v500, %v497
      %vm502 = vcmp.lt.s32.totalorder %v498, 0
      %v503 = vsub.s32 0, %v498
      %v504 = vsel %vm502, %v503, %v498
      %v505 = vcvt.s32.f32 %v501
      %v506 = vcvt.s32.f32 %v504
      %v507 = vsub.f32 0.0, %v505
      %v508 = vsub.f32 0.0, %v506
      %v509 = vmul.f32 %v507, 0.36787945
      %v510 = vmul.f32 %v508, 0.36787945
      %v511 = vmul.f32 %v509, 1.442695
      %v512 = vpow.pop %v511
      %v513 = vmul.f32 %v510, 1.442695
      %v514 = vpow.pop %v513
      %v515 = vsub.f32 0.0, %v366
      %v516 = vsub.f32 0.0, %v367
      %v517 = vmul.f32 %v515, 1.442695
      %v518 = vpow.pop %v517
      %v519 = vmul.f32 %v516, 1.442695
      %v520 = vpow.pop %v519
      %v521 = vadd.f32 %v518, 1.0
      %v522 = vadd.f32 %v520, 1.0
      %v523 = vrcp.pop %v521
      %v524 = vmul.f32 1.0, %v523
      %v525 = vrcp.pop %v522
      %v526 = vmul.f32 1.0, %v525
      %v527 = vsub.f32 0.0, %v368
      %v528 = vmul.f32 %v527, 1.442695
      %v529 = vpow.pop %v528
      %v530 = vadd.f32 %v529, 1.0
      %v531 = vrcp.pop %v530
      %v532 = vmul.f32 1.0, %v531
      %534 = vset.pattern.permute.xlu0 0
      %535 = vperm.xlu0 %534, %v524
      %v536 = vpop.permute.xlu0 %535
      %539 = vset.pattern.permute.xlu0 0
      %540 = vperm.xlu0 %539, %v526
      %v541 = vpop.permute.xlu0 %540
      %v544 = vlaneseq
      %v545 = vshrl.u32 %v544, 7
      %v546 = vsub.s32 0, %v545
      %v547 = vrot.slane %v532, %v546
      %v549 = vsub.f32 %v536, %v547
      %v550 = vsub.f32 %v541, %v547
      %v551 = vand.u32 2147483647, %v549
      %v552 = vand.u32 2147483647, %v550
      %v553 = vsub.f32 1.0, %v551
      %v554 = vsub.f32 1.0, %v552
      %v555 = vsub.f32 %v553, 0.5
      %v556 = vsub.f32 %v554, 0.5
      %v557 = vsub.f32 0.0, %v555
      %v558 = vsub.f32 0.0, %v556
      %v559 = vmul.f32 %v557, 10.0
      %v560 = vmul.f32 %v558, 10.0
      %v561 = vmul.f32 %v559, 1.442695
      %v562 = vpow.pop %v561
      %v563 = vmul.f32 %v560, 1.442695
      %v564 = vpow.pop %v563
      %v565 = vadd.f32 %v562, 1.0
      %v566 = vadd.f32 %v564, 1.0
      %v567 = vrcp.pop %v565
      %v568 = vmul.f32 1.0, %v567
      %v569 = vrcp.pop %v566
      %v570 = vmul.f32 1.0, %v569
      %v571 = vsel %vm469, %v568, -inf
      %572 = vmax.xlane.f32.xlu0 %v571
      %v573 = vpop.xlane.xlu0 %572
      %v574 = vsel %vm469, %v570, -inf
      %575 = vmax.xlane.f32.xlu0 %v574
      %v576 = vpop.xlane.xlu0 %575
      %v577 = vsub.f32 %v568, %v573
      %v578 = vsub.f32 %v570, %v576
      %v579 = vmul.f32 %v577, 1.442695
      %v580 = vpow.pop %v579
      %v581 = vmul.f32 %v578, 1.442695
      %v582 = vpow.pop %v581
      %v583 = vsel %vm469, %v580, 0.0
      %584 = vadd.xlane.f32.xlu0 %v583
      %v585 = vpop.xlane.xlu0 %584
      %v586 = vsel %vm469, %v582, 0.0
      %587 = vadd.xlane.f32.xlu0 %v586
      %v588 = vpop.xlane.xlu0 %587
      %v589 = vrcp.pop %v585
      %v590 = vrcp.pop %v588
      %v591 = vmul.f32 %v580, %v589
      %v592 = vmul.f32 %v582, %v590
      %v593 = vld [vmem:[%s4] sm:$0xff]
      %v594 = vld [vmem:[%s4 + $0x8] sm:$0xff]
      %v595 = vld [vmem:[%s4 + $0x10] sm:$0xff]
      %v596 = vld [vmem:[%s4 + $0x18] sm:$0xff]
      %v597 = vld [vmem:[%s4 + $0x20] sm:$0xff]
      %v598 = vld [vmem:[%s4 + $0x28] sm:$0xff]
      %v599 = vld [vmem:[%s4 + $0x30] sm:$0xff]
      %v600 = vld [vmem:[%s4 + $0x38] sm:$0xff]
      %v601 = vld [vmem:[%s4 + $0x40] sm:$0xff]
      %v602 = vld [vmem:[%s4 + $0x48] sm:$0xff]
      %v603 = vld [vmem:[%s4 + $0x50] sm:$0xff]
      %v604 = vld [vmem:[%s4 + $0x58] sm:$0xff]
      %v605 = vld [vmem:[%s4 + $0x60] sm:$0xff]
      %v606 = vld [vmem:[%s4 + $0x68] sm:$0xff]
      %v607 = vld [vmem:[%s4 + $0x70] sm:$0xff]
      %v608 = vld [vmem:[%s4 + $0x78] sm:$0xff]
      %v609 = vld [vmem:[%s4 + $0x80] sm:$0xff]
      %v610 = vld [vmem:[%s4 + $0x88] sm:$0xff]
      %v611 = vld [vmem:[%s4 + $0x90] sm:$0xff]
      %v612 = vld [vmem:[%s4 + $0x98] sm:$0xff]
      %v613 = vld [vmem:[%s4 + $0xa0] sm:$0xff]
      %v614 = vld [vmem:[%s4 + $0xa8] sm:$0xff]
      %v615 = vld [vmem:[%s4 + $0xb0] sm:$0xff]
      %v616 = vld [vmem:[%s4 + $0xb8] sm:$0xff]
      %v617 = vld [vmem:[%s4 + $0xc0] sm:$0xff]
      %v618 = vld [vmem:[%s4 + $0xc8] sm:$0xff]
      %v619 = vld [vmem:[%s4 + $0xd0] sm:$0xff]
      %v620 = vld [vmem:[%s4 + $0xd8] sm:$0xff]
      %v621 = vld [vmem:[%s4 + $0xe0] sm:$0xff]
      %v622 = vld [vmem:[%s4 + $0xe8] sm:$0xff]
      %v623 = vld [vmem:[%s4 + $0xf0] sm:$0xff]
      %v624 = vld [vmem:[%s4 + $0xf8] sm:$0xff]
      %625 = vmatprep.subr.mxu0 %v624
      %626 = vmatpush1.msra.mxu0 %v623
      %627 = vmatprep.subr.mxu0 %v622
      %628 = vmatpush1.msra.mxu0 %v621
      %629 = vmatprep.subr.mxu0 %v620
      %630 = vmatpush1.msra.mxu0 %v619
      %631 = vmatprep.subr.mxu0 %v618
      %632 = vmatpush1.msra.mxu0 %v617
      %633 = vmatprep.subr.mxu0 %v616
      %634 = vmatpush1.msra.mxu0 %v615
      %635 = vmatprep.subr.mxu0 %v614
      %636 = vmatpush1.msra.mxu0 %v613
      %637 = vmatprep.subr.mxu0 %v612
      %638 = vmatpush1.msra.mxu0 %v611
      %639 = vmatprep.subr.mxu0 %v610
      %640 = vmatpush1.msra.mxu0 %v609
      %641 = vmatprep.subr.mxu0 %v608
      %642 = vmatpush1.msra.mxu0 %v607
      %643 = vmatprep.subr.mxu0 %v606
      %644 = vmatpush1.msra.mxu0 %v605
      %645 = vmatprep.subr.mxu0 %v604
      %646 = vmatpush1.msra.mxu0 %v603
      %647 = vmatprep.subr.mxu0 %v602
      %648 = vmatpush1.msra.mxu0 %v601
      %649 = vmatprep.subr.mxu0 %v600
      %650 = vmatpush1.msra.mxu0 %v599
      %651 = vmatprep.subr.mxu0 %v598
      %652 = vmatpush1.msra.mxu0 %v597
      %653 = vmatprep.subr.mxu0 %v596
      %654 = vmatpush1.msra.mxu0 %v595
      %655 = vmatprep.subr.mxu0 %v594
      %656 = vmatpush1.msra.mxu0 %v593
      %657 = vmatprep.subr.mxu0 0.0
      %658 = vmatpush2.msra.mxu0 0.0
      %659 = vmatprep.subr.mxu0 0.0
      %660 = vmatpush2.msra.mxu0 0.0
      %661 = vmatprep.subr.mxu0 0.0
      %662 = vmatpush2.msra.mxu0 0.0
      %663 = vmatprep.subr.mxu0 0.0
      %664 = vmatpush2.msra.mxu0 0.0
      %665 = vmatprep.subr.mxu0 0.0
      %666 = vmatpush2.msra.mxu0 0.0
      %667 = vmatprep.subr.mxu0 0.0
      %668 = vmatpush2.msra.mxu0 0.0
      %669 = vmatprep.subr.mxu0 0.0
      %670 = vmatpush2.msra.mxu0 0.0
      %671 = vmatprep.subr.mxu0 0.0
      %672 = vmatpush2.msra.mxu0 0.0
      %673 = vmatprep.subr.mxu0 0.0
      %674 = vmatpush2.msra.mxu0 0.0
      %675 = vmatprep.subr.mxu0 0.0
      %676 = vmatpush2.msra.mxu0 0.0
      %677 = vmatprep.subr.mxu0 0.0
      %678 = vmatpush2.msra.mxu0 0.0
      %679 = vmatprep.subr.mxu0 0.0
      %680 = vmatpush2.msra.mxu0 0.0
      %681 = vmatprep.subr.mxu0 0.0
      %682 = vmatpush2.msra.mxu0 0.0
      %683 = vmatprep.subr.mxu0 0.0
      %684 = vmatpush2.msra.mxu0 0.0
      %685 = vmatprep.subr.mxu0 0.0
      %686 = vmatpush2.msra.mxu0 0.0
      %687 = vmatprep.subr.mxu0 0.0
      %688 = vmatpush2.msra.mxu0 0.0
      %689 = vmatprep.mubr.f32.mxu0 0.0
      %690 = vmatmul.mubr.f32.gmra.mxu0 %v364
      %v691 = vpop.f32.mrf.mxu0
      %v692 = vadd.f32 0.0, %v691
      %v693 = vpop.f32.mrf.mxu0
      %v694 = vadd.f32 0.0, %v693
      %695 = vmatprep.mubr.f32.mxu0 0.0
      %696 = vmatmul.mubr.f32.gmra.mxu0 %v365
      %v697 = vpop.f32.mrf.mxu0
      %v698 = vadd.f32 0.0, %v697
      %v699 = vpop.f32.mrf.mxu0
      %v700 = vadd.f32 0.0, %v699
      %701 = vdwg.mxu0
      %704 = vrot.lane.b32.xlu0 %v692, 32
      %v705 = vpop.permute.xlu0 %704
      %706 = vrot.lane.b32.xlu0 %v698, 32
      %v707 = vpop.permute.xlu0 %706
      %v711 = vsel %vm469, %v490, 0
      %v714 = vsel %vm469, %v491, 0
      %716 = vmatprep.subr.mxu0 0.0
      %717 = vmatpush1.msra.mxu0 0.0
      %718 = vmatprep.subr.mxu0 0.0
      %719 = vmatpush1.msra.mxu0 0.0
      %720 = vmatprep.subr.mxu0 0.0
      %721 = vmatpush1.msra.mxu0 0.0
      %722 = vmatprep.subr.mxu0 0.0
      %723 = vmatpush1.msra.mxu0 0.0
      %724 = vmatprep.subr.mxu0 0.0
      %725 = vmatpush1.msra.mxu0 0.0
      %726 = vmatprep.subr.mxu0 0.0
      %727 = vmatpush1.msra.mxu0 0.0
      %728 = vmatprep.subr.mxu0 0.0
      %729 = vmatpush1.msra.mxu0 0.0
      %730 = vmatprep.subr.mxu0 0.0
      %731 = vmatpush1.msra.mxu0 0.0
      %732 = vmatprep.subr.mxu0 0.0
      %733 = vmatpush1.msra.mxu0 0.0
      %734 = vmatprep.subr.mxu0 0.0
      %735 = vmatpush1.msra.mxu0 0.0
      %736 = vmatprep.subr.mxu0 0.0
      %737 = vmatpush1.msra.mxu0 0.0
      %738 = vmatprep.subr.mxu0 0.0
      %739 = vmatpush1.msra.mxu0 0.0
      %740 = vmatprep.subr.mxu0 0.0
      %741 = vmatpush1.msra.mxu0 0.0
      %742 = vmatprep.subr.mxu0 0.0
      %743 = vmatpush1.msra.mxu0 0.0
      %744 = vmatprep.subr.mxu0 0.0
      %745 = vmatpush1.msra.mxu0 %v698
      %746 = vmatprep.subr.mxu0 0.0
      %747 = vmatpush1.msra.mxu0 %v692
      %748 = vmatprep.subr.mxu0 0.0
      %749 = vmatpush2.msra.mxu0 0.0
      %750 = vmatprep.subr.mxu0 0.0
      %751 = vmatpush2.msra.mxu0 0.0
      %752 = vmatprep.subr.mxu0 0.0
      %753 = vmatpush2.msra.mxu0 0.0
      %754 = vmatprep.subr.mxu0 0.0
      %755 = vmatpush2.msra.mxu0 0.0
      %756 = vmatprep.subr.mxu0 0.0
      %757 = vmatpush2.msra.mxu0 0.0
      %758 = vmatprep.subr.mxu0 0.0
      %759 = vmatpush2.msra.mxu0 0.0
      %760 = vmatprep.subr.mxu0 0.0
      %761 = vmatpush2.msra.mxu0 0.0
      %762 = vmatprep.subr.mxu0 0.0
      %763 = vmatpush2.msra.mxu0 0.0
      %764 = vmatprep.subr.mxu0 0.0
      %765 = vmatpush2.msra.mxu0 0.0
      %766 = vmatprep.subr.mxu0 0.0
      %767 = vmatpush2.msra.mxu0 0.0
      %768 = vmatprep.subr.mxu0 0.0
      %769 = vmatpush2.msra.mxu0 0.0
      %770 = vmatprep.subr.mxu0 0.0
      %771 = vmatpush2.msra.mxu0 0.0
      %772 = vmatprep.subr.mxu0 0.0
      %773 = vmatpush2.msra.mxu0 0.0
      %774 = vmatprep.subr.mxu0 0.0
      %775 = vmatpush2.msra.mxu0 0.0
      %776 = vmatprep.subr.mxu0 0.0
      %777 = vmatpush2.msra.mxu0 0.0
      %778 = vmatprep.subr.mxu0 0.0
      %779 = vmatpush2.msra.mxu0 0.0
      %780 = vmatprep.mubr.f32.mxu0 0.0
      %781 = vmatmul.mubr.f32.gmra.mxu0 %v711
      %v782 = vpop.f32.mrf.mxu0
      %v783 = vadd.f32 %v705, %v782
      %v784 = vpop.f32.mrf.mxu0
      %785 = vmatprep.mubr.f32.mxu0 0.0
      %786 = vmatmul.mubr.f32.gmra.mxu0 %v714
      %v787 = vpop.f32.mrf.mxu0
      %v788 = vadd.f32 %v707, %v787
      %v789 = vpop.f32.mrf.mxu0
      %790 = vdwg.mxu0
      %v791 = vmax.f32 %v783, 0.0
      %v792 = vmax.f32 %v788, 0.0
      %793 = vrot.lane.b32.xlu0 %v692, 96
      %v794 = vpop.permute.xlu0 %793
      %795 = vrot.lane.b32.xlu0 %v698, 96
      %v796 = vpop.permute.xlu0 %795
      %v800 = vsel %vm469, %v512, 0
      %v803 = vsel %vm469, %v514, 0
      %805 = vmatprep.subr.mxu0 0.0
      %806 = vmatpush1.msra.mxu0 0.0
      %807 = vmatprep.subr.mxu0 0.0
      %808 = vmatpush1.msra.mxu0 0.0
      %809 = vmatprep.subr.mxu0 0.0
      %810 = vmatpush1.msra.mxu0 0.0
      %811 = vmatprep.subr.mxu0 0.0
      %812 = vmatpush1.msra.mxu0 0.0
      %813 = vmatprep.subr.mxu0 0.0
      %814 = vmatpush1.msra.mxu0 0.0
      %815 = vmatprep.subr.mxu0 0.0
      %816 = vmatpush1.msra.mxu0 0.0
      %817 = vmatprep.subr.mxu0 0.0
      %818 = vmatpush1.msra.mxu0 0.0
      %819 = vmatprep.subr.mxu0 0.0
      %820 = vmatpush1.msra.mxu0 0.0
      %821 = vmatprep.subr.mxu0 0.0
      %822 = vmatpush1.msra.mxu0 0.0
      %823 = vmatprep.subr.mxu0 0.0
      %824 = vmatpush1.msra.mxu0 0.0
      %825 = vmatprep.subr.mxu0 0.0
      %826 = vmatpush1.msra.mxu0 0.0
      %827 = vmatprep.subr.mxu0 0.0
      %828 = vmatpush1.msra.mxu0 0.0
      %829 = vmatprep.subr.mxu0 0.0
      %830 = vmatpush1.msra.mxu0 0.0
      %831 = vmatprep.subr.mxu0 0.0
      %832 = vmatpush1.msra.mxu0 0.0
      %833 = vmatprep.subr.mxu0 0.0
      %834 = vmatpush1.msra.mxu0 %v796
      %835 = vmatprep.subr.mxu0 0.0
      %836 = vmatpush1.msra.mxu0 %v794
      %837 = vmatprep.subr.mxu0 0.0
      %838 = vmatpush2.msra.mxu0 0.0
      %839 = vmatprep.subr.mxu0 0.0
      %840 = vmatpush2.msra.mxu0 0.0
      %841 = vmatprep.subr.mxu0 0.0
      %842 = vmatpush2.msra.mxu0 0.0
      %843 = vmatprep.subr.mxu0 0.0
      %844 = vmatpush2.msra.mxu0 0.0
      %845 = vmatprep.subr.mxu0 0.0
      %846 = vmatpush2.msra.mxu0 0.0
      %847 = vmatprep.subr.mxu0 0.0
      %848 = vmatpush2.msra.mxu0 0.0
      %849 = vmatprep.subr.mxu0 0.0
      %850 = vmatpush2.msra.mxu0 0.0
      %851 = vmatprep.subr.mxu0 0.0
      %852 = vmatpush2.msra.mxu0 0.0
      %853 = vmatprep.subr.mxu0 0.0
      %854 = vmatpush2.msra.mxu0 0.0
      %855 = vmatprep.subr.mxu0 0.0
      %856 = vmatpush2.msra.mxu0 0.0
      %857 = vmatprep.subr.mxu0 0.0
      %858 = vmatpush2.msra.mxu0 0.0
      %859 = vmatprep.subr.mxu0 0.0
      %860 = vmatpush2.msra.mxu0 0.0
      %861 = vmatprep.subr.mxu0 0.0
      %862 = vmatpush2.msra.mxu0 0.0
      %863 = vmatprep.subr.mxu0 0.0
      %864 = vmatpush2.msra.mxu0 0.0
      %865 = vmatprep.subr.mxu0 0.0
      %866 = vmatpush2.msra.mxu0 0.0
      %867 = vmatprep.subr.mxu0 0.0
      %868 = vmatpush2.msra.mxu0 0.0
      %869 = vmatprep.mubr.f32.mxu0 0.0
      %870 = vmatmul.mubr.f32.gmra.mxu0 %v800
      %v871 = vpop.f32.mrf.mxu0
      %v872 = vadd.f32 %v694, %v871
      %v873 = vpop.f32.mrf.mxu0
      %874 = vmatprep.mubr.f32.mxu0 0.0
      %875 = vmatmul.mubr.f32.gmra.mxu0 %v803
      %v876 = vpop.f32.mrf.mxu0
      %v877 = vadd.f32 %v700, %v876
      %v878 = vpop.f32.mrf.mxu0
      %879 = vdwg.mxu0
      %v880 = vmax.f32 %v872, 0.0
      %v881 = vmax.f32 %v877, 0.0
      %882 = vrot.lane.b32.xlu0 %v692, 64
      %v883 = vpop.permute.xlu0 %882
      %884 = vrot.lane.b32.xlu0 %v698, 64
      %v885 = vpop.permute.xlu0 %884
      %890 = vrot.lane.b32.xlu0 %v694, 96
      %v891 = vpop.permute.xlu0 %890
      %892 = vrot.lane.b32.xlu0 %v700, 96
      %v893 = vpop.permute.xlu0 %892
      %v897 = vsel %vm469, %v591, 0
      %v900 = vsel %vm469, %v592, 0
      %902 = vmatprep.subr.mxu0 0.0
      %903 = vmatpush1.msra.mxu0 0.0
      %904 = vmatprep.subr.mxu0 0.0
      %905 = vmatpush1.msra.mxu0 0.0
      %906 = vmatprep.subr.mxu0 0.0
      %907 = vmatpush1.msra.mxu0 0.0
      %908 = vmatprep.subr.mxu0 0.0
      %909 = vmatpush1.msra.mxu0 0.0
      %910 = vmatprep.subr.mxu0 0.0
      %911 = vmatpush1.msra.mxu0 0.0
      %912 = vmatprep.subr.mxu0 0.0
      %913 = vmatpush1.msra.mxu0 0.0
      %914 = vmatprep.subr.mxu0 0.0
      %915 = vmatpush1.msra.mxu0 0.0
      %916 = vmatprep.subr.mxu0 0.0
      %917 = vmatpush1.msra.mxu0 0.0
      %918 = vmatprep.subr.mxu0 0.0
      %919 = vmatpush1.msra.mxu0 0.0
      %920 = vmatprep.subr.mxu0 0.0
      %921 = vmatpush1.msra.mxu0 0.0
      %922 = vmatprep.subr.mxu0 0.0
      %923 = vmatpush1.msra.mxu0 0.0
      %924 = vmatprep.subr.mxu0 0.0
      %925 = vmatpush1.msra.mxu0 0.0
      %926 = vmatprep.subr.mxu0 0.0
      %927 = vmatpush1.msra.mxu0 0.0
      %928 = vmatprep.subr.mxu0 0.0
      %929 = vmatpush1.msra.mxu0 0.0
      %930 = vmatprep.subr.mxu0 0.0
      %931 = vmatpush1.msra.mxu0 %v885
      %932 = vmatprep.subr.mxu0 0.0
      %933 = vmatpush1.msra.mxu0 %v883
      %934 = vmatprep.subr.mxu0 0.0
      %935 = vmatpush2.msra.mxu0 0.0
      %936 = vmatprep.subr.mxu0 0.0
      %937 = vmatpush2.msra.mxu0 0.0
      %938 = vmatprep.subr.mxu0 0.0
      %939 = vmatpush2.msra.mxu0 0.0
      %940 = vmatprep.subr.mxu0 0.0
      %941 = vmatpush2.msra.mxu0 0.0
      %942 = vmatprep.subr.mxu0 0.0
      %943 = vmatpush2.msra.mxu0 0.0
      %944 = vmatprep.subr.mxu0 0.0
      %945 = vmatpush2.msra.mxu0 0.0
      %946 = vmatprep.subr.mxu0 0.0
      %947 = vmatpush2.msra.mxu0 0.0
      %948 = vmatprep.subr.mxu0 0.0
      %949 = vmatpush2.msra.mxu0 0.0
      %950 = vmatprep.subr.mxu0 0.0
      %951 = vmatpush2.msra.mxu0 0.0
      %952 = vmatprep.subr.mxu0 0.0
      %953 = vmatpush2.msra.mxu0 0.0
      %954 = vmatprep.subr.mxu0 0.0
      %955 = vmatpush2.msra.mxu0 0.0
      %956 = vmatprep.subr.mxu0 0.0
      %957 = vmatpush2.msra.mxu0 0.0
      %958 = vmatprep.subr.mxu0 0.0
      %959 = vmatpush2.msra.mxu0 0.0
      %960 = vmatprep.subr.mxu0 0.0
      %961 = vmatpush2.msra.mxu0 0.0
      %962 = vmatprep.subr.mxu0 0.0
      %963 = vmatpush2.msra.mxu0 0.0
      %964 = vmatprep.subr.mxu0 0.0
      %965 = vmatpush2.msra.mxu0 0.0
      %966 = vmatprep.mubr.f32.mxu0 0.0
      %967 = vmatmul.mubr.f32.gmra.mxu0 %v897
      %v968 = vpop.f32.mrf.mxu0
      %v969 = vadd.f32 %v891, %v968
      %v970 = vpop.f32.mrf.mxu0
      %971 = vmatprep.mubr.f32.mxu0 0.0
      %972 = vmatmul.mubr.f32.gmra.mxu0 %v900
      %v973 = vpop.f32.mrf.mxu0
      %v974 = vadd.f32 %v893, %v973
      %v975 = vpop.f32.mrf.mxu0
      %976 = vdwg.mxu0
      %v977 = vmax.f32 %v969, 0.0
      %v978 = vmax.f32 %v974, 0.0
      %981 = vrot.lane.b32.xlu0 %v880, 32
      %v982 = vpop.permute.xlu0 %981
      %983 = vrot.lane.b32.xlu0 %v881, 32
      %v984 = vpop.permute.xlu0 %983
      %989 = vrot.lane.b32.xlu0 %v977, 64
      %v990 = vpop.permute.xlu0 %989
      %991 = vrot.lane.b32.xlu0 %v978, 64
      %v992 = vpop.permute.xlu0 %991
      %vm995 = vcmask 261120
      %v996 = vsel %vm995, %v791, %v982
      %v997 = vsel %vm995, %v792, %v984
      %v998 = vsel %vm371, %v996, %v990
      %v999 = vsel %vm371, %v997, %v992
      %v1000 = vld [vmem:[%s5] sm:$0xff]
      %v1001 = vld [vmem:[%s5 + $0x8] sm:$0xff]
      %v1002 = vld [vmem:[%s5 + $0x10] sm:$0xff]
      %v1003 = vld [vmem:[%s5 + $0x18] sm:$0xff]
      %v1004 = vld [vmem:[%s5 + $0x20] sm:$0xff]
      %v1005 = vld [vmem:[%s5 + $0x28] sm:$0xff]
      %v1006 = vld [vmem:[%s5 + $0x30] sm:$0xff]
      %v1007 = vld [vmem:[%s5 + $0x38] sm:$0xff]
      %v1008 = vld [vmem:[%s5 + $0x40] sm:$0xff]
      %v1009 = vld [vmem:[%s5 + $0x48] sm:$0xff]
      %v1010 = vld [vmem:[%s5 + $0x50] sm:$0xff]
      %v1011 = vld [vmem:[%s5 + $0x58] sm:$0xff]
      %vm1012 = vcmask 785408
      %v1014 = vsel %vm1012, %v998, 0
      %v1017 = vsel %vm1012, %v999, 0
      %1019 = vmatprep.subr.mxu0 0.0
      %1020 = vmatpush1.msra.mxu0 0.0
      %1021 = vmatprep.subr.mxu0 0.0
      %1022 = vmatpush1.msra.mxu0 0.0
      %1023 = vmatprep.subr.mxu0 0.0
      %1024 = vmatpush1.msra.mxu0 0.0
      %1025 = vmatprep.subr.mxu0 0.0
      %1026 = vmatpush1.msra.mxu0 0.0
      %1027 = vmatprep.subr.mxu0 0.0
      %1028 = vmatpush1.msra.mxu0 %v1011
      %1029 = vmatprep.subr.mxu0 0.0
      %1030 = vmatpush1.msra.mxu0 %v1010
      %1031 = vmatprep.subr.mxu0 0.0
      %1032 = vmatpush1.msra.mxu0 %v1009
      %1033 = vmatprep.subr.mxu0 0.0
      %1034 = vmatpush1.msra.mxu0 %v1008
      %1035 = vmatprep.subr.mxu0 0.0
      %1036 = vmatpush1.msra.mxu0 %v1007
      %1037 = vmatprep.subr.mxu0 0.0
      %1038 = vmatpush1.msra.mxu0 %v1006
      %1039 = vmatprep.subr.mxu0 0.0
      %1040 = vmatpush1.msra.mxu0 %v1005
      %1041 = vmatprep.subr.mxu0 0.0
      %1042 = vmatpush1.msra.mxu0 %v1004
      %1043 = vmatprep.subr.mxu0 0.0
      %1044 = vmatpush1.msra.mxu0 %v1003
      %1045 = vmatprep.subr.mxu0 0.0
      %1046 = vmatpush1.msra.mxu0 %v1002
      %1047 = vmatprep.subr.mxu0 0.0
      %1048 = vmatpush1.msra.mxu0 %v1001
      %1049 = vmatprep.subr.mxu0 0.0
      %1050 = vmatpush1.msra.mxu0 %v1000
      %1051 = vmatprep.subr.mxu0 0.0
      %1052 = vmatpush2.msra.mxu0 0.0
      %1053 = vmatprep.subr.mxu0 0.0
      %1054 = vmatpush2.msra.mxu0 0.0
      %1055 = vmatprep.subr.mxu0 0.0
      %1056 = vmatpush2.msra.mxu0 0.0
      %1057 = vmatprep.subr.mxu0 0.0
      %1058 = vmatpush2.msra.mxu0 0.0
      %1059 = vmatprep.subr.mxu0 0.0
      %1060 = vmatpush2.msra.mxu0 0.0
      %1061 = vmatprep.subr.mxu0 0.0
      %1062 = vmatpush2.msra.mxu0 0.0
      %1063 = vmatprep.subr.mxu0 0.0
      %1064 = vmatpush2.msra.mxu0 0.0
      %1065 = vmatprep.subr.mxu0 0.0
      %1066 = vmatpush2.msra.mxu0 0.0
      %1067 = vmatprep.subr.mxu0 0.0
      %1068 = vmatpush2.msra.mxu0 0.0
      %1069 = vmatprep.subr.mxu0 0.0
      %1070 = vmatpush2.msra.mxu0 0.0
      %1071 = vmatprep.subr.mxu0 0.0
      %1072 = vmatpush2.msra.mxu0 0.0
      %1073 = vmatprep.subr.mxu0 0.0
      %1074 = vmatpush2.msra.mxu0 0.0
      %1075 = vmatprep.subr.mxu0 0.0
      %1076 = vmatpush2.msra.mxu0 0.0
      %1077 = vmatprep.subr.mxu0 0.0
      %1078 = vmatpush2.msra.mxu0 0.0
      %1079 = vmatprep.subr.mxu0 0.0
      %1080 = vmatpush2.msra.mxu0 0.0
      %1081 = vmatprep.subr.mxu0 0.0
      %1082 = vmatpush2.msra.mxu0 0.0
      %1083 = vmatprep.mubr.f32.mxu0 0.0
      %1084 = vmatmul.mubr.f32.gmra.mxu0 %v1014
      %v1085 = vpop.f32.mrf.mxu0
      %v1086 = vadd.f32 0.0, %v1085
      %v1087 = vpop.f32.mrf.mxu0
      %1088 = vmatprep.mubr.f32.mxu0 0.0
      %1089 = vmatmul.mubr.f32.gmra.mxu0 %v1017
      %v1090 = vpop.f32.mrf.mxu0
      %v1091 = vadd.f32 0.0, %v1090
      %v1092 = vpop.f32.mrf.mxu0
      %1093 = vdwg.mxu0
      %1094 = vmatprep.subr.mxu0 0.0
      %1095 = vmatpush1.msra.mxu0 0.0
      %1096 = vmatprep.subr.mxu0 0.0
      %1097 = vmatpush1.msra.mxu0 0.0
      %1098 = vmatprep.subr.mxu0 0.0
      %1099 = vmatpush1.msra.mxu0 0.0
      %1100 = vmatprep.subr.mxu0 0.0
      %1101 = vmatpush1.msra.mxu0 0.0
      %1102 = vmatprep.subr.mxu0 0.0
      %1103 = vmatpush1.msra.mxu0 0.0
      %1104 = vmatprep.subr.mxu0 0.0
      %1105 = vmatpush1.msra.mxu0 0.0
      %1106 = vmatprep.subr.mxu0 0.0
      %1107 = vmatpush1.msra.mxu0 0.0
      %1108 = vmatprep.subr.mxu0 0.0
      %1109 = vmatpush1.msra.mxu0 0.0
      %1110 = vmatprep.subr.mxu0 0.0
      %1111 = vmatpush1.msra.mxu0 0.0
      %1112 = vmatprep.subr.mxu0 0.0
      %1113 = vmatpush1.msra.mxu0 0.0
      %1114 = vmatprep.subr.mxu0 0.0
      %1115 = vmatpush1.msra.mxu0 0.0
      %1116 = vmatprep.subr.mxu0 0.0
      %1117 = vmatpush1.msra.mxu0 0.0
      %1118 = vmatprep.subr.mxu0 0.0
      %1119 = vmatpush1.msra.mxu0 0.0
      %1120 = vmatprep.subr.mxu0 0.0
      %1121 = vmatpush1.msra.mxu0 0.0
      %1122 = vmatprep.subr.mxu0 0.0
      %1123 = vmatpush1.msra.mxu0 %v1091
      %1124 = vmatprep.subr.mxu0 0.0
      %1125 = vmatpush1.msra.mxu0 %v1086
      %1126 = vmatprep.subr.mxu0 0.0
      %1127 = vmatpush2.msra.mxu0 0.0
      %1128 = vmatprep.subr.mxu0 0.0
      %1129 = vmatpush2.msra.mxu0 0.0
      %1130 = vmatprep.subr.mxu0 0.0
      %1131 = vmatpush2.msra.mxu0 0.0
      %1132 = vmatprep.subr.mxu0 0.0
      %1133 = vmatpush2.msra.mxu0 0.0
      %1134 = vmatprep.subr.mxu0 0.0
      %1135 = vmatpush2.msra.mxu0 0.0
      %1136 = vmatprep.subr.mxu0 0.0
      %1137 = vmatpush2.msra.mxu0 0.0
      %1138 = vmatprep.subr.mxu0 0.0
      %1139 = vmatpush2.msra.mxu0 0.0
      %1140 = vmatprep.subr.mxu0 0.0
      %1141 = vmatpush2.msra.mxu0 0.0
      %1142 = vmatprep.subr.mxu0 0.0
      %1143 = vmatpush2.msra.mxu0 0.0
      %1144 = vmatprep.subr.mxu0 0.0
      %1145 = vmatpush2.msra.mxu0 0.0
      %1146 = vmatprep.subr.mxu0 0.0
      %1147 = vmatpush2.msra.mxu0 0.0
      %1148 = vmatprep.subr.mxu0 0.0
      %1149 = vmatpush2.msra.mxu0 0.0
      %1150 = vmatprep.subr.mxu0 0.0
      %1151 = vmatpush2.msra.mxu0 0.0
      %1152 = vmatprep.subr.mxu0 0.0
      %1153 = vmatpush2.msra.mxu0 0.0
      %1154 = vmatprep.subr.mxu0 0.0
      %1155 = vmatpush2.msra.mxu0 0.0
      %1156 = vmatprep.subr.mxu0 0.0
      %1157 = vmatpush2.msra.mxu0 0.0
      %1158 = vmatprep.mubr.f32.mxu0 0.0
      %1159 = vmatmul.mubr.f32.gmra.mxu0 %v711
      %v1160 = vpop.f32.mrf.mxu0
      %v1161 = vadd.f32 %v791, %v1160
      %v1162 = vpop.f32.mrf.mxu0
      %1163 = vmatprep.mubr.f32.mxu0 0.0
      %1164 = vmatmul.mubr.f32.gmra.mxu0 %v714
      %v1165 = vpop.f32.mrf.mxu0
      %v1166 = vadd.f32 %v792, %v1165
      %v1167 = vpop.f32.mrf.mxu0
      %1168 = vdwg.mxu0
      %v1169 = vmax.f32 %v1161, 0.0
      %v1170 = vmax.f32 %v1166, 0.0
      %1173 = vrot.lane.b32.xlu0 %v1086, 96
      %v1174 = vpop.permute.xlu0 %1173
      %1175 = vrot.lane.b32.xlu0 %v1091, 96
      %v1176 = vpop.permute.xlu0 %1175
      %1179 = vmatprep.subr.mxu0 0.0
      %1180 = vmatpush1.msra.mxu0 0.0
      %1181 = vmatprep.subr.mxu0 0.0
      %1182 = vmatpush1.msra.mxu0 0.0
      %1183 = vmatprep.subr.mxu0 0.0
      %1184 = vmatpush1.msra.mxu0 0.0
      %1185 = vmatprep.subr.mxu0 0.0
      %1186 = vmatpush1.msra.mxu0 0.0
      %1187 = vmatprep.subr.mxu0 0.0
      %1188 = vmatpush1.msra.mxu0 0.0
      %1189 = vmatprep.subr.mxu0 0.0
      %1190 = vmatpush1.msra.mxu0 0.0
      %1191 = vmatprep.subr.mxu0 0.0
      %1192 = vmatpush1.msra.mxu0 0.0
      %1193 = vmatprep.subr.mxu0 0.0
      %1194 = vmatpush1.msra.mxu0 0.0
      %1195 = vmatprep.subr.mxu0 0.0
      %1196 = vmatpush1.msra.mxu0 0.0
      %1197 = vmatprep.subr.mxu0 0.0
      %1198 = vmatpush1.msra.mxu0 0.0
      %1199 = vmatprep.subr.mxu0 0.0
      %1200 = vmatpush1.msra.mxu0 0.0
      %1201 = vmatprep.subr.mxu0 0.0
      %1202 = vmatpush1.msra.mxu0 0.0
      %1203 = vmatprep.subr.mxu0 0.0
      %1204 = vmatpush1.msra.mxu0 0.0
      %1205 = vmatprep.subr.mxu0 0.0
      %1206 = vmatpush1.msra.mxu0 0.0
      %1207 = vmatprep.subr.mxu0 0.0
      %1208 = vmatpush1.msra.mxu0 %v1176
      %1209 = vmatprep.subr.mxu0 0.0
      %1210 = vmatpush1.msra.mxu0 %v1174
      %1211 = vmatprep.subr.mxu0 0.0
      %1212 = vmatpush2.msra.mxu0 0.0
      %1213 = vmatprep.subr.mxu0 0.0
      %1214 = vmatpush2.msra.mxu0 0.0
      %1215 = vmatprep.subr.mxu0 0.0
      %1216 = vmatpush2.msra.mxu0 0.0
      %1217 = vmatprep.subr.mxu0 0.0
      %1218 = vmatpush2.msra.mxu0 0.0
      %1219 = vmatprep.subr.mxu0 0.0
      %1220 = vmatpush2.msra.mxu0 0.0
      %1221 = vmatprep.subr.mxu0 0.0
      %1222 = vmatpush2.msra.mxu0 0.0
      %1223 = vmatprep.subr.mxu0 0.0
      %1224 = vmatpush2.msra.mxu0 0.0
      %1225 = vmatprep.subr.mxu0 0.0
      %1226 = vmatpush2.msra.mxu0 0.0
      %1227 = vmatprep.subr.mxu0 0.0
      %1228 = vmatpush2.msra.mxu0 0.0
      %1229 = vmatprep.subr.mxu0 0.0
      %1230 = vmatpush2.msra.mxu0 0.0
      %1231 = vmatprep.subr.mxu0 0.0
      %1232 = vmatpush2.msra.mxu0 0.0
      %1233 = vmatprep.subr.mxu0 0.0
      %1234 = vmatpush2.msra.mxu0 0.0
      %1235 = vmatprep.subr.mxu0 0.0
      %1236 = vmatpush2.msra.mxu0 0.0
      %1237 = vmatprep.subr.mxu0 0.0
      %1238 = vmatpush2.msra.mxu0 0.0
      %1239 = vmatprep.subr.mxu0 0.0
      %1240 = vmatpush2.msra.mxu0 0.0
      %1241 = vmatprep.subr.mxu0 0.0
      %1242 = vmatpush2.msra.mxu0 0.0
      %1243 = vmatprep.mubr.f32.mxu0 0.0
      %1244 = vmatmul.mubr.f32.gmra.mxu0 %v800
      %v1245 = vpop.f32.mrf.mxu0
      %v1246 = vadd.f32 %v880, %v1245
      %v1247 = vpop.f32.mrf.mxu0
      %1248 = vmatprep.mubr.f32.mxu0 0.0
      %1249 = vmatmul.mubr.f32.gmra.mxu0 %v803
      %v1250 = vpop.f32.mrf.mxu0
      %v1251 = vadd.f32 %v881, %v1250
      %v1252 = vpop.f32.mrf.mxu0
      %1253 = vdwg.mxu0
      %v1254 = vmax.f32 %v1246, 0.0
      %v1255 = vmax.f32 %v1251, 0.0
      %1256 = vrot.lane.b32.xlu0 %v1086, 64
      %v1257 = vpop.permute.xlu0 %1256
      %1258 = vrot.lane.b32.xlu0 %v1091, 64
      %v1259 = vpop.permute.xlu0 %1258
      %1262 = vmatprep.subr.mxu0 0.0
      %1263 = vmatpush1.msra.mxu0 0.0
      %1264 = vmatprep.subr.mxu0 0.0
      %1265 = vmatpush1.msra.mxu0 0.0
      %1266 = vmatprep.subr.mxu0 0.0
      %1267 = vmatpush1.msra.mxu0 0.0
      %1268 = vmatprep.subr.mxu0 0.0
      %1269 = vmatpush1.msra.mxu0 0.0
      %1270 = vmatprep.subr.mxu0 0.0
      %1271 = vmatpush1.msra.mxu0 0.0
      %1272 = vmatprep.subr.mxu0 0.0
      %1273 = vmatpush1.msra.mxu0 0.0
      %1274 = vmatprep.subr.mxu0 0.0
      %1275 = vmatpush1.msra.mxu0 0.0
      %1276 = vmatprep.subr.mxu0 0.0
      %1277 = vmatpush1.msra.mxu0 0.0
      %1278 = vmatprep.subr.mxu0 0.0
      %1279 = vmatpush1.msra.mxu0 0.0
      %1280 = vmatprep.subr.mxu0 0.0
      %1281 = vmatpush1.msra.mxu0 0.0
      %1282 = vmatprep.subr.mxu0 0.0
      %1283 = vmatpush1.msra.mxu0 0.0
      %1284 = vmatprep.subr.mxu0 0.0
      %1285 = vmatpush1.msra.mxu0 0.0
      %1286 = vmatprep.subr.mxu0 0.0
      %1287 = vmatpush1.msra.mxu0 0.0
      %1288 = vmatprep.subr.mxu0 0.0
      %1289 = vmatpush1.msra.mxu0 0.0
      %1290 = vmatprep.subr.mxu0 0.0
      %1291 = vmatpush1.msra.mxu0 %v1259
      %1292 = vmatprep.subr.mxu0 0.0
      %1293 = vmatpush1.msra.mxu0 %v1257
      %1294 = vmatprep.subr.mxu0 0.0
      %1295 = vmatpush2.msra.mxu0 0.0
      %1296 = vmatprep.subr.mxu0 0.0
      %1297 = vmatpush2.msra.mxu0 0.0
      %1298 = vmatprep.subr.mxu0 0.0
      %1299 = vmatpush2.msra.mxu0 0.0
      %1300 = vmatprep.subr.mxu0 0.0
      %1301 = vmatpush2.msra.mxu0 0.0
      %1302 = vmatprep.subr.mxu0 0.0
      %1303 = vmatpush2.msra.mxu0 0.0
      %1304 = vmatprep.subr.mxu0 0.0
      %1305 = vmatpush2.msra.mxu0 0.0
      %1306 = vmatprep.subr.mxu0 0.0
      %1307 = vmatpush2.msra.mxu0 0.0
      %1308 = vmatprep.subr.mxu0 0.0
      %1309 = vmatpush2.msra.mxu0 0.0
      %1310 = vmatprep.subr.mxu0 0.0
      %1311 = vmatpush2.msra.mxu0 0.0
      %1312 = vmatprep.subr.mxu0 0.0
      %1313 = vmatpush2.msra.mxu0 0.0
      %1314 = vmatprep.subr.mxu0 0.0
      %1315 = vmatpush2.msra.mxu0 0.0
      %1316 = vmatprep.subr.mxu0 0.0
      %1317 = vmatpush2.msra.mxu0 0.0
      %1318 = vmatprep.subr.mxu0 0.0
      %1319 = vmatpush2.msra.mxu0 0.0
      %1320 = vmatprep.subr.mxu0 0.0
      %1321 = vmatpush2.msra.mxu0 0.0
      %1322 = vmatprep.subr.mxu0 0.0
      %1323 = vmatpush2.msra.mxu0 0.0
      %1324 = vmatprep.subr.mxu0 0.0
      %1325 = vmatpush2.msra.mxu0 0.0
      %1326 = vmatprep.mubr.f32.mxu0 0.0
      %1327 = vmatmul.mubr.f32.gmra.mxu0 %v897
      %v1328 = vpop.f32.mrf.mxu0
      %v1329 = vadd.f32 %v977, %v1328
      %v1330 = vpop.f32.mrf.mxu0
      %1331 = vmatprep.mubr.f32.mxu0 0.0
      %1332 = vmatmul.mubr.f32.gmra.mxu0 %v900
      %v1333 = vpop.f32.mrf.mxu0
      %v1334 = vadd.f32 %v978, %v1333
      %v1335 = vpop.f32.mrf.mxu0
      %1336 = vdwg.mxu0
      %v1337 = vmax.f32 %v1329, 0.0
      %v1338 = vmax.f32 %v1334, 0.0
      %1341 = vrot.lane.b32.xlu0 %v1254, 32
      %v1342 = vpop.permute.xlu0 %1341
      %1343 = vrot.lane.b32.xlu0 %v1255, 32
      %v1344 = vpop.permute.xlu0 %1343
      %1349 = vrot.lane.b32.xlu0 %v1337, 64
      %v1350 = vpop.permute.xlu0 %1349
      %1351 = vrot.lane.b32.xlu0 %v1338, 64
      %v1352 = vpop.permute.xlu0 %1351
      %v1355 = vsel %vm995, %v1169, %v1342
      %v1356 = vsel %vm995, %v1170, %v1344
      %v1357 = vsel %vm371, %v1355, %v1350
      %v1358 = vsel %vm371, %v1356, %v1352
      %v1359 = vld [vmem:[%s6] sm:$0xff]
      %v1360 = vld [vmem:[%s6 + $0x8] sm:$0xff]
      %v1361 = vld [vmem:[%s6 + $0x10] sm:$0xff]
      %v1362 = vld [vmem:[%s6 + $0x18] sm:$0xff]
      %v1363 = vld [vmem:[%s6 + $0x20] sm:$0xff]
      %v1364 = vld [vmem:[%s6 + $0x28] sm:$0xff]
      %v1365 = vld [vmem:[%s6 + $0x30] sm:$0xff]
      %v1366 = vld [vmem:[%s6 + $0x38] sm:$0xff]
      %v1367 = vld [vmem:[%s6 + $0x40] sm:$0xff]
      %v1368 = vld [vmem:[%s6 + $0x48] sm:$0xff]
      %v1369 = vld [vmem:[%s6 + $0x50] sm:$0xff]
      %v1370 = vld [vmem:[%s6 + $0x58] sm:$0xff]
      %v1371 = vld [vmem:[#allocation2] sm:$0x1]
      %v1373 = vlaneseq
      %v1374 = vshrl.u32 %v1373, 7
      %v1375 = vsub.s32 0, %v1374
      %v1376 = vrot.slane %v1371, %v1375
      %v1379 = vsel %vm1012, %v1357, 0
      %v1382 = vsel %vm1012, %v1358, 0
      %1384 = vmatprep.subr.mxu0 0.0
      %1385 = vmatpush1.msra.mxu0 0.0
      %1386 = vmatprep.subr.mxu0 0.0
      %1387 = vmatpush1.msra.mxu0 0.0
      %1388 = vmatprep.subr.mxu0 0.0
      %1389 = vmatpush1.msra.mxu0 0.0
      %1390 = vmatprep.subr.mxu0 0.0
      %1391 = vmatpush1.msra.mxu0 0.0
      %1392 = vmatprep.subr.mxu0 0.0
      %1393 = vmatpush1.msra.mxu0 %v1370
      %1394 = vmatprep.subr.mxu0 0.0
      %1395 = vmatpush1.msra.mxu0 %v1369
      %1396 = vmatprep.subr.mxu0 0.0
      %1397 = vmatpush1.msra.mxu0 %v1368
      %1398 = vmatprep.subr.mxu0 0.0
      %1399 = vmatpush1.msra.mxu0 %v1367
      %1400 = vmatprep.subr.mxu0 0.0
      %1401 = vmatpush1.msra.mxu0 %v1366
      %1402 = vmatprep.subr.mxu0 0.0
      %1403 = vmatpush1.msra.mxu0 %v1365
      %1404 = vmatprep.subr.mxu0 0.0
      %1405 = vmatpush1.msra.mxu0 %v1364
      %1406 = vmatprep.subr.mxu0 0.0
      %1407 = vmatpush1.msra.mxu0 %v1363
      %1408 = vmatprep.subr.mxu0 0.0
      %1409 = vmatpush1.msra.mxu0 %v1362
      %1410 = vmatprep.subr.mxu0 0.0
      %1411 = vmatpush1.msra.mxu0 %v1361
      %1412 = vmatprep.subr.mxu0 0.0
      %1413 = vmatpush1.msra.mxu0 %v1360
      %1414 = vmatprep.subr.mxu0 0.0
      %1415 = vmatpush1.msra.mxu0 %v1359
      %1416 = vmatprep.subr.mxu0 0.0
      %1417 = vmatpush2.msra.mxu0 0.0
      %1418 = vmatprep.subr.mxu0 0.0
      %1419 = vmatpush2.msra.mxu0 0.0
      %1420 = vmatprep.subr.mxu0 0.0
      %1421 = vmatpush2.msra.mxu0 0.0
      %1422 = vmatprep.subr.mxu0 0.0
      %1423 = vmatpush2.msra.mxu0 0.0
      %1424 = vmatprep.subr.mxu0 0.0
      %1425 = vmatpush2.msra.mxu0 0.0
      %1426 = vmatprep.subr.mxu0 0.0
      %1427 = vmatpush2.msra.mxu0 0.0
      %1428 = vmatprep.subr.mxu0 0.0
      %1429 = vmatpush2.msra.mxu0 0.0
      %1430 = vmatprep.subr.mxu0 0.0
      %1431 = vmatpush2.msra.mxu0 0.0
      %1432 = vmatprep.subr.mxu0 0.0
      %1433 = vmatpush2.msra.mxu0 0.0
      %1434 = vmatprep.subr.mxu0 0.0
      %1435 = vmatpush2.msra.mxu0 0.0
      %1436 = vmatprep.subr.mxu0 0.0
      %1437 = vmatpush2.msra.mxu0 0.0
      %1438 = vmatprep.subr.mxu0 0.0
      %1439 = vmatpush2.msra.mxu0 0.0
      %1440 = vmatprep.subr.mxu0 0.0
      %1441 = vmatpush2.msra.mxu0 0.0
      %1442 = vmatprep.subr.mxu0 0.0
      %1443 = vmatpush2.msra.mxu0 0.0
      %1444 = vmatprep.subr.mxu0 0.0
      %1445 = vmatpush2.msra.mxu0 0.0
      %1446 = vmatprep.subr.mxu0 0.0
      %1447 = vmatpush2.msra.mxu0 0.0
      %1448 = vmatprep.mubr.f32.mxu0 0.0
      %1449 = vmatmul.mubr.f32.gmra.mxu0 %v1379
      %v1450 = vpop.f32.mrf.mxu0
      %v1451 = vadd.f32 %v1376, %v1450
      %v1452 = vpop.f32.mrf.mxu0
      %1453 = vmatprep.mubr.f32.mxu0 0.0
      %1454 = vmatmul.mubr.f32.gmra.mxu0 %v1382
      %v1455 = vpop.f32.mrf.mxu0
      %v1456 = vadd.f32 %v1376, %v1455
      %v1457 = vpop.f32.mrf.mxu0
      %1458 = vdwg.mxu0
      %vm1459 = vcmask 7168
      %1460 = vst.msk [vmem:[%s361] sm:$0xff] %vm1459, %v1451
      %1461 = vst.msk [vmem:[%s361 + $0x8] sm:$0xff] %vm1459, %v1456
      %p1462 = scmp.lt.s32.totalorder %s21, 1
      %s1463 = scalar_select %p1462, %s21, 1
      %s1464 = smul.addr %s1463, 2
      %s1465 = smul.addr %s1464, 8
      %s1466 = scalar_lea.vmem %s8, %s1465
      // Predicated region
      $region53: #{model_forward.5} parent=51 // pred_check
        %p1467 = pneg %p227
      $region54: #{model_forward.5} parent=51 // pred_check_branch
        %1469 = sbr.rel (%p1467) target = $region56
      $region55: #{model_forward.5} parent=51 // pred_region
        _
      $region56: #{model_forward.5} parent=51 // pred_fallthru
        _
    $region52: #{model_forward.5} parent=5 // pred_fallthru
      _
    %p1470 = scmp.le.s32.totalorder 2, %s16
    // Predicated region
    $region57: #{model_forward.5} parent=5 // pred_check
      %p1471 = pneg %p1470
    $region58: #{model_forward.5} parent=5 // pred_check_branch
      %1473 = sbr.rel (%p1471) target = $region60
    $region59: #{model_forward.5} parent=5 // pred_region
      %s1474 = ssub.s32 %s16, 2
      // Predicated region
      $region61: #{model_forward.5} parent=59 // pred_check
        %p1475 = pneg %p233
      $region62: #{model_forward.5} parent=59 // pred_check_branch
        %1477 = sbr.rel (%p1475) target = $region64
      $region63: #{model_forward.5} parent=59 // pred_region
        %p1478 = scmp.lt.s32.totalorder %s22, 1
        %s1479 = scalar_select %p1478, %s22, 1
        %s1480 = smul.addr %s1479, 2
        %s1481 = smul.addr %s1480, 8
        %s1482 = scalar_lea.vmem %s8, %s1481
      $region64: #{model_forward.5} parent=59 // pred_fallthru
        _
    $region60: #{model_forward.5} parent=5 // pred_fallthru
      _
  $region6: #{model_forward.5} parent=0 // loop_footer
    %s20 = sadd.s32 1, %s16
  $region7: #{model_forward.5} parent=0 // loop_footer_branch
    %15 = sbr.rel target = $region3
  $region8: #{model_forward.5} parent=0 // loop_exit
    _

</llo_original>
